<compile_context>
chip_gen: v7x
topology: tpu7x:2x2x1
jax: 0.10.0
libtpu: 0.0.40
codegen_flags: <defaults>
</compile_context>

<pallas_src>
import functools
import math

import jax
import jax.numpy as jnp
from jax.experimental import pallas as pl
from jax.experimental.pallas import tpu as pltpu


# ----------------------------- helpers (traced inline, f32) -----------------------------

def _layernorm(x, g, b, eps):
    mean = jnp.mean(x, axis=-1, keepdims=True)
    c = x - mean
    var = jnp.mean(c * c, axis=-1, keepdims=True)
    return c * jax.lax.rsqrt(var + eps) * g + b


def _gelu(x):
    # BERT "gelu" (erf-based, exact)
    return 0.5 * x * (1.0 + jax.lax.erf(x * (2.0 ** -0.5)))


# ----------------------------- fused forward kernel (single step) -----------------------------

def _fused_forward_kernel(
    vid_ref,      # [B*L, D_img]
    car_ref,      # [B, S, C]      (already permuted to match pred layout)
    head_w_ref,   # [D_img + H, H] rows 0:D_img = img_w, rows D_img:D_img+H = dec_w (cols >= C zero)
    head_b_ref,   # [2, H]         row 0 = img_b, row 1 (lanes 0:C) = dec_b
    w1_ref,       # [NL, H, 3H + H + I]   lanes: [wqkv | wo | wi]  (Q part pre-scaled by 1/sqrt(Dh))
    w2_ref,       # [NL, I, H]            wo2
    vec_ref,      # [NL, 8, 3H]   rows: bqkv, bo, bi, bo2, ln1_g, ln1_b, ln2_g, ln2_b
    pred_ref,     # [B, S, C]
    loss_ref,     # [1, 1]
    *, B, L, S, C, D_img, H, NH, I, NL, eps):
    Dh = H // NH

    # img_embedding (+ img_dropout: identity in eval) on all B*L rows at once
    x = vid_ref[...]                                   # [B*L, D_img]
    img_w = head_w_ref[0:D_img, :]                     # [D_img, H]
    img_b = head_b_ref[0:1, :]                         # [1, H]
    h = jnp.dot(x, img_w, preferred_element_type=jnp.float32) + img_b   # [B*L, H]

    # BertEncoder. extended_attention_mask == 0 everywhere (all-ones mask) -> omitted.
    for li in range(NL):
        w1 = w1_ref[li]                                # [H, 3H + H + I]
        wqkv = w1[:, 0:3 * H]                          # [H, 3H]   (Q cols pre-scaled)
        wo   = w1[:, 3 * H:4 * H]                      # [H, H]
        wi   = w1[:, 4 * H:4 * H + I]                  # [H, I]
        wo2  = w2_ref[li]                              # [I, H]

        vecs = vec_ref[li]                             # [8, 3H]
        bqkv = vecs[0:1, :]                            # [1, 3H]
        bo   = vecs[1:2, 0:H]
        bi   = vecs[2:3, 0:I]
        bo2  = vecs[3:4, 0:H]
        ln1g = vecs[4:5, 0:H]
        ln1b = vecs[5:6, 0:H]
        ln2g = vecs[6:7, 0:H]
        ln2b = vecs[7:8, 0:H]

        # Fused QKV projection on all B*L rows: [B*L, 3H]
        qkv = jnp.dot(h, wqkv, preferred_element_type=jnp.float32) + bqkv

        # Attention is block-diagonal over the batch: unroll B(=2) and heads(=4).
        ctx_batches = []
        for b in range(B):
            qkv_b = qkv[b * L:(b + 1) * L, :]          # [L, 3H]
            head_ctx = []
            for hd in range(NH):
                lo = hd * Dh
                q = qkv_b[:, lo:lo + Dh]               # [L, Dh]  (already scaled)
                k = qkv_b[:, H + lo:H + lo + Dh]       # [L, Dh]
                v = qkv_b[:, 2 * H + lo:2 * H + lo + Dh]
                # q @ k^T via dot_general (contract Dh) -- no materialized transpose
                s = jax.lax.dot_general(q, k, (((1,), (1,)), ((), ())),
                                        preferred_element_type=jnp.float32)   # [L, L]
                m = jnp.max(s, axis=-1, keepdims=True)
                p = jnp.exp(s - m)
                # approx reciprocal on the EUP slot; use approx=False for bit-level parity
                p = p * pl.reciprocal(jnp.sum(p, axis=-1, keepdims=True), approx=True)
                head_ctx.append(jnp.dot(p, v, preferred_element_type=jnp.float32))  # [L, Dh]
            ctx_batches.append(jnp.concatenate(head_ctx, axis=-1))                  # [L, H]
        ctx = jnp.concatenate(ctx_batches, axis=0)                                  # [B*L, H]

        # Single output projection for all heads & both batch items
        attn = jnp.dot(ctx, wo, preferred_element_type=jnp.float32) + bo

        # residual add fused into layernorm
        h = _layernorm(attn + h, ln1g, ln1b, eps)

        # FFN (gelu) + residual + layernorm
        inter = _gelu(jnp.dot(h, wi, preferred_element_type=jnp.float32) + bi)
        ffn = jnp.dot(inter, wo2, preferred_element_type=jnp.float32) + bo2
        h = _layernorm(ffn + h, ln2g, ln2b, eps)

    # decoder on all B*L rows (one matmul); per-batch slice of the first S tokens
    dec_w = head_w_ref[D_img:D_img + H, :]             # [H, H] (cols >= C are zero)
    dec_b = head_b_ref[1:2, 0:C]                       # [1, C]
    dec_full = jnp.dot(h, dec_w, preferred_element_type=jnp.float32)    # [B*L, H]

    # MSE loss fully in-kernel (sum of squared error over both batch items / (B*S*C))
    sse = jnp.zeros((1, 1), jnp.float32)
    for b in range(B):
        pred_b = dec_full[b * L:b * L + S, 0:C] + dec_b                 # [S, C]
        pred_ref[b] = pred_b
        d = pred_b - car_ref[b]
        sse = sse + jnp.sum(d * d, axis=(0, 1), keepdims=True)
    loss_ref[...] = sse * (1.0 / float(B * S * C))


# ----------------------------- host-side param packing (done once) -----------------------------

def pack_params(params, *, H, NH, C):
    """Pack natural per-layer params into a few slabs; fold 1/sqrt(Dh) into Q."""
    NL = params["wqkv"].shape[0]
    I = params["wi"].shape[-1]
    Dh = H // NH
    assert I <= 3 * H and C <= H
    q_scale = 1.0 / math.sqrt(Dh)

    wqkv = params["wqkv"].at[:, :, :H].multiply(q_scale)   # fold softmax scale into Q weights
    bqkv = params["bqkv"].at[:, :, :H].multiply(q_scale)   # ... and Q bias

    w1 = jnp.concatenate([wqkv, params["wo"], params["wi"]], axis=-1)    # [NL, H, 4H + I]
    w2 = params["wo2"]                                                   # [NL, I, H]

    W = 3 * H
    def row(v):  # [NL, 1, n] -> [NL, 1, 3H] zero-padded
        return jnp.pad(v, ((0, 0), (0, 0), (0, W - v.shape[-1])))
    vecs = jnp.concatenate(
        [row(bqkv), row(params["bo"]), row(params["bi"]), row(params["bo2"]),
         row(params["ln1_g"]), row(params["ln1_b"]),
         row(params["ln2_g"]), row(params["ln2_b"])], axis=1)            # [NL, 8, 3H]

    dec_w_pad = jnp.pad(params["dec_w"], ((0, 0), (0, H - C)))           # [H, H]
    head_w = jnp.concatenate([params["img_w"], dec_w_pad], axis=0)       # [D_img + H, H]
    dec_b_pad = jnp.pad(params["dec_b"], ((0, 0), (0, H - C)))           # [1, H]
    head_b = jnp.concatenate([params["img_b"], dec_b_pad], axis=0)       # [2, H]

    return {"head_w": head_w, "head_b": head_b, "w1": w1, "w2": w2, "vecs": vecs}


# ----------------------------- wrapper -----------------------------

def sensor_pred_head_forward(vid_feats, car_info, packed, cfg):
    B, L, D_img = vid_feats.shape
    _, C, S = car_info.shape                       # PyTorch layout [B, C, S]
    H, NH = cfg["hidden"], cfg["heads"]
    NL, _, w1_lanes = packed["w1"].shape
    I = packed["w2"].shape[1]
    assert w1_lanes == 4 * H + I
    assert L >= S, "number of video tokens must be >= frame_num"
    assert C + (H - C) == packed["head_w"].shape[-1]

    # car_info.permute(0, 2, 1) -> [B, S, C]  (tiny host-side transpose; see TODO above)
    car = jnp.transpose(car_info, (0, 2, 1)).astype(jnp.float32)
    # flatten batch*tokens for row-parallel matmuls (free reshape of a contiguous array)
    vid2d = vid_feats.astype(jnp.float32).reshape(B * L, D_img)

    kernel = functools.partial(
        _fused_forward_kernel,
        B=B, L=L, S=S, C=C, D_img=D_img, H=H, NH=NH, I=I, NL=NL, eps=1e-12)

    in_specs = [
        pl.BlockSpec((B * L, D_img), lambda i: (0, 0)),            # video tokens
        pl.BlockSpec((B, S, C), lambda i: (0, 0, 0)),              # targets
        pl.BlockSpec(packed["head_w"].shape, lambda i: (0, 0)),    # img_w | dec_w
        pl.BlockSpec(packed["head_b"].shape, lambda i: (0, 0)),    # img_b | dec_b
        pl.BlockSpec(packed["w1"].shape, lambda i: (0, 0, 0)),     # wqkv | wo | wi
        pl.BlockSpec(packed["w2"].shape, lambda i: (0, 0, 0)),     # wo2
        pl.BlockSpec(packed["vecs"].shape, lambda i: (0, 0, 0)),   # biases + layernorm vectors
    ]
    out_specs = [
        pl.BlockSpec((B, S, C), lambda i: (0, 0, 0)),              # pred
        pl.BlockSpec((1, 1), lambda i: (0, 0)),                    # scalar loss
    ]

    pred, loss2d = pl.pallas_call(
        kernel,
        out_shape=(jax.ShapeDtypeStruct((B, S, C), jnp.float32),
                   jax.ShapeDtypeStruct((1, 1), jnp.float32)),
        grid=(1,),
        in_specs=in_specs,
        out_specs=out_specs,
        compiler_params=pltpu.CompilerParams(dimension_semantics=("arbitrary",)),
    )(vid2d, car, packed["head_w"], packed["head_b"],
      packed["w1"], packed["w2"], packed["vecs"])

    return loss2d[0, 0], pred


# ----------------------------- deterministic param init -----------------------------

def init_params(key, D_img, H, NH, I, NL, C):
    k = jax.random.split(key, 6)

    def w(kk, *shape):
        return 0.02 * jax.random.normal(kk, shape, jnp.float32)

    return {
        "img_w": w(k[0], D_img, H), "img_b": jnp.zeros((1, H), jnp.float32),
        "wqkv": w(k[1], NL, H, 3 * H), "bqkv": jnp.zeros((NL, 1, 3 * H), jnp.float32),
        "wo": w(k[2], NL, H, H), "bo": jnp.zeros((NL, 1, H), jnp.float32),
        "ln1_g": jnp.ones((NL, 1, H), jnp.float32), "ln1_b": jnp.zeros((NL, 1, H), jnp.float32),
        "wi": w(k[3], NL, H, I), "bi": jnp.zeros((NL, 1, I), jnp.float32),
        "wo2": w(k[4], NL, I, H), "bo2": jnp.zeros((NL, 1, H), jnp.float32),
        "ln2_g": jnp.ones((NL, 1, H), jnp.float32), "ln2_b": jnp.zeros((NL, 1, H), jnp.float32),
        "dec_w": w(k[5], H, C), "dec_b": jnp.zeros((1, C), jnp.float32),
    }


# ----------------------------- main -----------------------------

if __name__ == "__main__":
    # Small BertConfig-like setup
    B, L, D_img = 2, 16, 32      # batch, video tokens, img_feature_dim
    S, C = 8, 4                  # frames, sensor_dim (= len(signal_types))
    H, NH, I, NL = 32, 4, 64, 2  # hidden, heads, intermediate, num layers
    cfg = {"hidden": H, "heads": NH}

    key = jax.random.PRNGKey(0)
    kp, kx, kc = jax.random.split(key, 3)
    params = init_params(kp, D_img, H, NH, I, NL, C)
    packed = pack_params(params, H=H, NH=NH, C=C)   # host-side, once (folds 1/sqrt(Dh) into Q)

    vid_feats = jax.random.normal(kx, (B, L, D_img), jnp.float32)
    car_info = jax.random.normal(kc, (B, C, S), jnp.float32)  # PyTorch layout [B, C, S]

    fwd = jax.jit(lambda v, c, p: sensor_pred_head_forward(v, c, p, cfg))
    loss, pred = fwd(vid_feats, car_info, packed)
    jax.block_until_ready((loss, pred))
    assert pred.shape == (B, S, C)
    assert loss.shape == ()
    print("KERNEL_OK")
</pallas_src>

<mosaic_0001>
module attributes {stable_mosaic.version = 11 : i64} {
  func.func @_fused_forward_kernel(%arg0: i32, %arg1: memref<32x32xf32, #tpu.memory_space<vmem>>, %arg2: memref<2x8x4xf32, #tpu.memory_space<vmem>>, %arg3: memref<64x32xf32, #tpu.memory_space<vmem>>, %arg4: memref<2x32xf32, #tpu.memory_space<vmem>>, %arg5: memref<2x32x192xf32, #tpu.memory_space<vmem>>, %arg6: memref<2x64x32xf32, #tpu.memory_space<vmem>>, %arg7: memref<2x8x96xf32, #tpu.memory_space<vmem>>, %arg8: memref<2x8x4xf32, #tpu.memory_space<vmem>>, %arg9: memref<1x1xf32, #tpu.memory_space<vmem>>) attributes {dimension_semantics = [#tpu.dimension_semantics<arbitrary>], iteration_bounds = array<i64: 1>, scalar_prefetch = 0 : i64, scratch_operands = 0 : i64, tpu.core_type = #tpu.core_type<tc>, window_params = [{pipeline_mode = #tpu.pipeline_mode<synchronous>, transform_indices = @transform_0, window_bounds = array<i64: 32, 32>}, {pipeline_mode = #tpu.pipeline_mode<synchronous>, transform_indices = @transform_1, window_bounds = array<i64: 2, 8, 4>}, {pipeline_mode = #tpu.pipeline_mode<synchronous>, transform_indices = @transform_2, window_bounds = array<i64: 64, 32>}, {pipeline_mode = #tpu.pipeline_mode<synchronous>, transform_indices = @transform_3, window_bounds = array<i64: 2, 32>}, {pipeline_mode = #tpu.pipeline_mode<synchronous>, transform_indices = @transform_4, window_bounds = array<i64: 2, 32, 192>}, {pipeline_mode = #tpu.pipeline_mode<synchronous>, transform_indices = @transform_5, window_bounds = array<i64: 2, 64, 32>}, {pipeline_mode = #tpu.pipeline_mode<synchronous>, transform_indices = @transform_6, window_bounds = array<i64: 2, 8, 96>}, {pipeline_mode = #tpu.pipeline_mode<synchronous>, transform_indices = @transform_7, window_bounds = array<i64: 2, 8, 4>}, {pipeline_mode = #tpu.pipeline_mode<synchronous>, transform_indices = @transform_8, window_bounds = array<i64: 1, 1>}]} {
    %c0 = arith.constant 0 : index
    %c0_0 = arith.constant 0 : index
    %0 = vector.load %arg1[%c0, %c0_0] : memref<32x32xf32, #tpu.memory_space<vmem>>, vector<32x32xf32>
    %c0_1 = arith.constant 0 : index
    %c0_2 = arith.constant 0 : index
    %1 = vector.load %arg3[%c0_1, %c0_2] : memref<64x32xf32, #tpu.memory_space<vmem>>, vector<32x32xf32>
    %c0_3 = arith.constant 0 : index
    %c0_4 = arith.constant 0 : index
    %2 = vector.load %arg4[%c0_3, %c0_4] : memref<2x32xf32, #tpu.memory_space<vmem>>, vector<1x32xf32>
    %cst = arith.constant dense<0.000000e+00> : vector<32x32xf32>
    %3 = tpu.matmul %0, %1, %cst {dimension_numbers = #tpu.dot_dimension_numbers<[1], [0], [0], [1], [0, 0, 1, 1], [], []>} : vector<32x32xf32>, vector<32x32xf32>, vector<32x32xf32> -> vector<32x32xf32>
    %4 = vector.broadcast %2 : vector<1x32xf32> to vector<32x32xf32>
    %5 = arith.addf %3, %4 : vector<32x32xf32>
    %c0_5 = arith.constant 0 : index
    %c0_6 = arith.constant 0 : index
    %c0_7 = arith.constant 0 : index
    %6 = vector.load %arg5[%c0_5, %c0_6, %c0_7] : memref<2x32x192xf32, #tpu.memory_space<vmem>>, vector<1x32x192xf32>
    %7 = vector.shape_cast %6 : vector<1x32x192xf32> to vector<32x192xf32>
    %8 = vector.extract_strided_slice %7 {offsets = [0, 0], sizes = [32, 96], strides = [1, 1]} : vector<32x192xf32> to vector<32x96xf32>
    %9 = vector.extract_strided_slice %7 {offsets = [0, 96], sizes = [32, 32], strides = [1, 1]} : vector<32x192xf32> to vector<32x32xf32>
    %10 = vector.extract_strided_slice %7 {offsets = [0, 128], sizes = [32, 64], strides = [1, 1]} : vector<32x192xf32> to vector<32x64xf32>
    %c0_8 = arith.constant 0 : index
    %c0_9 = arith.constant 0 : index
    %c0_10 = arith.constant 0 : index
    %11 = vector.load %arg6[%c0_8, %c0_9, %c0_10] : memref<2x64x32xf32, #tpu.memory_space<vmem>>, vector<1x64x32xf32>
    %12 = vector.shape_cast %11 : vector<1x64x32xf32> to vector<64x32xf32>
    %c0_11 = arith.constant 0 : index
    %c0_12 = arith.constant 0 : index
    %c0_13 = arith.constant 0 : index
    %13 = vector.load %arg7[%c0_11, %c0_12, %c0_13] : memref<2x8x96xf32, #tpu.memory_space<vmem>>, vector<1x8x96xf32>
    %14 = vector.shape_cast %13 : vector<1x8x96xf32> to vector<8x96xf32>
    %15 = vector.extract_strided_slice %14 {offsets = [0, 0], sizes = [1, 96], strides = [1, 1]} : vector<8x96xf32> to vector<1x96xf32>
    %16 = vector.extract_strided_slice %14 {offsets = [1, 0], sizes = [1, 32], strides = [1, 1]} : vector<8x96xf32> to vector<1x32xf32>
    %17 = vector.extract_strided_slice %14 {offsets = [2, 0], sizes = [1, 64], strides = [1, 1]} : vector<8x96xf32> to vector<1x64xf32>
    %18 = vector.extract_strided_slice %14 {offsets = [3, 0], sizes = [1, 32], strides = [1, 1]} : vector<8x96xf32> to vector<1x32xf32>
    %19 = vector.extract_strided_slice %14 {offsets = [4, 0], sizes = [1, 32], strides = [1, 1]} : vector<8x96xf32> to vector<1x32xf32>
    %20 = vector.extract_strided_slice %14 {offsets = [5, 0], sizes = [1, 32], strides = [1, 1]} : vector<8x96xf32> to vector<1x32xf32>
    %21 = vector.extract_strided_slice %14 {offsets = [6, 0], sizes = [1, 32], strides = [1, 1]} : vector<8x96xf32> to vector<1x32xf32>
    %22 = vector.extract_strided_slice %14 {offsets = [7, 0], sizes = [1, 32], strides = [1, 1]} : vector<8x96xf32> to vector<1x32xf32>
    %cst_14 = arith.constant dense<0.000000e+00> : vector<32x96xf32>
    %23 = tpu.matmul %5, %8, %cst_14 {dimension_numbers = #tpu.dot_dimension_numbers<[1], [0], [0], [1], [0, 0, 1, 1], [], []>} : vector<32x32xf32>, vector<32x96xf32>, vector<32x96xf32> -> vector<32x96xf32>
    %24 = vector.broadcast %15 : vector<1x96xf32> to vector<32x96xf32>
    %25 = arith.addf %23, %24 : vector<32x96xf32>
    %26 = vector.extract_strided_slice %25 {offsets = [0, 0], sizes = [16, 96], strides = [1, 1]} : vector<32x96xf32> to vector<16x96xf32>
    %27 = vector.extract_strided_slice %26 {offsets = [0, 0], sizes = [16, 8], strides = [1, 1]} : vector<16x96xf32> to vector<16x8xf32>
    %28 = vector.extract_strided_slice %26 {offsets = [0, 32], sizes = [16, 8], strides = [1, 1]} : vector<16x96xf32> to vector<16x8xf32>
    %29 = vector.extract_strided_slice %26 {offsets = [0, 64], sizes = [16, 8], strides = [1, 1]} : vector<16x96xf32> to vector<16x8xf32>
    %cst_15 = arith.constant dense<0.000000e+00> : vector<16x16xf32>
    %30 = tpu.matmul %27, %28, %cst_15 {dimension_numbers = #tpu.dot_dimension_numbers<[1], [1], [0], [0], [0, 0, 1, 0], [], []>} : vector<16x8xf32>, vector<16x8xf32>, vector<16x16xf32> -> vector<16x16xf32>
    %cst_16 = arith.constant dense<0xFF800000> : vector<16xf32>
    %31 = vector.multi_reduction <maximumf>, %30, %cst_16 [1] : vector<16x16xf32> to vector<16xf32>
    %32 = vector.shape_cast %31 : vector<16xf32> to vector<16x1xf32>
    %33 = vector.broadcast %32 : vector<16x1xf32> to vector<16x16xf32>
    %34 = arith.subf %30, %33 : vector<16x16xf32>
    %35 = math.exp %34 : vector<16x16xf32>
    %cst_17 = arith.constant dense<0.000000e+00> : vector<16xf32>
    %36 = vector.multi_reduction <add>, %35, %cst_17 [1] : vector<16x16xf32> to vector<16xf32>
    %37 = vector.shape_cast %36 : vector<16xf32> to vector<16x1xf32>
    %38 = tpu.reciprocal %37 {approx = true} : vector<16x1xf32> -> vector<16x1xf32>
    %39 = vector.broadcast %38 : vector<16x1xf32> to vector<16x16xf32>
    %40 = arith.mulf %35, %39 : vector<16x16xf32>
    %cst_18 = arith.constant dense<0.000000e+00> : vector<16x8xf32>
    %41 = tpu.matmul %40, %29, %cst_18 {dimension_numbers = #tpu.dot_dimension_numbers<[1], [0], [0], [1], [0, 0, 1, 1], [], []>} : vector<16x16xf32>, vector<16x8xf32>, vector<16x8xf32> -> vector<16x8xf32>
    %42 = vector.extract_strided_slice %26 {offsets = [0, 8], sizes = [16, 8], strides = [1, 1]} : vector<16x96xf32> to vector<16x8xf32>
    %43 = vector.extract_strided_slice %26 {offsets = [0, 40], sizes = [16, 8], strides = [1, 1]} : vector<16x96xf32> to vector<16x8xf32>
    %44 = vector.extract_strided_slice %26 {offsets = [0, 72], sizes = [16, 8], strides = [1, 1]} : vector<16x96xf32> to vector<16x8xf32>
    %cst_19 = arith.constant dense<0.000000e+00> : vector<16x16xf32>
    %45 = tpu.matmul %42, %43, %cst_19 {dimension_numbers = #tpu.dot_dimension_numbers<[1], [1], [0], [0], [0, 0, 1, 0], [], []>} : vector<16x8xf32>, vector<16x8xf32>, vector<16x16xf32> -> vector<16x16xf32>
    %cst_20 = arith.constant dense<0xFF800000> : vector<16xf32>
    %46 = vector.multi_reduction <maximumf>, %45, %cst_20 [1] : vector<16x16xf32> to vector<16xf32>
    %47 = vector.shape_cast %46 : vector<16xf32> to vector<16x1xf32>
    %48 = vector.broadcast %47 : vector<16x1xf32> to vector<16x16xf32>
    %49 = arith.subf %45, %48 : vector<16x16xf32>
    %50 = math.exp %49 : vector<16x16xf32>
    %cst_21 = arith.constant dense<0.000000e+00> : vector<16xf32>
    %51 = vector.multi_reduction <add>, %50, %cst_21 [1] : vector<16x16xf32> to vector<16xf32>
    %52 = vector.shape_cast %51 : vector<16xf32> to vector<16x1xf32>
    %53 = tpu.reciprocal %52 {approx = true} : vector<16x1xf32> -> vector<16x1xf32>
    %54 = vector.broadcast %53 : vector<16x1xf32> to vector<16x16xf32>
    %55 = arith.mulf %50, %54 : vector<16x16xf32>
    %cst_22 = arith.constant dense<0.000000e+00> : vector<16x8xf32>
    %56 = tpu.matmul %55, %44, %cst_22 {dimension_numbers = #tpu.dot_dimension_numbers<[1], [0], [0], [1], [0, 0, 1, 1], [], []>} : vector<16x16xf32>, vector<16x8xf32>, vector<16x8xf32> -> vector<16x8xf32>
    %57 = vector.extract_strided_slice %26 {offsets = [0, 16], sizes = [16, 8], strides = [1, 1]} : vector<16x96xf32> to vector<16x8xf32>
    %58 = vector.extract_strided_slice %26 {offsets = [0, 48], sizes = [16, 8], strides = [1, 1]} : vector<16x96xf32> to vector<16x8xf32>
    %59 = vector.extract_strided_slice %26 {offsets = [0, 80], sizes = [16, 8], strides = [1, 1]} : vector<16x96xf32> to vector<16x8xf32>
    %cst_23 = arith.constant dense<0.000000e+00> : vector<16x16xf32>
    %60 = tpu.matmul %57, %58, %cst_23 {dimension_numbers = #tpu.dot_dimension_numbers<[1], [1], [0], [0], [0, 0, 1, 0], [], []>} : vector<16x8xf32>, vector<16x8xf32>, vector<16x16xf32> -> vector<16x16xf32>
    %cst_24 = arith.constant dense<0xFF800000> : vector<16xf32>
    %61 = vector.multi_reduction <maximumf>, %60, %cst_24 [1] : vector<16x16xf32> to vector<16xf32>
    %62 = vector.shape_cast %61 : vector<16xf32> to vector<16x1xf32>
    %63 = vector.broadcast %62 : vector<16x1xf32> to vector<16x16xf32>
    %64 = arith.subf %60, %63 : vector<16x16xf32>
    %65 = math.exp %64 : vector<16x16xf32>
    %cst_25 = arith.constant dense<0.000000e+00> : vector<16xf32>
    %66 = vector.multi_reduction <add>, %65, %cst_25 [1] : vector<16x16xf32> to vector<16xf32>
    %67 = vector.shape_cast %66 : vector<16xf32> to vector<16x1xf32>
    %68 = tpu.reciprocal %67 {approx = true} : vector<16x1xf32> -> vector<16x1xf32>
    %69 = vector.broadcast %68 : vector<16x1xf32> to vector<16x16xf32>
    %70 = arith.mulf %65, %69 : vector<16x16xf32>
    %cst_26 = arith.constant dense<0.000000e+00> : vector<16x8xf32>
    %71 = tpu.matmul %70, %59, %cst_26 {dimension_numbers = #tpu.dot_dimension_numbers<[1], [0], [0], [1], [0, 0, 1, 1], [], []>} : vector<16x16xf32>, vector<16x8xf32>, vector<16x8xf32> -> vector<16x8xf32>
    %72 = vector.extract_strided_slice %26 {offsets = [0, 24], sizes = [16, 8], strides = [1, 1]} : vector<16x96xf32> to vector<16x8xf32>
    %73 = vector.extract_strided_slice %26 {offsets = [0, 56], sizes = [16, 8], strides = [1, 1]} : vector<16x96xf32> to vector<16x8xf32>
    %74 = vector.extract_strided_slice %26 {offsets = [0, 88], sizes = [16, 8], strides = [1, 1]} : vector<16x96xf32> to vector<16x8xf32>
    %cst_27 = arith.constant dense<0.000000e+00> : vector<16x16xf32>
    %75 = tpu.matmul %72, %73, %cst_27 {dimension_numbers = #tpu.dot_dimension_numbers<[1], [1], [0], [0], [0, 0, 1, 0], [], []>} : vector<16x8xf32>, vector<16x8xf32>, vector<16x16xf32> -> vector<16x16xf32>
    %cst_28 = arith.constant dense<0xFF800000> : vector<16xf32>
    %76 = vector.multi_reduction <maximumf>, %75, %cst_28 [1] : vector<16x16xf32> to vector<16xf32>
    %77 = vector.shape_cast %76 : vector<16xf32> to vector<16x1xf32>
    %78 = vector.broadcast %77 : vector<16x1xf32> to vector<16x16xf32>
    %79 = arith.subf %75, %78 : vector<16x16xf32>
    %80 = math.exp %79 : vector<16x16xf32>
    %cst_29 = arith.constant dense<0.000000e+00> : vector<16xf32>
    %81 = vector.multi_reduction <add>, %80, %cst_29 [1] : vector<16x16xf32> to vector<16xf32>
    %82 = vector.shape_cast %81 : vector<16xf32> to vector<16x1xf32>
    %83 = tpu.reciprocal %82 {approx = true} : vector<16x1xf32> -> vector<16x1xf32>
    %84 = vector.broadcast %83 : vector<16x1xf32> to vector<16x16xf32>
    %85 = arith.mulf %80, %84 : vector<16x16xf32>
    %cst_30 = arith.constant dense<0.000000e+00> : vector<16x8xf32>
    %86 = tpu.matmul %85, %74, %cst_30 {dimension_numbers = #tpu.dot_dimension_numbers<[1], [0], [0], [1], [0, 0, 1, 1], [], []>} : vector<16x16xf32>, vector<16x8xf32>, vector<16x8xf32> -> vector<16x8xf32>
    %87 = tpu.concatenate %41, %56, %71, %86 in 1 : vector<16x8xf32>, vector<16x8xf32>, vector<16x8xf32>, vector<16x8xf32> -> vector<16x32xf32>
    %88 = vector.extract_strided_slice %25 {offsets = [16, 0], sizes = [16, 96], strides = [1, 1]} : vector<32x96xf32> to vector<16x96xf32>
    %89 = vector.extract_strided_slice %88 {offsets = [0, 0], sizes = [16, 8], strides = [1, 1]} : vector<16x96xf32> to vector<16x8xf32>
    %90 = vector.extract_strided_slice %88 {offsets = [0, 32], sizes = [16, 8], strides = [1, 1]} : vector<16x96xf32> to vector<16x8xf32>
    %91 = vector.extract_strided_slice %88 {offsets = [0, 64], sizes = [16, 8], strides = [1, 1]} : vector<16x96xf32> to vector<16x8xf32>
    %cst_31 = arith.constant dense<0.000000e+00> : vector<16x16xf32>
    %92 = tpu.matmul %89, %90, %cst_31 {dimension_numbers = #tpu.dot_dimension_numbers<[1], [1], [0], [0], [0, 0, 1, 0], [], []>} : vector<16x8xf32>, vector<16x8xf32>, vector<16x16xf32> -> vector<16x16xf32>
    %cst_32 = arith.constant dense<0xFF800000> : vector<16xf32>
    %93 = vector.multi_reduction <maximumf>, %92, %cst_32 [1] : vector<16x16xf32> to vector<16xf32>
    %94 = vector.shape_cast %93 : vector<16xf32> to vector<16x1xf32>
    %95 = vector.broadcast %94 : vector<16x1xf32> to vector<16x16xf32>
    %96 = arith.subf %92, %95 : vector<16x16xf32>
    %97 = math.exp %96 : vector<16x16xf32>
    %cst_33 = arith.constant dense<0.000000e+00> : vector<16xf32>
    %98 = vector.multi_reduction <add>, %97, %cst_33 [1] : vector<16x16xf32> to vector<16xf32>
    %99 = vector.shape_cast %98 : vector<16xf32> to vector<16x1xf32>
    %100 = tpu.reciprocal %99 {approx = true} : vector<16x1xf32> -> vector<16x1xf32>
    %101 = vector.broadcast %100 : vector<16x1xf32> to vector<16x16xf32>
    %102 = arith.mulf %97, %101 : vector<16x16xf32>
    %cst_34 = arith.constant dense<0.000000e+00> : vector<16x8xf32>
    %103 = tpu.matmul %102, %91, %cst_34 {dimension_numbers = #tpu.dot_dimension_numbers<[1], [0], [0], [1], [0, 0, 1, 1], [], []>} : vector<16x16xf32>, vector<16x8xf32>, vector<16x8xf32> -> vector<16x8xf32>
    %104 = vector.extract_strided_slice %88 {offsets = [0, 8], sizes = [16, 8], strides = [1, 1]} : vector<16x96xf32> to vector<16x8xf32>
    %105 = vector.extract_strided_slice %88 {offsets = [0, 40], sizes = [16, 8], strides = [1, 1]} : vector<16x96xf32> to vector<16x8xf32>
    %106 = vector.extract_strided_slice %88 {offsets = [0, 72], sizes = [16, 8], strides = [1, 1]} : vector<16x96xf32> to vector<16x8xf32>
    %cst_35 = arith.constant dense<0.000000e+00> : vector<16x16xf32>
    %107 = tpu.matmul %104, %105, %cst_35 {dimension_numbers = #tpu.dot_dimension_numbers<[1], [1], [0], [0], [0, 0, 1, 0], [], []>} : vector<16x8xf32>, vector<16x8xf32>, vector<16x16xf32> -> vector<16x16xf32>
    %cst_36 = arith.constant dense<0xFF800000> : vector<16xf32>
    %108 = vector.multi_reduction <maximumf>, %107, %cst_36 [1] : vector<16x16xf32> to vector<16xf32>
    %109 = vector.shape_cast %108 : vector<16xf32> to vector<16x1xf32>
    %110 = vector.broadcast %109 : vector<16x1xf32> to vector<16x16xf32>
    %111 = arith.subf %107, %110 : vector<16x16xf32>
    %112 = math.exp %111 : vector<16x16xf32>
    %cst_37 = arith.constant dense<0.000000e+00> : vector<16xf32>
    %113 = vector.multi_reduction <add>, %112, %cst_37 [1] : vector<16x16xf32> to vector<16xf32>
    %114 = vector.shape_cast %113 : vector<16xf32> to vector<16x1xf32>
    %115 = tpu.reciprocal %114 {approx = true} : vector<16x1xf32> -> vector<16x1xf32>
    %116 = vector.broadcast %115 : vector<16x1xf32> to vector<16x16xf32>
    %117 = arith.mulf %112, %116 : vector<16x16xf32>
    %cst_38 = arith.constant dense<0.000000e+00> : vector<16x8xf32>
    %118 = tpu.matmul %117, %106, %cst_38 {dimension_numbers = #tpu.dot_dimension_numbers<[1], [0], [0], [1], [0, 0, 1, 1], [], []>} : vector<16x16xf32>, vector<16x8xf32>, vector<16x8xf32> -> vector<16x8xf32>
    %119 = vector.extract_strided_slice %88 {offsets = [0, 16], sizes = [16, 8], strides = [1, 1]} : vector<16x96xf32> to vector<16x8xf32>
    %120 = vector.extract_strided_slice %88 {offsets = [0, 48], sizes = [16, 8], strides = [1, 1]} : vector<16x96xf32> to vector<16x8xf32>
    %121 = vector.extract_strided_slice %88 {offsets = [0, 80], sizes = [16, 8], strides = [1, 1]} : vector<16x96xf32> to vector<16x8xf32>
    %cst_39 = arith.constant dense<0.000000e+00> : vector<16x16xf32>
    %122 = tpu.matmul %119, %120, %cst_39 {dimension_numbers = #tpu.dot_dimension_numbers<[1], [1], [0], [0], [0, 0, 1, 0], [], []>} : vector<16x8xf32>, vector<16x8xf32>, vector<16x16xf32> -> vector<16x16xf32>
    %cst_40 = arith.constant dense<0xFF800000> : vector<16xf32>
    %123 = vector.multi_reduction <maximumf>, %122, %cst_40 [1] : vector<16x16xf32> to vector<16xf32>
    %124 = vector.shape_cast %123 : vector<16xf32> to vector<16x1xf32>
    %125 = vector.broadcast %124 : vector<16x1xf32> to vector<16x16xf32>
    %126 = arith.subf %122, %125 : vector<16x16xf32>
    %127 = math.exp %126 : vector<16x16xf32>
    %cst_41 = arith.constant dense<0.000000e+00> : vector<16xf32>
    %128 = vector.multi_reduction <add>, %127, %cst_41 [1] : vector<16x16xf32> to vector<16xf32>
    %129 = vector.shape_cast %128 : vector<16xf32> to vector<16x1xf32>
    %130 = tpu.reciprocal %129 {approx = true} : vector<16x1xf32> -> vector<16x1xf32>
    %131 = vector.broadcast %130 : vector<16x1xf32> to vector<16x16xf32>
    %132 = arith.mulf %127, %131 : vector<16x16xf32>
    %cst_42 = arith.constant dense<0.000000e+00> : vector<16x8xf32>
    %133 = tpu.matmul %132, %121, %cst_42 {dimension_numbers = #tpu.dot_dimension_numbers<[1], [0], [0], [1], [0, 0, 1, 1], [], []>} : vector<16x16xf32>, vector<16x8xf32>, vector<16x8xf32> -> vector<16x8xf32>
    %134 = vector.extract_strided_slice %88 {offsets = [0, 24], sizes = [16, 8], strides = [1, 1]} : vector<16x96xf32> to vector<16x8xf32>
    %135 = vector.extract_strided_slice %88 {offsets = [0, 56], sizes = [16, 8], strides = [1, 1]} : vector<16x96xf32> to vector<16x8xf32>
    %136 = vector.extract_strided_slice %88 {offsets = [0, 88], sizes = [16, 8], strides = [1, 1]} : vector<16x96xf32> to vector<16x8xf32>
    %cst_43 = arith.constant dense<0.000000e+00> : vector<16x16xf32>
    %137 = tpu.matmul %134, %135, %cst_43 {dimension_numbers = #tpu.dot_dimension_numbers<[1], [1], [0], [0], [0, 0, 1, 0], [], []>} : vector<16x8xf32>, vector<16x8xf32>, vector<16x16xf32> -> vector<16x16xf32>
    %cst_44 = arith.constant dense<0xFF800000> : vector<16xf32>
    %138 = vector.multi_reduction <maximumf>, %137, %cst_44 [1] : vector<16x16xf32> to vector<16xf32>
    %139 = vector.shape_cast %138 : vector<16xf32> to vector<16x1xf32>
    %140 = vector.broadcast %139 : vector<16x1xf32> to vector<16x16xf32>
    %141 = arith.subf %137, %140 : vector<16x16xf32>
    %142 = math.exp %141 : vector<16x16xf32>
    %cst_45 = arith.constant dense<0.000000e+00> : vector<16xf32>
    %143 = vector.multi_reduction <add>, %142, %cst_45 [1] : vector<16x16xf32> to vector<16xf32>
    %144 = vector.shape_cast %143 : vector<16xf32> to vector<16x1xf32>
    %145 = tpu.reciprocal %144 {approx = true} : vector<16x1xf32> -> vector<16x1xf32>
    %146 = vector.broadcast %145 : vector<16x1xf32> to vector<16x16xf32>
    %147 = arith.mulf %142, %146 : vector<16x16xf32>
    %cst_46 = arith.constant dense<0.000000e+00> : vector<16x8xf32>
    %148 = tpu.matmul %147, %136, %cst_46 {dimension_numbers = #tpu.dot_dimension_numbers<[1], [0], [0], [1], [0, 0, 1, 1], [], []>} : vector<16x16xf32>, vector<16x8xf32>, vector<16x8xf32> -> vector<16x8xf32>
    %149 = tpu.concatenate %103, %118, %133, %148 in 1 : vector<16x8xf32>, vector<16x8xf32>, vector<16x8xf32>, vector<16x8xf32> -> vector<16x32xf32>
    %150 = tpu.concatenate %87, %149 in 0 : vector<16x32xf32>, vector<16x32xf32> -> vector<32x32xf32>
    %cst_47 = arith.constant dense<0.000000e+00> : vector<32x32xf32>
    %151 = tpu.matmul %150, %9, %cst_47 {dimension_numbers = #tpu.dot_dimension_numbers<[1], [0], [0], [1], [0, 0, 1, 1], [], []>} : vector<32x32xf32>, vector<32x32xf32>, vector<32x32xf32> -> vector<32x32xf32>
    %152 = vector.broadcast %16 : vector<1x32xf32> to vector<32x32xf32>
    %153 = arith.addf %151, %152 : vector<32x32xf32>
    %154 = arith.addf %153, %5 : vector<32x32xf32>
    %cst_48 = arith.constant dense<0.000000e+00> : vector<32xf32>
    %155 = vector.multi_reduction <add>, %154, %cst_48 [1] : vector<32x32xf32> to vector<32xf32>
    %156 = vector.shape_cast %155 : vector<32xf32> to vector<32x1xf32>
    %cst_49 = arith.constant 3.200000e+01 : f32
    %157 = vector.broadcast %cst_49 : f32 to vector<32x1xf32>
    %158 = arith.divf %156, %157 : vector<32x1xf32>
    %159 = vector.broadcast %158 : vector<32x1xf32> to vector<32x32xf32>
    %160 = arith.subf %154, %159 : vector<32x32xf32>
    %161 = arith.mulf %160, %160 : vector<32x32xf32>
    %cst_50 = arith.constant dense<0.000000e+00> : vector<32xf32>
    %162 = vector.multi_reduction <add>, %161, %cst_50 [1] : vector<32x32xf32> to vector<32xf32>
    %163 = vector.shape_cast %162 : vector<32xf32> to vector<32x1xf32>
    %cst_51 = arith.constant 3.200000e+01 : f32
    %164 = vector.broadcast %cst_51 : f32 to vector<32x1xf32>
    %165 = arith.divf %163, %164 : vector<32x1xf32>
    %cst_52 = arith.constant 9.99999996E-13 : f32
    %166 = vector.broadcast %cst_52 : f32 to vector<32x1xf32>
    %167 = arith.addf %165, %166 : vector<32x1xf32>
    %168 = math.rsqrt %167 : vector<32x1xf32>
    %169 = vector.broadcast %168 : vector<32x1xf32> to vector<32x32xf32>
    %170 = arith.mulf %160, %169 : vector<32x32xf32>
    %171 = vector.broadcast %19 : vector<1x32xf32> to vector<32x32xf32>
    %172 = arith.mulf %170, %171 : vector<32x32xf32>
    %173 = vector.broadcast %20 : vector<1x32xf32> to vector<32x32xf32>
    %174 = arith.addf %172, %173 : vector<32x32xf32>
    %cst_53 = arith.constant dense<0.000000e+00> : vector<32x64xf32>
    %175 = tpu.matmul %174, %10, %cst_53 {dimension_numbers = #tpu.dot_dimension_numbers<[1], [0], [0], [1], [0, 0, 1, 1], [], []>} : vector<32x32xf32>, vector<32x64xf32>, vector<32x64xf32> -> vector<32x64xf32>
    %176 = vector.broadcast %17 : vector<1x64xf32> to vector<32x64xf32>
    %177 = arith.addf %175, %176 : vector<32x64xf32>
    %cst_54 = arith.constant 5.000000e-01 : f32
    %178 = vector.broadcast %cst_54 : f32 to vector<32x64xf32>
    %179 = arith.mulf %178, %177 : vector<32x64xf32>
    %cst_55 = arith.constant 0.707106769 : f32
    %180 = vector.broadcast %cst_55 : f32 to vector<32x64xf32>
    %181 = arith.mulf %177, %180 : vector<32x64xf32>
    %182 = math.erf %181 : vector<32x64xf32>
    %cst_56 = arith.constant 1.000000e+00 : f32
    %183 = vector.broadcast %cst_56 : f32 to vector<32x64xf32>
    %184 = arith.addf %183, %182 : vector<32x64xf32>
    %185 = arith.mulf %179, %184 : vector<32x64xf32>
    %cst_57 = arith.constant dense<0.000000e+00> : vector<32x32xf32>
    %186 = tpu.matmul %185, %12, %cst_57 {dimension_numbers = #tpu.dot_dimension_numbers<[1], [0], [0], [1], [0, 0, 1, 1], [], []>} : vector<32x64xf32>, vector<64x32xf32>, vector<32x32xf32> -> vector<32x32xf32>
    %187 = vector.broadcast %18 : vector<1x32xf32> to vector<32x32xf32>
    %188 = arith.addf %186, %187 : vector<32x32xf32>
    %189 = arith.addf %188, %174 : vector<32x32xf32>
    %cst_58 = arith.constant dense<0.000000e+00> : vector<32xf32>
    %190 = vector.multi_reduction <add>, %189, %cst_58 [1] : vector<32x32xf32> to vector<32xf32>
    %191 = vector.shape_cast %190 : vector<32xf32> to vector<32x1xf32>
    %cst_59 = arith.constant 3.200000e+01 : f32
    %192 = vector.broadcast %cst_59 : f32 to vector<32x1xf32>
    %193 = arith.divf %191, %192 : vector<32x1xf32>
    %194 = vector.broadcast %193 : vector<32x1xf32> to vector<32x32xf32>
    %195 = arith.subf %189, %194 : vector<32x32xf32>
    %196 = arith.mulf %195, %195 : vector<32x32xf32>
    %cst_60 = arith.constant dense<0.000000e+00> : vector<32xf32>
    %197 = vector.multi_reduction <add>, %196, %cst_60 [1] : vector<32x32xf32> to vector<32xf32>
    %198 = vector.shape_cast %197 : vector<32xf32> to vector<32x1xf32>
    %cst_61 = arith.constant 3.200000e+01 : f32
    %199 = vector.broadcast %cst_61 : f32 to vector<32x1xf32>
    %200 = arith.divf %198, %199 : vector<32x1xf32>
    %cst_62 = arith.constant 9.99999996E-13 : f32
    %201 = vector.broadcast %cst_62 : f32 to vector<32x1xf32>
    %202 = arith.addf %200, %201 : vector<32x1xf32>
    %203 = math.rsqrt %202 : vector<32x1xf32>
    %204 = vector.broadcast %203 : vector<32x1xf32> to vector<32x32xf32>
    %205 = arith.mulf %195, %204 : vector<32x32xf32>
    %206 = vector.broadcast %21 : vector<1x32xf32> to vector<32x32xf32>
    %207 = arith.mulf %205, %206 : vector<32x32xf32>
    %208 = vector.broadcast %22 : vector<1x32xf32> to vector<32x32xf32>
    %209 = arith.addf %207, %208 : vector<32x32xf32>
    %c1 = arith.constant 1 : index
    %c0_63 = arith.constant 0 : index
    %c0_64 = arith.constant 0 : index
    %210 = vector.load %arg5[%c1, %c0_63, %c0_64] : memref<2x32x192xf32, #tpu.memory_space<vmem>>, vector<1x32x192xf32>
    %211 = vector.shape_cast %210 : vector<1x32x192xf32> to vector<32x192xf32>
    %212 = vector.extract_strided_slice %211 {offsets = [0, 0], sizes = [32, 96], strides = [1, 1]} : vector<32x192xf32> to vector<32x96xf32>
    %213 = vector.extract_strided_slice %211 {offsets = [0, 96], sizes = [32, 32], strides = [1, 1]} : vector<32x192xf32> to vector<32x32xf32>
    %214 = vector.extract_strided_slice %211 {offsets = [0, 128], sizes = [32, 64], strides = [1, 1]} : vector<32x192xf32> to vector<32x64xf32>
    %c1_65 = arith.constant 1 : index
    %c0_66 = arith.constant 0 : index
    %c0_67 = arith.constant 0 : index
    %215 = vector.load %arg6[%c1_65, %c0_66, %c0_67] : memref<2x64x32xf32, #tpu.memory_space<vmem>>, vector<1x64x32xf32>
    %216 = vector.shape_cast %215 : vector<1x64x32xf32> to vector<64x32xf32>
    %c1_68 = arith.constant 1 : index
    %c0_69 = arith.constant 0 : index
    %c0_70 = arith.constant 0 : index
    %217 = vector.load %arg7[%c1_68, %c0_69, %c0_70] : memref<2x8x96xf32, #tpu.memory_space<vmem>>, vector<1x8x96xf32>
    %218 = vector.shape_cast %217 : vector<1x8x96xf32> to vector<8x96xf32>
    %219 = vector.extract_strided_slice %218 {offsets = [0, 0], sizes = [1, 96], strides = [1, 1]} : vector<8x96xf32> to vector<1x96xf32>
    %220 = vector.extract_strided_slice %218 {offsets = [1, 0], sizes = [1, 32], strides = [1, 1]} : vector<8x96xf32> to vector<1x32xf32>
    %221 = vector.extract_strided_slice %218 {offsets = [2, 0], sizes = [1, 64], strides = [1, 1]} : vector<8x96xf32> to vector<1x64xf32>
    %222 = vector.extract_strided_slice %218 {offsets = [3, 0], sizes = [1, 32], strides = [1, 1]} : vector<8x96xf32> to vector<1x32xf32>
    %223 = vector.extract_strided_slice %218 {offsets = [4, 0], sizes = [1, 32], strides = [1, 1]} : vector<8x96xf32> to vector<1x32xf32>
    %224 = vector.extract_strided_slice %218 {offsets = [5, 0], sizes = [1, 32], strides = [1, 1]} : vector<8x96xf32> to vector<1x32xf32>
    %225 = vector.extract_strided_slice %218 {offsets = [6, 0], sizes = [1, 32], strides = [1, 1]} : vector<8x96xf32> to vector<1x32xf32>
    %226 = vector.extract_strided_slice %218 {offsets = [7, 0], sizes = [1, 32], strides = [1, 1]} : vector<8x96xf32> to vector<1x32xf32>
    %cst_71 = arith.constant dense<0.000000e+00> : vector<32x96xf32>
    %227 = tpu.matmul %209, %212, %cst_71 {dimension_numbers = #tpu.dot_dimension_numbers<[1], [0], [0], [1], [0, 0, 1, 1], [], []>} : vector<32x32xf32>, vector<32x96xf32>, vector<32x96xf32> -> vector<32x96xf32>
    %228 = vector.broadcast %219 : vector<1x96xf32> to vector<32x96xf32>
    %229 = arith.addf %227, %228 : vector<32x96xf32>
    %230 = vector.extract_strided_slice %229 {offsets = [0, 0], sizes = [16, 96], strides = [1, 1]} : vector<32x96xf32> to vector<16x96xf32>
    %231 = vector.extract_strided_slice %230 {offsets = [0, 0], sizes = [16, 8], strides = [1, 1]} : vector<16x96xf32> to vector<16x8xf32>
    %232 = vector.extract_strided_slice %230 {offsets = [0, 32], sizes = [16, 8], strides = [1, 1]} : vector<16x96xf32> to vector<16x8xf32>
    %233 = vector.extract_strided_slice %230 {offsets = [0, 64], sizes = [16, 8], strides = [1, 1]} : vector<16x96xf32> to vector<16x8xf32>
    %cst_72 = arith.constant dense<0.000000e+00> : vector<16x16xf32>
    %234 = tpu.matmul %231, %232, %cst_72 {dimension_numbers = #tpu.dot_dimension_numbers<[1], [1], [0], [0], [0, 0, 1, 0], [], []>} : vector<16x8xf32>, vector<16x8xf32>, vector<16x16xf32> -> vector<16x16xf32>
    %cst_73 = arith.constant dense<0xFF800000> : vector<16xf32>
    %235 = vector.multi_reduction <maximumf>, %234, %cst_73 [1] : vector<16x16xf32> to vector<16xf32>
    %236 = vector.shape_cast %235 : vector<16xf32> to vector<16x1xf32>
    %237 = vector.broadcast %236 : vector<16x1xf32> to vector<16x16xf32>
    %238 = arith.subf %234, %237 : vector<16x16xf32>
    %239 = math.exp %238 : vector<16x16xf32>
    %cst_74 = arith.constant dense<0.000000e+00> : vector<16xf32>
    %240 = vector.multi_reduction <add>, %239, %cst_74 [1] : vector<16x16xf32> to vector<16xf32>
    %241 = vector.shape_cast %240 : vector<16xf32> to vector<16x1xf32>
    %242 = tpu.reciprocal %241 {approx = true} : vector<16x1xf32> -> vector<16x1xf32>
    %243 = vector.broadcast %242 : vector<16x1xf32> to vector<16x16xf32>
    %244 = arith.mulf %239, %243 : vector<16x16xf32>
    %cst_75 = arith.constant dense<0.000000e+00> : vector<16x8xf32>
    %245 = tpu.matmul %244, %233, %cst_75 {dimension_numbers = #tpu.dot_dimension_numbers<[1], [0], [0], [1], [0, 0, 1, 1], [], []>} : vector<16x16xf32>, vector<16x8xf32>, vector<16x8xf32> -> vector<16x8xf32>
    %246 = vector.extract_strided_slice %230 {offsets = [0, 8], sizes = [16, 8], strides = [1, 1]} : vector<16x96xf32> to vector<16x8xf32>
    %247 = vector.extract_strided_slice %230 {offsets = [0, 40], sizes = [16, 8], strides = [1, 1]} : vector<16x96xf32> to vector<16x8xf32>
    %248 = vector.extract_strided_slice %230 {offsets = [0, 72], sizes = [16, 8], strides = [1, 1]} : vector<16x96xf32> to vector<16x8xf32>
    %cst_76 = arith.constant dense<0.000000e+00> : vector<16x16xf32>
    %249 = tpu.matmul %246, %247, %cst_76 {dimension_numbers = #tpu.dot_dimension_numbers<[1], [1], [0], [0], [0, 0, 1, 0], [], []>} : vector<16x8xf32>, vector<16x8xf32>, vector<16x16xf32> -> vector<16x16xf32>
    %cst_77 = arith.constant dense<0xFF800000> : vector<16xf32>
    %250 = vector.multi_reduction <maximumf>, %249, %cst_77 [1] : vector<16x16xf32> to vector<16xf32>
    %251 = vector.shape_cast %250 : vector<16xf32> to vector<16x1xf32>
    %252 = vector.broadcast %251 : vector<16x1xf32> to vector<16x16xf32>
    %253 = arith.subf %249, %252 : vector<16x16xf32>
    %254 = math.exp %253 : vector<16x16xf32>
    %cst_78 = arith.constant dense<0.000000e+00> : vector<16xf32>
    %255 = vector.multi_reduction <add>, %254, %cst_78 [1] : vector<16x16xf32> to vector<16xf32>
    %256 = vector.shape_cast %255 : vector<16xf32> to vector<16x1xf32>
    %257 = tpu.reciprocal %256 {approx = true} : vector<16x1xf32> -> vector<16x1xf32>
    %258 = vector.broadcast %257 : vector<16x1xf32> to vector<16x16xf32>
    %259 = arith.mulf %254, %258 : vector<16x16xf32>
    %cst_79 = arith.constant dense<0.000000e+00> : vector<16x8xf32>
    %260 = tpu.matmul %259, %248, %cst_79 {dimension_numbers = #tpu.dot_dimension_numbers<[1], [0], [0], [1], [0, 0, 1, 1], [], []>} : vector<16x16xf32>, vector<16x8xf32>, vector<16x8xf32> -> vector<16x8xf32>
    %261 = vector.extract_strided_slice %230 {offsets = [0, 16], sizes = [16, 8], strides = [1, 1]} : vector<16x96xf32> to vector<16x8xf32>
    %262 = vector.extract_strided_slice %230 {offsets = [0, 48], sizes = [16, 8], strides = [1, 1]} : vector<16x96xf32> to vector<16x8xf32>
    %263 = vector.extract_strided_slice %230 {offsets = [0, 80], sizes = [16, 8], strides = [1, 1]} : vector<16x96xf32> to vector<16x8xf32>
    %cst_80 = arith.constant dense<0.000000e+00> : vector<16x16xf32>
    %264 = tpu.matmul %261, %262, %cst_80 {dimension_numbers = #tpu.dot_dimension_numbers<[1], [1], [0], [0], [0, 0, 1, 0], [], []>} : vector<16x8xf32>, vector<16x8xf32>, vector<16x16xf32> -> vector<16x16xf32>
    %cst_81 = arith.constant dense<0xFF800000> : vector<16xf32>
    %265 = vector.multi_reduction <maximumf>, %264, %cst_81 [1] : vector<16x16xf32> to vector<16xf32>
    %266 = vector.shape_cast %265 : vector<16xf32> to vector<16x1xf32>
    %267 = vector.broadcast %266 : vector<16x1xf32> to vector<16x16xf32>
    %268 = arith.subf %264, %267 : vector<16x16xf32>
    %269 = math.exp %268 : vector<16x16xf32>
    %cst_82 = arith.constant dense<0.000000e+00> : vector<16xf32>
    %270 = vector.multi_reduction <add>, %269, %cst_82 [1] : vector<16x16xf32> to vector<16xf32>
    %271 = vector.shape_cast %270 : vector<16xf32> to vector<16x1xf32>
    %272 = tpu.reciprocal %271 {approx = true} : vector<16x1xf32> -> vector<16x1xf32>
    %273 = vector.broadcast %272 : vector<16x1xf32> to vector<16x16xf32>
    %274 = arith.mulf %269, %273 : vector<16x16xf32>
    %cst_83 = arith.constant dense<0.000000e+00> : vector<16x8xf32>
    %275 = tpu.matmul %274, %263, %cst_83 {dimension_numbers = #tpu.dot_dimension_numbers<[1], [0], [0], [1], [0, 0, 1, 1], [], []>} : vector<16x16xf32>, vector<16x8xf32>, vector<16x8xf32> -> vector<16x8xf32>
    %276 = vector.extract_strided_slice %230 {offsets = [0, 24], sizes = [16, 8], strides = [1, 1]} : vector<16x96xf32> to vector<16x8xf32>
    %277 = vector.extract_strided_slice %230 {offsets = [0, 56], sizes = [16, 8], strides = [1, 1]} : vector<16x96xf32> to vector<16x8xf32>
    %278 = vector.extract_strided_slice %230 {offsets = [0, 88], sizes = [16, 8], strides = [1, 1]} : vector<16x96xf32> to vector<16x8xf32>
    %cst_84 = arith.constant dense<0.000000e+00> : vector<16x16xf32>
    %279 = tpu.matmul %276, %277, %cst_84 {dimension_numbers = #tpu.dot_dimension_numbers<[1], [1], [0], [0], [0, 0, 1, 0], [], []>} : vector<16x8xf32>, vector<16x8xf32>, vector<16x16xf32> -> vector<16x16xf32>
    %cst_85 = arith.constant dense<0xFF800000> : vector<16xf32>
    %280 = vector.multi_reduction <maximumf>, %279, %cst_85 [1] : vector<16x16xf32> to vector<16xf32>
    %281 = vector.shape_cast %280 : vector<16xf32> to vector<16x1xf32>
    %282 = vector.broadcast %281 : vector<16x1xf32> to vector<16x16xf32>
    %283 = arith.subf %279, %282 : vector<16x16xf32>
    %284 = math.exp %283 : vector<16x16xf32>
    %cst_86 = arith.constant dense<0.000000e+00> : vector<16xf32>
    %285 = vector.multi_reduction <add>, %284, %cst_86 [1] : vector<16x16xf32> to vector<16xf32>
    %286 = vector.shape_cast %285 : vector<16xf32> to vector<16x1xf32>
    %287 = tpu.reciprocal %286 {approx = true} : vector<16x1xf32> -> vector<16x1xf32>
    %288 = vector.broadcast %287 : vector<16x1xf32> to vector<16x16xf32>
    %289 = arith.mulf %284, %288 : vector<16x16xf32>
    %cst_87 = arith.constant dense<0.000000e+00> : vector<16x8xf32>
    %290 = tpu.matmul %289, %278, %cst_87 {dimension_numbers = #tpu.dot_dimension_numbers<[1], [0], [0], [1], [0, 0, 1, 1], [], []>} : vector<16x16xf32>, vector<16x8xf32>, vector<16x8xf32> -> vector<16x8xf32>
    %291 = tpu.concatenate %245, %260, %275, %290 in 1 : vector<16x8xf32>, vector<16x8xf32>, vector<16x8xf32>, vector<16x8xf32> -> vector<16x32xf32>
    %292 = vector.extract_strided_slice %229 {offsets = [16, 0], sizes = [16, 96], strides = [1, 1]} : vector<32x96xf32> to vector<16x96xf32>
    %293 = vector.extract_strided_slice %292 {offsets = [0, 0], sizes = [16, 8], strides = [1, 1]} : vector<16x96xf32> to vector<16x8xf32>
    %294 = vector.extract_strided_slice %292 {offsets = [0, 32], sizes = [16, 8], strides = [1, 1]} : vector<16x96xf32> to vector<16x8xf32>
    %295 = vector.extract_strided_slice %292 {offsets = [0, 64], sizes = [16, 8], strides = [1, 1]} : vector<16x96xf32> to vector<16x8xf32>
    %cst_88 = arith.constant dense<0.000000e+00> : vector<16x16xf32>
    %296 = tpu.matmul %293, %294, %cst_88 {dimension_numbers = #tpu.dot_dimension_numbers<[1], [1], [0], [0], [0, 0, 1, 0], [], []>} : vector<16x8xf32>, vector<16x8xf32>, vector<16x16xf32> -> vector<16x16xf32>
    %cst_89 = arith.constant dense<0xFF800000> : vector<16xf32>
    %297 = vector.multi_reduction <maximumf>, %296, %cst_89 [1] : vector<16x16xf32> to vector<16xf32>
    %298 = vector.shape_cast %297 : vector<16xf32> to vector<16x1xf32>
    %299 = vector.broadcast %298 : vector<16x1xf32> to vector<16x16xf32>
    %300 = arith.subf %296, %299 : vector<16x16xf32>
    %301 = math.exp %300 : vector<16x16xf32>
    %cst_90 = arith.constant dense<0.000000e+00> : vector<16xf32>
    %302 = vector.multi_reduction <add>, %301, %cst_90 [1] : vector<16x16xf32> to vector<16xf32>
    %303 = vector.shape_cast %302 : vector<16xf32> to vector<16x1xf32>
    %304 = tpu.reciprocal %303 {approx = true} : vector<16x1xf32> -> vector<16x1xf32>
    %305 = vector.broadcast %304 : vector<16x1xf32> to vector<16x16xf32>
    %306 = arith.mulf %301, %305 : vector<16x16xf32>
    %cst_91 = arith.constant dense<0.000000e+00> : vector<16x8xf32>
    %307 = tpu.matmul %306, %295, %cst_91 {dimension_numbers = #tpu.dot_dimension_numbers<[1], [0], [0], [1], [0, 0, 1, 1], [], []>} : vector<16x16xf32>, vector<16x8xf32>, vector<16x8xf32> -> vector<16x8xf32>
    %308 = vector.extract_strided_slice %292 {offsets = [0, 8], sizes = [16, 8], strides = [1, 1]} : vector<16x96xf32> to vector<16x8xf32>
    %309 = vector.extract_strided_slice %292 {offsets = [0, 40], sizes = [16, 8], strides = [1, 1]} : vector<16x96xf32> to vector<16x8xf32>
    %310 = vector.extract_strided_slice %292 {offsets = [0, 72], sizes = [16, 8], strides = [1, 1]} : vector<16x96xf32> to vector<16x8xf32>
    %cst_92 = arith.constant dense<0.000000e+00> : vector<16x16xf32>
    %311 = tpu.matmul %308, %309, %cst_92 {dimension_numbers = #tpu.dot_dimension_numbers<[1], [1], [0], [0], [0, 0, 1, 0], [], []>} : vector<16x8xf32>, vector<16x8xf32>, vector<16x16xf32> -> vector<16x16xf32>
    %cst_93 = arith.constant dense<0xFF800000> : vector<16xf32>
    %312 = vector.multi_reduction <maximumf>, %311, %cst_93 [1] : vector<16x16xf32> to vector<16xf32>
    %313 = vector.shape_cast %312 : vector<16xf32> to vector<16x1xf32>
    %314 = vector.broadcast %313 : vector<16x1xf32> to vector<16x16xf32>
    %315 = arith.subf %311, %314 : vector<16x16xf32>
    %316 = math.exp %315 : vector<16x16xf32>
    %cst_94 = arith.constant dense<0.000000e+00> : vector<16xf32>
    %317 = vector.multi_reduction <add>, %316, %cst_94 [1] : vector<16x16xf32> to vector<16xf32>
    %318 = vector.shape_cast %317 : vector<16xf32> to vector<16x1xf32>
    %319 = tpu.reciprocal %318 {approx = true} : vector<16x1xf32> -> vector<16x1xf32>
    %320 = vector.broadcast %319 : vector<16x1xf32> to vector<16x16xf32>
    %321 = arith.mulf %316, %320 : vector<16x16xf32>
    %cst_95 = arith.constant dense<0.000000e+00> : vector<16x8xf32>
    %322 = tpu.matmul %321, %310, %cst_95 {dimension_numbers = #tpu.dot_dimension_numbers<[1], [0], [0], [1], [0, 0, 1, 1], [], []>} : vector<16x16xf32>, vector<16x8xf32>, vector<16x8xf32> -> vector<16x8xf32>
    %323 = vector.extract_strided_slice %292 {offsets = [0, 16], sizes = [16, 8], strides = [1, 1]} : vector<16x96xf32> to vector<16x8xf32>
    %324 = vector.extract_strided_slice %292 {offsets = [0, 48], sizes = [16, 8], strides = [1, 1]} : vector<16x96xf32> to vector<16x8xf32>
    %325 = vector.extract_strided_slice %292 {offsets = [0, 80], sizes = [16, 8], strides = [1, 1]} : vector<16x96xf32> to vector<16x8xf32>
    %cst_96 = arith.constant dense<0.000000e+00> : vector<16x16xf32>
    %326 = tpu.matmul %323, %324, %cst_96 {dimension_numbers = #tpu.dot_dimension_numbers<[1], [1], [0], [0], [0, 0, 1, 0], [], []>} : vector<16x8xf32>, vector<16x8xf32>, vector<16x16xf32> -> vector<16x16xf32>
    %cst_97 = arith.constant dense<0xFF800000> : vector<16xf32>
    %327 = vector.multi_reduction <maximumf>, %326, %cst_97 [1] : vector<16x16xf32> to vector<16xf32>
    %328 = vector.shape_cast %327 : vector<16xf32> to vector<16x1xf32>
    %329 = vector.broadcast %328 : vector<16x1xf32> to vector<16x16xf32>
    %330 = arith.subf %326, %329 : vector<16x16xf32>
    %331 = math.exp %330 : vector<16x16xf32>
    %cst_98 = arith.constant dense<0.000000e+00> : vector<16xf32>
    %332 = vector.multi_reduction <add>, %331, %cst_98 [1] : vector<16x16xf32> to vector<16xf32>
    %333 = vector.shape_cast %332 : vector<16xf32> to vector<16x1xf32>
    %334 = tpu.reciprocal %333 {approx = true} : vector<16x1xf32> -> vector<16x1xf32>
    %335 = vector.broadcast %334 : vector<16x1xf32> to vector<16x16xf32>
    %336 = arith.mulf %331, %335 : vector<16x16xf32>
    %cst_99 = arith.constant dense<0.000000e+00> : vector<16x8xf32>
    %337 = tpu.matmul %336, %325, %cst_99 {dimension_numbers = #tpu.dot_dimension_numbers<[1], [0], [0], [1], [0, 0, 1, 1], [], []>} : vector<16x16xf32>, vector<16x8xf32>, vector<16x8xf32> -> vector<16x8xf32>
    %338 = vector.extract_strided_slice %292 {offsets = [0, 24], sizes = [16, 8], strides = [1, 1]} : vector<16x96xf32> to vector<16x8xf32>
    %339 = vector.extract_strided_slice %292 {offsets = [0, 56], sizes = [16, 8], strides = [1, 1]} : vector<16x96xf32> to vector<16x8xf32>
    %340 = vector.extract_strided_slice %292 {offsets = [0, 88], sizes = [16, 8], strides = [1, 1]} : vector<16x96xf32> to vector<16x8xf32>
    %cst_100 = arith.constant dense<0.000000e+00> : vector<16x16xf32>
    %341 = tpu.matmul %338, %339, %cst_100 {dimension_numbers = #tpu.dot_dimension_numbers<[1], [1], [0], [0], [0, 0, 1, 0], [], []>} : vector<16x8xf32>, vector<16x8xf32>, vector<16x16xf32> -> vector<16x16xf32>
    %cst_101 = arith.constant dense<0xFF800000> : vector<16xf32>
    %342 = vector.multi_reduction <maximumf>, %341, %cst_101 [1] : vector<16x16xf32> to vector<16xf32>
    %343 = vector.shape_cast %342 : vector<16xf32> to vector<16x1xf32>
    %344 = vector.broadcast %343 : vector<16x1xf32> to vector<16x16xf32>
    %345 = arith.subf %341, %344 : vector<16x16xf32>
    %346 = math.exp %345 : vector<16x16xf32>
    %cst_102 = arith.constant dense<0.000000e+00> : vector<16xf32>
    %347 = vector.multi_reduction <add>, %346, %cst_102 [1] : vector<16x16xf32> to vector<16xf32>
    %348 = vector.shape_cast %347 : vector<16xf32> to vector<16x1xf32>
    %349 = tpu.reciprocal %348 {approx = true} : vector<16x1xf32> -> vector<16x1xf32>
    %350 = vector.broadcast %349 : vector<16x1xf32> to vector<16x16xf32>
    %351 = arith.mulf %346, %350 : vector<16x16xf32>
    %cst_103 = arith.constant dense<0.000000e+00> : vector<16x8xf32>
    %352 = tpu.matmul %351, %340, %cst_103 {dimension_numbers = #tpu.dot_dimension_numbers<[1], [0], [0], [1], [0, 0, 1, 1], [], []>} : vector<16x16xf32>, vector<16x8xf32>, vector<16x8xf32> -> vector<16x8xf32>
    %353 = tpu.concatenate %307, %322, %337, %352 in 1 : vector<16x8xf32>, vector<16x8xf32>, vector<16x8xf32>, vector<16x8xf32> -> vector<16x32xf32>
    %354 = tpu.concatenate %291, %353 in 0 : vector<16x32xf32>, vector<16x32xf32> -> vector<32x32xf32>
    %cst_104 = arith.constant dense<0.000000e+00> : vector<32x32xf32>
    %355 = tpu.matmul %354, %213, %cst_104 {dimension_numbers = #tpu.dot_dimension_numbers<[1], [0], [0], [1], [0, 0, 1, 1], [], []>} : vector<32x32xf32>, vector<32x32xf32>, vector<32x32xf32> -> vector<32x32xf32>
    %356 = vector.broadcast %220 : vector<1x32xf32> to vector<32x32xf32>
    %357 = arith.addf %355, %356 : vector<32x32xf32>
    %358 = arith.addf %357, %209 : vector<32x32xf32>
    %cst_105 = arith.constant dense<0.000000e+00> : vector<32xf32>
    %359 = vector.multi_reduction <add>, %358, %cst_105 [1] : vector<32x32xf32> to vector<32xf32>
    %360 = vector.shape_cast %359 : vector<32xf32> to vector<32x1xf32>
    %cst_106 = arith.constant 3.200000e+01 : f32
    %361 = vector.broadcast %cst_106 : f32 to vector<32x1xf32>
    %362 = arith.divf %360, %361 : vector<32x1xf32>
    %363 = vector.broadcast %362 : vector<32x1xf32> to vector<32x32xf32>
    %364 = arith.subf %358, %363 : vector<32x32xf32>
    %365 = arith.mulf %364, %364 : vector<32x32xf32>
    %cst_107 = arith.constant dense<0.000000e+00> : vector<32xf32>
    %366 = vector.multi_reduction <add>, %365, %cst_107 [1] : vector<32x32xf32> to vector<32xf32>
    %367 = vector.shape_cast %366 : vector<32xf32> to vector<32x1xf32>
    %cst_108 = arith.constant 3.200000e+01 : f32
    %368 = vector.broadcast %cst_108 : f32 to vector<32x1xf32>
    %369 = arith.divf %367, %368 : vector<32x1xf32>
    %cst_109 = arith.constant 9.99999996E-13 : f32
    %370 = vector.broadcast %cst_109 : f32 to vector<32x1xf32>
    %371 = arith.addf %369, %370 : vector<32x1xf32>
    %372 = math.rsqrt %371 : vector<32x1xf32>
    %373 = vector.broadcast %372 : vector<32x1xf32> to vector<32x32xf32>
    %374 = arith.mulf %364, %373 : vector<32x32xf32>
    %375 = vector.broadcast %223 : vector<1x32xf32> to vector<32x32xf32>
    %376 = arith.mulf %374, %375 : vector<32x32xf32>
    %377 = vector.broadcast %224 : vector<1x32xf32> to vector<32x32xf32>
    %378 = arith.addf %376, %377 : vector<32x32xf32>
    %cst_110 = arith.constant dense<0.000000e+00> : vector<32x64xf32>
    %379 = tpu.matmul %378, %214, %cst_110 {dimension_numbers = #tpu.dot_dimension_numbers<[1], [0], [0], [1], [0, 0, 1, 1], [], []>} : vector<32x32xf32>, vector<32x64xf32>, vector<32x64xf32> -> vector<32x64xf32>
    %380 = vector.broadcast %221 : vector<1x64xf32> to vector<32x64xf32>
    %381 = arith.addf %379, %380 : vector<32x64xf32>
    %cst_111 = arith.constant 5.000000e-01 : f32
    %382 = vector.broadcast %cst_111 : f32 to vector<32x64xf32>
    %383 = arith.mulf %382, %381 : vector<32x64xf32>
    %cst_112 = arith.constant 0.707106769 : f32
    %384 = vector.broadcast %cst_112 : f32 to vector<32x64xf32>
    %385 = arith.mulf %381, %384 : vector<32x64xf32>
    %386 = math.erf %385 : vector<32x64xf32>
    %cst_113 = arith.constant 1.000000e+00 : f32
    %387 = vector.broadcast %cst_113 : f32 to vector<32x64xf32>
    %388 = arith.addf %387, %386 : vector<32x64xf32>
    %389 = arith.mulf %383, %388 : vector<32x64xf32>
    %cst_114 = arith.constant dense<0.000000e+00> : vector<32x32xf32>
    %390 = tpu.matmul %389, %216, %cst_114 {dimension_numbers = #tpu.dot_dimension_numbers<[1], [0], [0], [1], [0, 0, 1, 1], [], []>} : vector<32x64xf32>, vector<64x32xf32>, vector<32x32xf32> -> vector<32x32xf32>
    %391 = vector.broadcast %222 : vector<1x32xf32> to vector<32x32xf32>
    %392 = arith.addf %390, %391 : vector<32x32xf32>
    %393 = arith.addf %392, %378 : vector<32x32xf32>
    %cst_115 = arith.constant dense<0.000000e+00> : vector<32xf32>
    %394 = vector.multi_reduction <add>, %393, %cst_115 [1] : vector<32x32xf32> to vector<32xf32>
    %395 = vector.shape_cast %394 : vector<32xf32> to vector<32x1xf32>
    %cst_116 = arith.constant 3.200000e+01 : f32
    %396 = vector.broadcast %cst_116 : f32 to vector<32x1xf32>
    %397 = arith.divf %395, %396 : vector<32x1xf32>
    %398 = vector.broadcast %397 : vector<32x1xf32> to vector<32x32xf32>
    %399 = arith.subf %393, %398 : vector<32x32xf32>
    %400 = arith.mulf %399, %399 : vector<32x32xf32>
    %cst_117 = arith.constant dense<0.000000e+00> : vector<32xf32>
    %401 = vector.multi_reduction <add>, %400, %cst_117 [1] : vector<32x32xf32> to vector<32xf32>
    %402 = vector.shape_cast %401 : vector<32xf32> to vector<32x1xf32>
    %cst_118 = arith.constant 3.200000e+01 : f32
    %403 = vector.broadcast %cst_118 : f32 to vector<32x1xf32>
    %404 = arith.divf %402, %403 : vector<32x1xf32>
    %cst_119 = arith.constant 9.99999996E-13 : f32
    %405 = vector.broadcast %cst_119 : f32 to vector<32x1xf32>
    %406 = arith.addf %404, %405 : vector<32x1xf32>
    %407 = math.rsqrt %406 : vector<32x1xf32>
    %408 = vector.broadcast %407 : vector<32x1xf32> to vector<32x32xf32>
    %409 = arith.mulf %399, %408 : vector<32x32xf32>
    %410 = vector.broadcast %225 : vector<1x32xf32> to vector<32x32xf32>
    %411 = arith.mulf %409, %410 : vector<32x32xf32>
    %412 = vector.broadcast %226 : vector<1x32xf32> to vector<32x32xf32>
    %413 = arith.addf %411, %412 : vector<32x32xf32>
    %c32 = arith.constant 32 : index
    %c0_120 = arith.constant 0 : index
    %414 = vector.load %arg3[%c32, %c0_120] : memref<64x32xf32, #tpu.memory_space<vmem>>, vector<32x32xf32>
    %c1_121 = arith.constant 1 : index
    %c0_122 = arith.constant 0 : index
    %415 = vector.load %arg4[%c1_121, %c0_122] : memref<2x32xf32, #tpu.memory_space<vmem>>, vector<1x4xf32>
    %cst_123 = arith.constant dense<0.000000e+00> : vector<32x32xf32>
    %416 = tpu.matmul %413, %414, %cst_123 {dimension_numbers = #tpu.dot_dimension_numbers<[1], [0], [0], [1], [0, 0, 1, 1], [], []>} : vector<32x32xf32>, vector<32x32xf32>, vector<32x32xf32> -> vector<32x32xf32>
    %cst_124 = arith.constant 0.000000e+00 : f32
    %417 = vector.broadcast %cst_124 : f32 to vector<1x1xf32>
    %418 = vector.extract_strided_slice %416 {offsets = [0, 0], sizes = [8, 4], strides = [1, 1]} : vector<32x32xf32> to vector<8x4xf32>
    %419 = vector.broadcast %415 : vector<1x4xf32> to vector<8x4xf32>
    %420 = arith.addf %418, %419 : vector<8x4xf32>
    %c0_125 = arith.constant 0 : index
    %c0_126 = arith.constant 0 : index
    %c0_127 = arith.constant 0 : index
    %421 = vector.load %arg8[%c0_125, %c0_126, %c0_127] : memref<2x8x4xf32, #tpu.memory_space<vmem>>, vector<1x8x4xf32>
    %422 = vector.shape_cast %421 : vector<1x8x4xf32> to vector<8x4xf32>
    %423 = vector.shape_cast %420 : vector<8x4xf32> to vector<1x8x4xf32>
    tpu.vector_store %arg8[%c0_125, %c0_126, %c0_127], %423 {strides = array<i32>} : memref<2x8x4xf32, #tpu.memory_space<vmem>>, vector<1x8x4xf32>,
    %c0_128 = arith.constant 0 : index
    %c0_129 = arith.constant 0 : index
    %c0_130 = arith.constant 0 : index
    %424 = vector.load %arg2[%c0_128, %c0_129, %c0_130] : memref<2x8x4xf32, #tpu.memory_space<vmem>>, vector<1x8x4xf32>
    %425 = vector.shape_cast %424 : vector<1x8x4xf32> to vector<8x4xf32>
    %426 = arith.subf %420, %425 : vector<8x4xf32>
    %427 = arith.mulf %426, %426 : vector<8x4xf32>
    %428 = vector.shape_cast %427 : vector<8x4xf32> to vector<1x8x4xf32>
    %cst_131 = arith.constant dense<0.000000e+00> : vector<1xf32>
    %429 = vector.multi_reduction <add>, %428, %cst_131 [1, 2] : vector<1x8x4xf32> to vector<1xf32>
    %430 = vector.shape_cast %429 : vector<1xf32> to vector<1x1x1xf32>
    %431 = vector.extract %430[0, 0, 0] : f32 from vector<1x1x1xf32>
    %432 = vector.broadcast %431 : f32 to vector<1x1xf32>
    %433 = arith.addf %417, %432 : vector<1x1xf32>
    %434 = vector.extract_strided_slice %416 {offsets = [16, 0], sizes = [8, 4], strides = [1, 1]} : vector<32x32xf32> to vector<8x4xf32>
    %435 = vector.broadcast %415 : vector<1x4xf32> to vector<8x4xf32>
    %436 = arith.addf %434, %435 : vector<8x4xf32>
    %c1_132 = arith.constant 1 : index
    %c0_133 = arith.constant 0 : index
    %c0_134 = arith.constant 0 : index
    %437 = vector.load %arg8[%c1_132, %c0_133, %c0_134] : memref<2x8x4xf32, #tpu.memory_space<vmem>>, vector<1x8x4xf32>
    %438 = vector.shape_cast %437 : vector<1x8x4xf32> to vector<8x4xf32>
    %439 = vector.shape_cast %436 : vector<8x4xf32> to vector<1x8x4xf32>
    tpu.vector_store %arg8[%c1_132, %c0_133, %c0_134], %439 {strides = array<i32>} : memref<2x8x4xf32, #tpu.memory_space<vmem>>, vector<1x8x4xf32>,
    %c1_135 = arith.constant 1 : index
    %c0_136 = arith.constant 0 : index
    %c0_137 = arith.constant 0 : index
    %440 = vector.load %arg2[%c1_135, %c0_136, %c0_137] : memref<2x8x4xf32, #tpu.memory_space<vmem>>, vector<1x8x4xf32>
    %441 = vector.shape_cast %440 : vector<1x8x4xf32> to vector<8x4xf32>
    %442 = arith.subf %436, %441 : vector<8x4xf32>
    %443 = arith.mulf %442, %442 : vector<8x4xf32>
    %444 = vector.shape_cast %443 : vector<8x4xf32> to vector<1x8x4xf32>
    %cst_138 = arith.constant dense<0.000000e+00> : vector<1xf32>
    %445 = vector.multi_reduction <add>, %444, %cst_138 [1, 2] : vector<1x8x4xf32> to vector<1xf32>
    %446 = vector.shape_cast %445 : vector<1xf32> to vector<1x1x1xf32>
    %447 = vector.extract %446[0, 0, 0] : f32 from vector<1x1x1xf32>
    %448 = vector.broadcast %447 : f32 to vector<1x1xf32>
    %449 = arith.addf %433, %448 : vector<1x1xf32>
    %cst_139 = arith.constant 1.562500e-02 : f32
    %450 = vector.broadcast %cst_139 : f32 to vector<1x1xf32>
    %451 = arith.mulf %449, %450 : vector<1x1xf32>
    %c0_140 = arith.constant 0 : index
    %c0_141 = arith.constant 0 : index
    %452 = vector.load %arg9[%c0_140, %c0_141] : memref<1x1xf32, #tpu.memory_space<vmem>>, vector<1x1xf32>
    tpu.vector_store %arg9[%c0_140, %c0_141], %451 {strides = array<i32>} : memref<1x1xf32, #tpu.memory_space<vmem>>, vector<1x1xf32>,
    return
  }
  func.func @transform_0(%arg0: i32) -> (i32, i32) {
    %c0_i32 = arith.constant 0 : i32
    %c0_i32_0 = arith.constant 0 : i32
    %c0_i32_1 = arith.constant 0 : i32
    return %c0_i32, %c0_i32_0 : i32, i32
  }
  func.func @transform_1(%arg0: i32) -> (i32, i32, i32) {
    %c0_i32 = arith.constant 0 : i32
    %c0_i32_0 = arith.constant 0 : i32
    %c0_i32_1 = arith.constant 0 : i32
    %c0_i32_2 = arith.constant 0 : i32
    return %c0_i32, %c0_i32_0, %c0_i32_1 : i32, i32, i32
  }
  func.func @transform_2(%arg0: i32) -> (i32, i32) {
    %c0_i32 = arith.constant 0 : i32
    %c0_i32_0 = arith.constant 0 : i32
    %c0_i32_1 = arith.constant 0 : i32
    return %c0_i32, %c0_i32_0 : i32, i32
  }
  func.func @transform_3(%arg0: i32) -> (i32, i32) {
    %c0_i32 = arith.constant 0 : i32
    %c0_i32_0 = arith.constant 0 : i32
    %c0_i32_1 = arith.constant 0 : i32
    return %c0_i32, %c0_i32_0 : i32, i32
  }
  func.func @transform_4(%arg0: i32) -> (i32, i32, i32) {
    %c0_i32 = arith.constant 0 : i32
    %c0_i32_0 = arith.constant 0 : i32
    %c0_i32_1 = arith.constant 0 : i32
    %c0_i32_2 = arith.constant 0 : i32
    return %c0_i32, %c0_i32_0, %c0_i32_1 : i32, i32, i32
  }
  func.func @transform_5(%arg0: i32) -> (i32, i32, i32) {
    %c0_i32 = arith.constant 0 : i32
    %c0_i32_0 = arith.constant 0 : i32
    %c0_i32_1 = arith.constant 0 : i32
    %c0_i32_2 = arith.constant 0 : i32
    return %c0_i32, %c0_i32_0, %c0_i32_1 : i32, i32, i32
  }
  func.func @transform_6(%arg0: i32) -> (i32, i32, i32) {
    %c0_i32 = arith.constant 0 : i32
    %c0_i32_0 = arith.constant 0 : i32
    %c0_i32_1 = arith.constant 0 : i32
    %c0_i32_2 = arith.constant 0 : i32
    return %c0_i32, %c0_i32_0, %c0_i32_1 : i32, i32, i32
  }
  func.func @transform_7(%arg0: i32) -> (i32, i32, i32) {
    %c0_i32 = arith.constant 0 : i32
    %c0_i32_0 = arith.constant 0 : i32
    %c0_i32_1 = arith.constant 0 : i32
    %c0_i32_2 = arith.constant 0 : i32
    return %c0_i32, %c0_i32_0, %c0_i32_1 : i32, i32, i32
  }
  func.func @transform_8(%arg0: i32) -> (i32, i32) {
    %c0_i32 = arith.constant 0 : i32
    %c0_i32_0 = arith.constant 0 : i32
    %c0_i32_1 = arith.constant 0 : i32
    return %c0_i32, %c0_i32_0 : i32, i32
  }
}

</mosaic_0001>

<llo_original>
// kernel: _lambda_.1
$region0: #{_lambda_.1}
  #allocation0 [shape = 'u32[]', space=smem, size = 0x4, offset = 0x4, fixed_abs, tag = 'smem constant byte address 0x4 - core index']
  #allocation1 [shape = 'u32[144,128]{1,0:T(1,128)}', space=vmem, size = 0x12000, scoped, tag = 'internal scratch']
  %s0 = inlined_call_operand.vmem [shape: f32[32,32], index: 0, kind: input, shape index: {}]
  %s1 = inlined_call_operand.vmem [shape: f32[2,8,4], index: 1, kind: input, shape index: {}]
  %s2 = inlined_call_operand.vmem [shape: f32[64,32], index: 2, kind: input, shape index: {}]
  %s3 = inlined_call_operand.vmem [shape: f32[2,32], index: 3, kind: input, shape index: {}]
  %s4 = inlined_call_operand.vmem [shape: f32[2,32,192], index: 4, kind: input, shape index: {}]
  %s5 = inlined_call_operand.vmem [shape: f32[2,64,32], index: 5, kind: input, shape index: {}]
  %s6 = inlined_call_operand.vmem [shape: f32[2,8,96], index: 6, kind: input, shape index: {}]
  %s7 = inlined_call_operand.vmem [shape: f32[2,8,4], index: 7, kind: output, shape index: {0}]
  %s8 = inlined_call_operand.hbm [shape: f32[1,1], index: 8, kind: output, shape index: {1}]
  %9 = xla_tuple %s7, %s8
  %s10 = sld [smem:[#allocation0]]
  $region46: #{_lambda_.1} parent=0
    _
  %s12 = ssub.s32 1, %s10
  %s13 = scalar_select 0, %s12, %s10
  $region1: #{_lambda_.1} parent=0
    #allocation2 [shape = 'u8[512]{0}', space=vmem, size = 0x400, scoped, tag = 'output window, operand 1, single buffered']
    #allocation3 [shape = 's32[1]{0}', space=sflag, size = 0x4, scoped, tag = 'scoped memory for _lambda_.1']
    %14 = vsyncpa [#allocation3], 0
    // Predicated region
    $region2: #{_lambda_.1} parent=1 // pred_check
      _
    $region3: #{_lambda_.1} parent=1 // pred_check_branch
      %16 = sbr.rel (0) target = $region5
    $region4: #{_lambda_.1} parent=1 // pred_region
      _
    $region5: #{_lambda_.1} parent=1 // pred_fallthru
      _
    // Predicated region
    $region6: #{_lambda_.1} parent=1 // pred_check
      _
    $region7: #{_lambda_.1} parent=1 // pred_check_branch
      %18 = sbr.rel (0) target = $region9
    $region8: #{_lambda_.1} parent=1 // pred_region
      _
    $region9: #{_lambda_.1} parent=1 // pred_fallthru
      _
    // Predicated region
    $region10: #{_lambda_.1} parent=1 // pred_check
      _
    $region11: #{_lambda_.1} parent=1 // pred_check_branch
      %20 = sbr.rel (0) target = $region13
    $region12: #{_lambda_.1} parent=1 // pred_region
      _
    $region13: #{_lambda_.1} parent=1 // pred_fallthru
      _
    // Predicated region
    $region14: #{_lambda_.1} parent=1 // pred_check
      _
    $region15: #{_lambda_.1} parent=1 // pred_check_branch
      %22 = sbr.rel (0) target = $region17
    $region16: #{_lambda_.1} parent=1 // pred_region
      _
    $region17: #{_lambda_.1} parent=1 // pred_fallthru
      _
    // Predicated region
    $region18: #{_lambda_.1} parent=1 // pred_check
      _
    $region19: #{_lambda_.1} parent=1 // pred_check_branch
      %24 = sbr.rel (0) target = $region21
    $region20: #{_lambda_.1} parent=1 // pred_region
      _
    $region21: #{_lambda_.1} parent=1 // pred_fallthru
      _
    // Predicated region
    $region22: #{_lambda_.1} parent=1 // pred_check
      _
    $region23: #{_lambda_.1} parent=1 // pred_check_branch
      %26 = sbr.rel (0) target = $region25
    $region24: #{_lambda_.1} parent=1 // pred_region
      _
    $region25: #{_lambda_.1} parent=1 // pred_fallthru
      _
    // Predicated region
    $region26: #{_lambda_.1} parent=1 // pred_check
      _
    $region27: #{_lambda_.1} parent=1 // pred_check_branch
      %28 = sbr.rel (0) target = $region29
    $region28: #{_lambda_.1} parent=1 // pred_region
      _
    $region29: #{_lambda_.1} parent=1 // pred_fallthru
      _
    %v29 = vld [vmem:[%s0] sm:$0xff]
    %v30 = vld [vmem:[%s0 + $0x8] sm:$0xff]
    %v31 = vld [vmem:[%s0 + $0x10] sm:$0xff]
    %v32 = vld [vmem:[%s0 + $0x18] sm:$0xff]
    %v33 = vld [vmem:[%s2] sm:$0xff]
    %v34 = vld [vmem:[%s2 + $0x8] sm:$0xff]
    %v35 = vld [vmem:[%s2 + $0x10] sm:$0xff]
    %v36 = vld [vmem:[%s2 + $0x18] sm:$0xff]
    %v37 = vld [vmem:[%s3] sm:$0x1]
    %v38 = vlaneseq
    %v39 = vshrl.u32 %v38, 7
    %v40 = vsub.s32 0, %v39
    %v41 = vrot.slane %v37, %v40
    %vm42 = vcmask 261120
    %v44 = vsel %vm42, %v29, 0
    %v47 = vsel %vm42, %v30, 0
    %v50 = vsel %vm42, %v31, 0
    %v53 = vsel %vm42, %v32, 0
    %55 = vmatprep.subr.mxu0 0.0
    %56 = vmatpush1.msra.mxu0 %v33
    %57 = vmatprep.subr.mxu0 0.0
    %58 = vmatpush1.msra.mxu0 %v34
    %59 = vmatprep.subr.mxu0 0.0
    %60 = vmatpush1.msra.mxu0 %v35
    %61 = vmatprep.subr.mxu0 0.0
    %62 = vmatpush1.msra.mxu0 %v36
    %63 = vmatprep.subr.mxu0 0.0
    %64 = vmatpush1.msra.mxu0 0.0
    %65 = vmatprep.subr.mxu0 0.0
    %66 = vmatpush1.msra.mxu0 0.0
    %67 = vmatprep.subr.mxu0 0.0
    %68 = vmatpush1.msra.mxu0 0.0
    %69 = vmatprep.subr.mxu0 0.0
    %70 = vmatpush1.msra.mxu0 0.0
    %71 = vmatprep.subr.mxu0 0.0
    %72 = vmatpush1.msra.mxu0 0.0
    %73 = vmatprep.subr.mxu0 0.0
    %74 = vmatpush1.msra.mxu0 0.0
    %75 = vmatprep.subr.mxu0 0.0
    %76 = vmatpush1.msra.mxu0 0.0
    %77 = vmatprep.subr.mxu0 0.0
    %78 = vmatpush1.msra.mxu0 0.0
    %79 = vmatprep.subr.mxu0 0.0
    %80 = vmatpush1.msra.mxu0 0.0
    %81 = vmatprep.subr.mxu0 0.0
    %82 = vmatpush1.msra.mxu0 0.0
    %83 = vmatprep.subr.mxu0 0.0
    %84 = vmatpush1.msra.mxu0 0.0
    %85 = vmatprep.subr.mxu0 0.0
    %86 = vmatpush1.msra.mxu0 0.0
    %87 = vmatprep.subr.mxu0 0.0
    %88 = vmatpush1.msra.mxu0 0.0
    %89 = vmatprep.subr.mxu0 0.0
    %90 = vmatpush1.msra.mxu0 0.0
    %91 = vmatprep.subr.mxu0 0.0
    %92 = vmatpush1.msra.mxu0 0.0
    %93 = vmatprep.subr.mxu0 0.0
    %94 = vmatpush1.msra.mxu0 0.0
    %95 = vmatprep.subr.mxu0 0.0
    %96 = vmatpush1.msra.mxu0 0.0
    %97 = vmatprep.subr.mxu0 0.0
    %98 = vmatpush1.msra.mxu0 0.0
    %99 = vmatprep.subr.mxu0 0.0
    %100 = vmatpush1.msra.mxu0 0.0
    %101 = vmatprep.subr.mxu0 0.0
    %102 = vmatpush1.msra.mxu0 0.0
    %103 = vmatprep.subr.mxu0 0.0
    %104 = vmatpush1.msra.mxu0 0.0
    %105 = vmatprep.subr.mxu0 0.0
    %106 = vmatpush1.msra.mxu0 0.0
    %107 = vmatprep.subr.mxu0 0.0
    %108 = vmatpush1.msra.mxu0 0.0
    %109 = vmatprep.subr.mxu0 0.0
    %110 = vmatpush1.msra.mxu0 0.0
    %111 = vmatprep.subr.mxu0 0.0
    %112 = vmatpush1.msra.mxu0 0.0
    %113 = vmatprep.subr.mxu0 0.0
    %114 = vmatpush1.msra.mxu0 0.0
    %115 = vmatprep.subr.mxu0 0.0
    %116 = vmatpush1.msra.mxu0 0.0
    %117 = vmatprep.subr.mxu0 0.0
    %118 = vmatpush1.msra.mxu0 0.0
    %119 = vmatprep.mubr.f32.mxu0 0.0
    %120 = vmatmul.mubr.f32.gmra.mrb[0].mxu0 %v44
    %v121 = vpop.f32.mrb[0].mxu0
    %v122 = vadd.f32 %v41, %v121
    %v123 = vpop.f32.mrb[0].mxu0
    %124 = vmatprep.mubr.f32.mxu0 0.0
    %125 = vmatmul.mubr.f32.gmra.mrb[0].mxu0 %v47
    %v126 = vpop.f32.mrb[0].mxu0
    %v127 = vadd.f32 %v41, %v126
    %v128 = vpop.f32.mrb[0].mxu0
    %129 = vmatprep.mubr.f32.mxu0 0.0
    %130 = vmatmul.mubr.f32.gmra.mrb[0].mxu0 %v50
    %v131 = vpop.f32.mrb[0].mxu0
    %v132 = vadd.f32 %v41, %v131
    %v133 = vpop.f32.mrb[0].mxu0
    %134 = vmatprep.mubr.f32.mxu0 0.0
    %135 = vmatmul.mubr.f32.gmra.mrb[0].mxu0 %v53
    %v136 = vpop.f32.mrb[0].mxu0
    %v137 = vadd.f32 %v41, %v136
    %v138 = vpop.f32.mrb[0].mxu0
    %139 = vdwg.mxu0
    %v140 = vld [vmem:[%s4] sm:$0xff]
    %v141 = vld [vmem:[%s4 + $0x8] sm:$0xff]
    %v142 = vld [vmem:[%s4 + $0x10] sm:$0xff]
    %v143 = vld [vmem:[%s4 + $0x18] sm:$0xff]
    %v144 = vld [vmem:[%s4 + $0x20] sm:$0xff]
    %v145 = vld [vmem:[%s4 + $0x28] sm:$0xff]
    %v146 = vld [vmem:[%s4 + $0x30] sm:$0xff]
    %v147 = vld [vmem:[%s4 + $0x38] sm:$0xff]
    %v148 = vld [vmem:[%s5] sm:$0xff]
    %v149 = vld [vmem:[%s5 + $0x8] sm:$0xff]
    %v150 = vld [vmem:[%s5 + $0x10] sm:$0xff]
    %v151 = vld [vmem:[%s5 + $0x18] sm:$0xff]
    %v152 = vld [vmem:[%s5 + $0x20] sm:$0xff]
    %v153 = vld [vmem:[%s5 + $0x28] sm:$0xff]
    %v154 = vld [vmem:[%s5 + $0x30] sm:$0xff]
    %v155 = vld [vmem:[%s5 + $0x38] sm:$0xff]
    %v156 = vld [vmem:[%s6] sm:$0xff]
    %v157 = vlaneseq
    %v158 = vshrl.u32 %v157, 7
    %v159 = vsub.s32 0, %v158
    %v160 = vrot.slane %v156, %v159
    %v162 = vsel %vm42, %v122, 0
    %v165 = vsel %vm42, %v127, 0
    %v168 = vsel %vm42, %v132, 0
    %v171 = vsel %vm42, %v137, 0
    %173 = vmatprep.subr.mxu0 0.0
    %174 = vmatpush1.msra.mxu0 %v140
    %175 = vmatprep.subr.mxu0 0.0
    %176 = vmatpush1.msra.mxu0 %v142
    %177 = vmatprep.subr.mxu0 0.0
    %178 = vmatpush1.msra.mxu0 %v144
    %179 = vmatprep.subr.mxu0 0.0
    %180 = vmatpush1.msra.mxu0 %v146
    %181 = vmatprep.subr.mxu0 0.0
    %182 = vmatpush1.msra.mxu0 0.0
    %183 = vmatprep.subr.mxu0 0.0
    %184 = vmatpush1.msra.mxu0 0.0
    %185 = vmatprep.subr.mxu0 0.0
    %186 = vmatpush1.msra.mxu0 0.0
    %187 = vmatprep.subr.mxu0 0.0
    %188 = vmatpush1.msra.mxu0 0.0
    %189 = vmatprep.subr.mxu0 0.0
    %190 = vmatpush1.msra.mxu0 0.0
    %191 = vmatprep.subr.mxu0 0.0
    %192 = vmatpush1.msra.mxu0 0.0
    %193 = vmatprep.subr.mxu0 0.0
    %194 = vmatpush1.msra.mxu0 0.0
    %195 = vmatprep.subr.mxu0 0.0
    %196 = vmatpush1.msra.mxu0 0.0
    %197 = vmatprep.subr.mxu0 0.0
    %198 = vmatpush1.msra.mxu0 0.0
    %199 = vmatprep.subr.mxu0 0.0
    %200 = vmatpush1.msra.mxu0 0.0
    %201 = vmatprep.subr.mxu0 0.0
    %202 = vmatpush1.msra.mxu0 0.0
    %203 = vmatprep.subr.mxu0 0.0
    %204 = vmatpush1.msra.mxu0 0.0
    %205 = vmatprep.subr.mxu0 0.0
    %206 = vmatpush1.msra.mxu0 0.0
    %207 = vmatprep.subr.mxu0 0.0
    %208 = vmatpush1.msra.mxu0 0.0
    %209 = vmatprep.subr.mxu0 0.0
    %210 = vmatpush1.msra.mxu0 0.0
    %211 = vmatprep.subr.mxu0 0.0
    %212 = vmatpush1.msra.mxu0 0.0
    %213 = vmatprep.subr.mxu0 0.0
    %214 = vmatpush1.msra.mxu0 0.0
    %215 = vmatprep.subr.mxu0 0.0
    %216 = vmatpush1.msra.mxu0 0.0
    %217 = vmatprep.subr.mxu0 0.0
    %218 = vmatpush1.msra.mxu0 0.0
    %219 = vmatprep.subr.mxu0 0.0
    %220 = vmatpush1.msra.mxu0 0.0
    %221 = vmatprep.subr.mxu0 0.0
    %222 = vmatpush1.msra.mxu0 0.0
    %223 = vmatprep.subr.mxu0 0.0
    %224 = vmatpush1.msra.mxu0 0.0
    %225 = vmatprep.subr.mxu0 0.0
    %226 = vmatpush1.msra.mxu0 0.0
    %227 = vmatprep.subr.mxu0 0.0
    %228 = vmatpush1.msra.mxu0 0.0
    %229 = vmatprep.subr.mxu0 0.0
    %230 = vmatpush1.msra.mxu0 0.0
    %231 = vmatprep.subr.mxu0 0.0
    %232 = vmatpush1.msra.mxu0 0.0
    %233 = vmatprep.subr.mxu0 0.0
    %234 = vmatpush1.msra.mxu0 0.0
    %235 = vmatprep.subr.mxu0 0.0
    %236 = vmatpush1.msra.mxu0 0.0
    %237 = vmatprep.mubr.f32.mxu0 0.0
    %238 = vmatmul.mubr.f32.gmra.mrb[0].mxu0 %v162
    %v239 = vpop.f32.mrb[0].mxu0
    %v240 = vadd.f32 %v160, %v239
    %v241 = vpop.f32.mrb[0].mxu0
    %242 = vmatprep.mubr.f32.mxu0 0.0
    %243 = vmatmul.mubr.f32.gmra.mrb[0].mxu0 %v165
    %v244 = vpop.f32.mrb[0].mxu0
    %v245 = vadd.f32 %v160, %v244
    %v246 = vpop.f32.mrb[0].mxu0
    %247 = vmatprep.mubr.f32.mxu0 0.0
    %248 = vmatmul.mubr.f32.gmra.mrb[0].mxu0 %v168
    %v249 = vpop.f32.mrb[0].mxu0
    %v250 = vadd.f32 %v160, %v249
    %v251 = vpop.f32.mrb[0].mxu0
    %252 = vmatprep.mubr.f32.mxu0 0.0
    %253 = vmatmul.mubr.f32.gmra.mrb[0].mxu0 %v171
    %v254 = vpop.f32.mrb[0].mxu0
    %v255 = vadd.f32 %v160, %v254
    %v256 = vpop.f32.mrb[0].mxu0
    %257 = vdwg.mxu0
    %260 = vrot.lane.b32.xlu0 %v240, 96
    %v261 = vpop.permute.xlu0 %260
    %262 = vrot.lane.b32.xlu0 %v245, 96
    %v263 = vpop.permute.xlu0 %262
    %vm264 = vcmask 64512
    %v265 = vsel %vm264, %v240, 0
    %v267 = vsel %vm264, %v245, 0
    %v269 = vsel %vm264, %v261, 0
    %v271 = vsel %vm264, %v263, 0
    %273 = vmatprep.subr.mxu0 0.0
    %274 = vmatpush1.xpose.msra.mxu0 %v269
    %275 = vmatprep.subr.mxu0 0.0
    %276 = vmatpush1.xpose.msra.mxu0 %v271
    %277 = vmatprep.subr.mxu0 0.0
    %278 = vmatpush1.xpose.msra.mxu0 0.0
    %279 = vmatprep.subr.mxu0 0.0
    %280 = vmatpush1.xpose.msra.mxu0 0.0
    %281 = vmatprep.subr.mxu0 0.0
    %282 = vmatpush1.xpose.msra.mxu0 0.0
    %283 = vmatprep.subr.mxu0 0.0
    %284 = vmatpush1.xpose.msra.mxu0 0.0
    %285 = vmatprep.subr.mxu0 0.0
    %286 = vmatpush1.xpose.msra.mxu0 0.0
    %287 = vmatprep.subr.mxu0 0.0
    %288 = vmatpush1.xpose.msra.mxu0 0.0
    %289 = vmatprep.subr.mxu0 0.0
    %290 = vmatpush1.xpose.msra.mxu0 0.0
    %291 = vmatprep.subr.mxu0 0.0
    %292 = vmatpush1.xpose.msra.mxu0 0.0
    %293 = vmatprep.subr.mxu0 0.0
    %294 = vmatpush1.xpose.msra.mxu0 0.0
    %295 = vmatprep.subr.mxu0 0.0
    %296 = vmatpush1.xpose.msra.mxu0 0.0
    %297 = vmatprep.subr.mxu0 0.0
    %298 = vmatpush1.xpose.msra.mxu0 0.0
    %299 = vmatprep.subr.mxu0 0.0
    %300 = vmatpush1.xpose.msra.mxu0 0.0
    %301 = vmatprep.subr.mxu0 0.0
    %302 = vmatpush1.xpose.msra.mxu0 0.0
    %303 = vmatprep.subr.mxu0 0.0
    %304 = vmatpush1.xpose.msra.mxu0 0.0
    %305 = vmatprep.subr.mxu0 0.0
    %306 = vmatpush1.xpose.msra.mxu0 0.0
    %307 = vmatprep.subr.mxu0 0.0
    %308 = vmatpush1.xpose.msra.mxu0 0.0
    %309 = vmatprep.subr.mxu0 0.0
    %310 = vmatpush1.xpose.msra.mxu0 0.0
    %311 = vmatprep.subr.mxu0 0.0
    %312 = vmatpush1.xpose.msra.mxu0 0.0
    %313 = vmatprep.subr.mxu0 0.0
    %314 = vmatpush1.xpose.msra.mxu0 0.0
    %315 = vmatprep.subr.mxu0 0.0
    %316 = vmatpush1.xpose.msra.mxu0 0.0
    %317 = vmatprep.subr.mxu0 0.0
    %318 = vmatpush1.xpose.msra.mxu0 0.0
    %319 = vmatprep.subr.mxu0 0.0
    %320 = vmatpush1.xpose.msra.mxu0 0.0
    %321 = vmatprep.subr.mxu0 0.0
    %322 = vmatpush1.xpose.msra.mxu0 0.0
    %323 = vmatprep.subr.mxu0 0.0
    %324 = vmatpush1.xpose.msra.mxu0 0.0
    %325 = vmatprep.subr.mxu0 0.0
    %326 = vmatpush1.xpose.msra.mxu0 0.0
    %327 = vmatprep.subr.mxu0 0.0
    %328 = vmatpush1.xpose.msra.mxu0 0.0
    %329 = vmatprep.subr.mxu0 0.0
    %330 = vmatpush1.xpose.msra.mxu0 0.0
    %331 = vmatprep.subr.mxu0 0.0
    %332 = vmatpush1.xpose.msra.mxu0 0.0
    %333 = vmatprep.subr.mxu0 0.0
    %334 = vmatpush1.xpose.msra.mxu0 0.0
    %335 = vmatprep.subr.mxu0 0.0
    %336 = vmatpush1.xpose.msra.mxu0 0.0
    %337 = vmatprep.mubr.f32.mxu0 0.0
    %338 = vmatmul.mubr.f32.gmra.mrb[0].mxu0 %v265
    %v339 = vpop.f32.mrb[0].mxu0
    %v340 = vadd.f32 0.0, %v339
    %v341 = vpop.f32.mrb[0].mxu0
    %342 = vmatprep.mubr.f32.mxu0 0.0
    %343 = vmatmul.mubr.f32.gmra.mrb[0].mxu0 %v267
    %v344 = vpop.f32.mrb[0].mxu0
    %v345 = vadd.f32 0.0, %v344
    %v346 = vpop.f32.mrb[0].mxu0
    %347 = vdwg.mxu0
    %vm348 = vcmask 130048
    %v349 = vsel %vm348, %v340, -inf
    %350 = vmax.xlane.f32.xlu0 %v349
    %v351 = vpop.xlane.xlu0 %350
    %v352 = vsel %vm348, %v345, -inf
    %353 = vmax.xlane.f32.xlu0 %v352
    %v354 = vpop.xlane.xlu0 %353
    %v355 = vsub.f32 %v340, %v351
    %v356 = vsub.f32 %v345, %v354
    %v357 = vmul.f32 %v355, 1.442695
    %v358 = vpow.pop %v357
    %v359 = vmul.f32 %v356, 1.442695
    %v360 = vpow.pop %v359
    %v361 = vsel %vm348, %v358, 0.0
    %362 = vadd.xlane.f32.xlu0 %v361
    %v363 = vpop.xlane.xlu0 %362
    %v364 = vsel %vm348, %v360, 0.0
    %365 = vadd.xlane.f32.xlu0 %v364
    %v366 = vpop.xlane.xlu0 %365
    %v367 = vrcp.pop %v363
    %v368 = vrcp.pop %v366
    %v369 = vmul.f32 %v358, %v367
    %v370 = vmul.f32 %v360, %v368
    %371 = vrot.lane.b32.xlu0 %v240, 64
    %v372 = vpop.permute.xlu0 %371
    %373 = vrot.lane.b32.xlu0 %v245, 64
    %v374 = vpop.permute.xlu0 %373
    %v378 = vsel %vm348, %v369, 0
    %v381 = vsel %vm348, %v370, 0
    %383 = vmatprep.subr.mxu0 0.0
    %384 = vmatpush1.msra.mxu0 %v372
    %385 = vmatprep.subr.mxu0 0.0
    %386 = vmatpush1.msra.mxu0 %v374
    %387 = vmatprep.subr.mxu0 0.0
    %388 = vmatpush1.msra.mxu0 0.0
    %389 = vmatprep.subr.mxu0 0.0
    %390 = vmatpush1.msra.mxu0 0.0
    %391 = vmatprep.subr.mxu0 0.0
    %392 = vmatpush1.msra.mxu0 0.0
    %393 = vmatprep.subr.mxu0 0.0
    %394 = vmatpush1.msra.mxu0 0.0
    %395 = vmatprep.subr.mxu0 0.0
    %396 = vmatpush1.msra.mxu0 0.0
    %397 = vmatprep.subr.mxu0 0.0
    %398 = vmatpush1.msra.mxu0 0.0
    %399 = vmatprep.subr.mxu0 0.0
    %400 = vmatpush1.msra.mxu0 0.0
    %401 = vmatprep.subr.mxu0 0.0
    %402 = vmatpush1.msra.mxu0 0.0
    %403 = vmatprep.subr.mxu0 0.0
    %404 = vmatpush1.msra.mxu0 0.0
    %405 = vmatprep.subr.mxu0 0.0
    %406 = vmatpush1.msra.mxu0 0.0
    %407 = vmatprep.subr.mxu0 0.0
    %408 = vmatpush1.msra.mxu0 0.0
    %409 = vmatprep.subr.mxu0 0.0
    %410 = vmatpush1.msra.mxu0 0.0
    %411 = vmatprep.subr.mxu0 0.0
    %412 = vmatpush1.msra.mxu0 0.0
    %413 = vmatprep.subr.mxu0 0.0
    %414 = vmatpush1.msra.mxu0 0.0
    %415 = vmatprep.subr.mxu0 0.0
    %416 = vmatpush1.msra.mxu0 0.0
    %417 = vmatprep.subr.mxu0 0.0
    %418 = vmatpush1.msra.mxu0 0.0
    %419 = vmatprep.subr.mxu0 0.0
    %420 = vmatpush1.msra.mxu0 0.0
    %421 = vmatprep.subr.mxu0 0.0
    %422 = vmatpush1.msra.mxu0 0.0
    %423 = vmatprep.subr.mxu0 0.0
    %424 = vmatpush1.msra.mxu0 0.0
    %425 = vmatprep.subr.mxu0 0.0
    %426 = vmatpush1.msra.mxu0 0.0
    %427 = vmatprep.subr.mxu0 0.0
    %428 = vmatpush1.msra.mxu0 0.0
    %429 = vmatprep.subr.mxu0 0.0
    %430 = vmatpush1.msra.mxu0 0.0
    %431 = vmatprep.subr.mxu0 0.0
    %432 = vmatpush1.msra.mxu0 0.0
    %433 = vmatprep.subr.mxu0 0.0
    %434 = vmatpush1.msra.mxu0 0.0
    %435 = vmatprep.subr.mxu0 0.0
    %436 = vmatpush1.msra.mxu0 0.0
    %437 = vmatprep.subr.mxu0 0.0
    %438 = vmatpush1.msra.mxu0 0.0
    %439 = vmatprep.subr.mxu0 0.0
    %440 = vmatpush1.msra.mxu0 0.0
    %441 = vmatprep.subr.mxu0 0.0
    %442 = vmatpush1.msra.mxu0 0.0
    %443 = vmatprep.subr.mxu0 0.0
    %444 = vmatpush1.msra.mxu0 0.0
    %445 = vmatprep.subr.mxu0 0.0
    %446 = vmatpush1.msra.mxu0 0.0
    %447 = vmatprep.mubr.f32.mxu0 0.0
    %448 = vmatmul.mubr.f32.gmra.mrb[0].mxu0 %v378
    %v449 = vpop.f32.mrb[0].mxu0
    %v450 = vadd.f32 0.0, %v449
    %v451 = vpop.f32.mrb[0].mxu0
    %452 = vmatprep.mubr.f32.mxu0 0.0
    %453 = vmatmul.mubr.f32.gmra.mrb[0].mxu0 %v381
    %v454 = vpop.f32.mrb[0].mxu0
    %v455 = vadd.f32 0.0, %v454
    %v456 = vpop.f32.mrb[0].mxu0
    %457 = vdwg.mxu0
    %458 = vrot.lane.b32.xlu0 %v240, 120
    %v459 = vpop.permute.xlu0 %458
    %460 = vrot.lane.b32.xlu0 %v245, 120
    %v461 = vpop.permute.xlu0 %460
    %462 = vrot.lane.b32.xlu0 %v240, 88
    %v463 = vpop.permute.xlu0 %462
    %464 = vrot.lane.b32.xlu0 %v245, 88
    %v465 = vpop.permute.xlu0 %464
    %v466 = vsel %vm264, %v459, 0
    %v468 = vsel %vm264, %v461, 0
    %v470 = vsel %vm264, %v463, 0
    %v472 = vsel %vm264, %v465, 0
    %474 = vmatprep.subr.mxu0 0.0
    %475 = vmatpush1.xpose.msra.mxu0 %v470
    %476 = vmatprep.subr.mxu0 0.0
    %477 = vmatpush1.xpose.msra.mxu0 %v472
    %478 = vmatprep.subr.mxu0 0.0
    %479 = vmatpush1.xpose.msra.mxu0 0.0
    %480 = vmatprep.subr.mxu0 0.0
    %481 = vmatpush1.xpose.msra.mxu0 0.0
    %482 = vmatprep.subr.mxu0 0.0
    %483 = vmatpush1.xpose.msra.mxu0 0.0
    %484 = vmatprep.subr.mxu0 0.0
    %485 = vmatpush1.xpose.msra.mxu0 0.0
    %486 = vmatprep.subr.mxu0 0.0
    %487 = vmatpush1.xpose.msra.mxu0 0.0
    %488 = vmatprep.subr.mxu0 0.0
    %489 = vmatpush1.xpose.msra.mxu0 0.0
    %490 = vmatprep.subr.mxu0 0.0
    %491 = vmatpush1.xpose.msra.mxu0 0.0
    %492 = vmatprep.subr.mxu0 0.0
    %493 = vmatpush1.xpose.msra.mxu0 0.0
    %494 = vmatprep.subr.mxu0 0.0
    %495 = vmatpush1.xpose.msra.mxu0 0.0
    %496 = vmatprep.subr.mxu0 0.0
    %497 = vmatpush1.xpose.msra.mxu0 0.0
    %498 = vmatprep.subr.mxu0 0.0
    %499 = vmatpush1.xpose.msra.mxu0 0.0
    %500 = vmatprep.subr.mxu0 0.0
    %501 = vmatpush1.xpose.msra.mxu0 0.0
    %502 = vmatprep.subr.mxu0 0.0
    %503 = vmatpush1.xpose.msra.mxu0 0.0
    %504 = vmatprep.subr.mxu0 0.0
    %505 = vmatpush1.xpose.msra.mxu0 0.0
    %506 = vmatprep.subr.mxu0 0.0
    %507 = vmatpush1.xpose.msra.mxu0 0.0
    %508 = vmatprep.subr.mxu0 0.0
    %509 = vmatpush1.xpose.msra.mxu0 0.0
    %510 = vmatprep.subr.mxu0 0.0
    %511 = vmatpush1.xpose.msra.mxu0 0.0
    %512 = vmatprep.subr.mxu0 0.0
    %513 = vmatpush1.xpose.msra.mxu0 0.0
    %514 = vmatprep.subr.mxu0 0.0
    %515 = vmatpush1.xpose.msra.mxu0 0.0
    %516 = vmatprep.subr.mxu0 0.0
    %517 = vmatpush1.xpose.msra.mxu0 0.0
    %518 = vmatprep.subr.mxu0 0.0
    %519 = vmatpush1.xpose.msra.mxu0 0.0
    %520 = vmatprep.subr.mxu0 0.0
    %521 = vmatpush1.xpose.msra.mxu0 0.0
    %522 = vmatprep.subr.mxu0 0.0
    %523 = vmatpush1.xpose.msra.mxu0 0.0
    %524 = vmatprep.subr.mxu0 0.0
    %525 = vmatpush1.xpose.msra.mxu0 0.0
    %526 = vmatprep.subr.mxu0 0.0
    %527 = vmatpush1.xpose.msra.mxu0 0.0
    %528 = vmatprep.subr.mxu0 0.0
    %529 = vmatpush1.xpose.msra.mxu0 0.0
    %530 = vmatprep.subr.mxu0 0.0
    %531 = vmatpush1.xpose.msra.mxu0 0.0
    %532 = vmatprep.subr.mxu0 0.0
    %533 = vmatpush1.xpose.msra.mxu0 0.0
    %534 = vmatprep.subr.mxu0 0.0
    %535 = vmatpush1.xpose.msra.mxu0 0.0
    %536 = vmatprep.subr.mxu0 0.0
    %537 = vmatpush1.xpose.msra.mxu0 0.0
    %538 = vmatprep.mubr.f32.mxu0 0.0
    %539 = vmatmul.mubr.f32.gmra.mrb[0].mxu0 %v466
    %v540 = vpop.f32.mrb[0].mxu0
    %v541 = vadd.f32 0.0, %v540
    %v542 = vpop.f32.mrb[0].mxu0
    %543 = vmatprep.mubr.f32.mxu0 0.0
    %544 = vmatmul.mubr.f32.gmra.mrb[0].mxu0 %v468
    %v545 = vpop.f32.mrb[0].mxu0
    %v546 = vadd.f32 0.0, %v545
    %v547 = vpop.f32.mrb[0].mxu0
    %548 = vdwg.mxu0
    %v549 = vsel %vm348, %v541, -inf
    %550 = vmax.xlane.f32.xlu0 %v549
    %v551 = vpop.xlane.xlu0 %550
    %v552 = vsel %vm348, %v546, -inf
    %553 = vmax.xlane.f32.xlu0 %v552
    %v554 = vpop.xlane.xlu0 %553
    %v555 = vsub.f32 %v541, %v551
    %v556 = vsub.f32 %v546, %v554
    %v557 = vmul.f32 %v555, 1.442695
    %v558 = vpow.pop %v557
    %v559 = vmul.f32 %v556, 1.442695
    %v560 = vpow.pop %v559
    %v561 = vsel %vm348, %v558, 0.0
    %562 = vadd.xlane.f32.xlu0 %v561
    %v563 = vpop.xlane.xlu0 %562
    %v564 = vsel %vm348, %v560, 0.0
    %565 = vadd.xlane.f32.xlu0 %v564
    %v566 = vpop.xlane.xlu0 %565
    %v567 = vrcp.pop %v563
    %v568 = vrcp.pop %v566
    %v569 = vmul.f32 %v558, %v567
    %v570 = vmul.f32 %v560, %v568
    %571 = vrot.lane.b32.xlu0 %v240, 56
    %v572 = vpop.permute.xlu0 %571
    %573 = vrot.lane.b32.xlu0 %v245, 56
    %v574 = vpop.permute.xlu0 %573
    %v578 = vsel %vm348, %v569, 0
    %v581 = vsel %vm348, %v570, 0
    %583 = vmatprep.subr.mxu0 0.0
    %584 = vmatpush1.msra.mxu0 %v572
    %585 = vmatprep.subr.mxu0 0.0
    %586 = vmatpush1.msra.mxu0 %v574
    %587 = vmatprep.subr.mxu0 0.0
    %588 = vmatpush1.msra.mxu0 0.0
    %589 = vmatprep.subr.mxu0 0.0
    %590 = vmatpush1.msra.mxu0 0.0
    %591 = vmatprep.subr.mxu0 0.0
    %592 = vmatpush1.msra.mxu0 0.0
    %593 = vmatprep.subr.mxu0 0.0
    %594 = vmatpush1.msra.mxu0 0.0
    %595 = vmatprep.subr.mxu0 0.0
    %596 = vmatpush1.msra.mxu0 0.0
    %597 = vmatprep.subr.mxu0 0.0
    %598 = vmatpush1.msra.mxu0 0.0
    %599 = vmatprep.subr.mxu0 0.0
    %600 = vmatpush1.msra.mxu0 0.0
    %601 = vmatprep.subr.mxu0 0.0
    %602 = vmatpush1.msra.mxu0 0.0
    %603 = vmatprep.subr.mxu0 0.0
    %604 = vmatpush1.msra.mxu0 0.0
    %605 = vmatprep.subr.mxu0 0.0
    %606 = vmatpush1.msra.mxu0 0.0
    %607 = vmatprep.subr.mxu0 0.0
    %608 = vmatpush1.msra.mxu0 0.0
    %609 = vmatprep.subr.mxu0 0.0
    %610 = vmatpush1.msra.mxu0 0.0
    %611 = vmatprep.subr.mxu0 0.0
    %612 = vmatpush1.msra.mxu0 0.0
    %613 = vmatprep.subr.mxu0 0.0
    %614 = vmatpush1.msra.mxu0 0.0
    %615 = vmatprep.subr.mxu0 0.0
    %616 = vmatpush1.msra.mxu0 0.0
    %617 = vmatprep.subr.mxu0 0.0
    %618 = vmatpush1.msra.mxu0 0.0
    %619 = vmatprep.subr.mxu0 0.0
    %620 = vmatpush1.msra.mxu0 0.0
    %621 = vmatprep.subr.mxu0 0.0
    %622 = vmatpush1.msra.mxu0 0.0
    %623 = vmatprep.subr.mxu0 0.0
    %624 = vmatpush1.msra.mxu0 0.0
    %625 = vmatprep.subr.mxu0 0.0
    %626 = vmatpush1.msra.mxu0 0.0
    %627 = vmatprep.subr.mxu0 0.0
    %628 = vmatpush1.msra.mxu0 0.0
    %629 = vmatprep.subr.mxu0 0.0
    %630 = vmatpush1.msra.mxu0 0.0
    %631 = vmatprep.subr.mxu0 0.0
    %632 = vmatpush1.msra.mxu0 0.0
    %633 = vmatprep.subr.mxu0 0.0
    %634 = vmatpush1.msra.mxu0 0.0
    %635 = vmatprep.subr.mxu0 0.0
    %636 = vmatpush1.msra.mxu0 0.0
    %637 = vmatprep.subr.mxu0 0.0
    %638 = vmatpush1.msra.mxu0 0.0
    %639 = vmatprep.subr.mxu0 0.0
    %640 = vmatpush1.msra.mxu0 0.0
    %641 = vmatprep.subr.mxu0 0.0
    %642 = vmatpush1.msra.mxu0 0.0
    %643 = vmatprep.subr.mxu0 0.0
    %644 = vmatpush1.msra.mxu0 0.0
    %645 = vmatprep.subr.mxu0 0.0
    %646 = vmatpush1.msra.mxu0 0.0
    %647 = vmatprep.mubr.f32.mxu0 0.0
    %648 = vmatmul.mubr.f32.gmra.mrb[0].mxu0 %v578
    %v649 = vpop.f32.mrb[0].mxu0
    %v650 = vadd.f32 0.0, %v649
    %v651 = vpop.f32.mrb[0].mxu0
    %652 = vmatprep.mubr.f32.mxu0 0.0
    %653 = vmatmul.mubr.f32.gmra.mrb[0].mxu0 %v581
    %v654 = vpop.f32.mrb[0].mxu0
    %v655 = vadd.f32 0.0, %v654
    %v656 = vpop.f32.mrb[0].mxu0
    %657 = vdwg.mxu0
    %658 = vrot.lane.b32.xlu0 %v240, 112
    %v659 = vpop.permute.xlu0 %658
    %660 = vrot.lane.b32.xlu0 %v245, 112
    %v661 = vpop.permute.xlu0 %660
    %662 = vrot.lane.b32.xlu0 %v240, 80
    %v663 = vpop.permute.xlu0 %662
    %664 = vrot.lane.b32.xlu0 %v245, 80
    %v665 = vpop.permute.xlu0 %664
    %v666 = vsel %vm264, %v659, 0
    %v668 = vsel %vm264, %v661, 0
    %v670 = vsel %vm264, %v663, 0
    %v672 = vsel %vm264, %v665, 0
    %674 = vmatprep.subr.mxu0 0.0
    %675 = vmatpush1.xpose.msra.mxu0 %v670
    %676 = vmatprep.subr.mxu0 0.0
    %677 = vmatpush1.xpose.msra.mxu0 %v672
    %678 = vmatprep.subr.mxu0 0.0
    %679 = vmatpush1.xpose.msra.mxu0 0.0
    %680 = vmatprep.subr.mxu0 0.0
    %681 = vmatpush1.xpose.msra.mxu0 0.0
    %682 = vmatprep.subr.mxu0 0.0
    %683 = vmatpush1.xpose.msra.mxu0 0.0
    %684 = vmatprep.subr.mxu0 0.0
    %685 = vmatpush1.xpose.msra.mxu0 0.0
    %686 = vmatprep.subr.mxu0 0.0
    %687 = vmatpush1.xpose.msra.mxu0 0.0
    %688 = vmatprep.subr.mxu0 0.0
    %689 = vmatpush1.xpose.msra.mxu0 0.0
    %690 = vmatprep.subr.mxu0 0.0
    %691 = vmatpush1.xpose.msra.mxu0 0.0
    %692 = vmatprep.subr.mxu0 0.0
    %693 = vmatpush1.xpose.msra.mxu0 0.0
    %694 = vmatprep.subr.mxu0 0.0
    %695 = vmatpush1.xpose.msra.mxu0 0.0
    %696 = vmatprep.subr.mxu0 0.0
    %697 = vmatpush1.xpose.msra.mxu0 0.0
    %698 = vmatprep.subr.mxu0 0.0
    %699 = vmatpush1.xpose.msra.mxu0 0.0
    %700 = vmatprep.subr.mxu0 0.0
    %701 = vmatpush1.xpose.msra.mxu0 0.0
    %702 = vmatprep.subr.mxu0 0.0
    %703 = vmatpush1.xpose.msra.mxu0 0.0
    %704 = vmatprep.subr.mxu0 0.0
    %705 = vmatpush1.xpose.msra.mxu0 0.0
    %706 = vmatprep.subr.mxu0 0.0
    %707 = vmatpush1.xpose.msra.mxu0 0.0
    %708 = vmatprep.subr.mxu0 0.0
    %709 = vmatpush1.xpose.msra.mxu0 0.0
    %710 = vmatprep.subr.mxu0 0.0
    %711 = vmatpush1.xpose.msra.mxu0 0.0
    %712 = vmatprep.subr.mxu0 0.0
    %713 = vmatpush1.xpose.msra.mxu0 0.0
    %714 = vmatprep.subr.mxu0 0.0
    %715 = vmatpush1.xpose.msra.mxu0 0.0
    %716 = vmatprep.subr.mxu0 0.0
    %717 = vmatpush1.xpose.msra.mxu0 0.0
    %718 = vmatprep.subr.mxu0 0.0
    %719 = vmatpush1.xpose.msra.mxu0 0.0
    %720 = vmatprep.subr.mxu0 0.0
    %721 = vmatpush1.xpose.msra.mxu0 0.0
    %722 = vmatprep.subr.mxu0 0.0
    %723 = vmatpush1.xpose.msra.mxu0 0.0
    %724 = vmatprep.subr.mxu0 0.0
    %725 = vmatpush1.xpose.msra.mxu0 0.0
    %726 = vmatprep.subr.mxu0 0.0
    %727 = vmatpush1.xpose.msra.mxu0 0.0
    %728 = vmatprep.subr.mxu0 0.0
    %729 = vmatpush1.xpose.msra.mxu0 0.0
    %730 = vmatprep.subr.mxu0 0.0
    %731 = vmatpush1.xpose.msra.mxu0 0.0
    %732 = vmatprep.subr.mxu0 0.0
    %733 = vmatpush1.xpose.msra.mxu0 0.0
    %734 = vmatprep.subr.mxu0 0.0
    %735 = vmatpush1.xpose.msra.mxu0 0.0
    %736 = vmatprep.subr.mxu0 0.0
    %737 = vmatpush1.xpose.msra.mxu0 0.0
    %738 = vmatprep.mubr.f32.mxu0 0.0
    %739 = vmatmul.mubr.f32.gmra.mrb[0].mxu0 %v666
    %v740 = vpop.f32.mrb[0].mxu0
    %v741 = vadd.f32 0.0, %v740
    %v742 = vpop.f32.mrb[0].mxu0
    %743 = vmatprep.mubr.f32.mxu0 0.0
    %744 = vmatmul.mubr.f32.gmra.mrb[0].mxu0 %v668
    %v745 = vpop.f32.mrb[0].mxu0
    %v746 = vadd.f32 0.0, %v745
    %v747 = vpop.f32.mrb[0].mxu0
    %748 = vdwg.mxu0
    %v749 = vsel %vm348, %v741, -inf
    %750 = vmax.xlane.f32.xlu0 %v749
    %v751 = vpop.xlane.xlu0 %750
    %v752 = vsel %vm348, %v746, -inf
    %753 = vmax.xlane.f32.xlu0 %v752
    %v754 = vpop.xlane.xlu0 %753
    %v755 = vsub.f32 %v741, %v751
    %v756 = vsub.f32 %v746, %v754
    %v757 = vmul.f32 %v755, 1.442695
    %v758 = vpow.pop %v757
    %v759 = vmul.f32 %v756, 1.442695
    %v760 = vpow.pop %v759
    %v761 = vsel %vm348, %v758, 0.0
    %762 = vadd.xlane.f32.xlu0 %v761
    %v763 = vpop.xlane.xlu0 %762
    %v764 = vsel %vm348, %v760, 0.0
    %765 = vadd.xlane.f32.xlu0 %v764
    %v766 = vpop.xlane.xlu0 %765
    %v767 = vrcp.pop %v763
    %v768 = vrcp.pop %v766
    %v769 = vmul.f32 %v758, %v767
    %v770 = vmul.f32 %v760, %v768
    %771 = vrot.lane.b32.xlu0 %v240, 48
    %v772 = vpop.permute.xlu0 %771
    %773 = vrot.lane.b32.xlu0 %v245, 48
    %v774 = vpop.permute.xlu0 %773
    %v778 = vsel %vm348, %v769, 0
    %v781 = vsel %vm348, %v770, 0
    %783 = vmatprep.subr.mxu0 0.0
    %784 = vmatpush1.msra.mxu0 %v772
    %785 = vmatprep.subr.mxu0 0.0
    %786 = vmatpush1.msra.mxu0 %v774
    %787 = vmatprep.subr.mxu0 0.0
    %788 = vmatpush1.msra.mxu0 0.0
    %789 = vmatprep.subr.mxu0 0.0
    %790 = vmatpush1.msra.mxu0 0.0
    %791 = vmatprep.subr.mxu0 0.0
    %792 = vmatpush1.msra.mxu0 0.0
    %793 = vmatprep.subr.mxu0 0.0
    %794 = vmatpush1.msra.mxu0 0.0
    %795 = vmatprep.subr.mxu0 0.0
    %796 = vmatpush1.msra.mxu0 0.0
    %797 = vmatprep.subr.mxu0 0.0
    %798 = vmatpush1.msra.mxu0 0.0
    %799 = vmatprep.subr.mxu0 0.0
    %800 = vmatpush1.msra.mxu0 0.0
    %801 = vmatprep.subr.mxu0 0.0
    %802 = vmatpush1.msra.mxu0 0.0
    %803 = vmatprep.subr.mxu0 0.0
    %804 = vmatpush1.msra.mxu0 0.0
    %805 = vmatprep.subr.mxu0 0.0
    %806 = vmatpush1.msra.mxu0 0.0
    %807 = vmatprep.subr.mxu0 0.0
    %808 = vmatpush1.msra.mxu0 0.0
    %809 = vmatprep.subr.mxu0 0.0
    %810 = vmatpush1.msra.mxu0 0.0
    %811 = vmatprep.subr.mxu0 0.0
    %812 = vmatpush1.msra.mxu0 0.0
    %813 = vmatprep.subr.mxu0 0.0
    %814 = vmatpush1.msra.mxu0 0.0
    %815 = vmatprep.subr.mxu0 0.0
    %816 = vmatpush1.msra.mxu0 0.0
    %817 = vmatprep.subr.mxu0 0.0
    %818 = vmatpush1.msra.mxu0 0.0
    %819 = vmatprep.subr.mxu0 0.0
    %820 = vmatpush1.msra.mxu0 0.0
    %821 = vmatprep.subr.mxu0 0.0
    %822 = vmatpush1.msra.mxu0 0.0
    %823 = vmatprep.subr.mxu0 0.0
    %824 = vmatpush1.msra.mxu0 0.0
    %825 = vmatprep.subr.mxu0 0.0
    %826 = vmatpush1.msra.mxu0 0.0
    %827 = vmatprep.subr.mxu0 0.0
    %828 = vmatpush1.msra.mxu0 0.0
    %829 = vmatprep.subr.mxu0 0.0
    %830 = vmatpush1.msra.mxu0 0.0
    %831 = vmatprep.subr.mxu0 0.0
    %832 = vmatpush1.msra.mxu0 0.0
    %833 = vmatprep.subr.mxu0 0.0
    %834 = vmatpush1.msra.mxu0 0.0
    %835 = vmatprep.subr.mxu0 0.0
    %836 = vmatpush1.msra.mxu0 0.0
    %837 = vmatprep.subr.mxu0 0.0
    %838 = vmatpush1.msra.mxu0 0.0
    %839 = vmatprep.subr.mxu0 0.0
    %840 = vmatpush1.msra.mxu0 0.0
    %841 = vmatprep.subr.mxu0 0.0
    %842 = vmatpush1.msra.mxu0 0.0
    %843 = vmatprep.subr.mxu0 0.0
    %844 = vmatpush1.msra.mxu0 0.0
    %845 = vmatprep.subr.mxu0 0.0
    %846 = vmatpush1.msra.mxu0 0.0
    %847 = vmatprep.mubr.f32.mxu0 0.0
    %848 = vmatmul.mubr.f32.gmra.mrb[0].mxu0 %v778
    %v849 = vpop.f32.mrb[0].mxu0
    %v850 = vadd.f32 0.0, %v849
    %v851 = vpop.f32.mrb[0].mxu0
    %852 = vmatprep.mubr.f32.mxu0 0.0
    %853 = vmatmul.mubr.f32.gmra.mrb[0].mxu0 %v781
    %v854 = vpop.f32.mrb[0].mxu0
    %v855 = vadd.f32 0.0, %v854
    %v856 = vpop.f32.mrb[0].mxu0
    %857 = vdwg.mxu0
    %858 = vrot.lane.b32.xlu0 %v240, 104
    %v859 = vpop.permute.xlu0 %858
    %860 = vrot.lane.b32.xlu0 %v245, 104
    %v861 = vpop.permute.xlu0 %860
    %862 = vrot.lane.b32.xlu0 %v240, 72
    %v863 = vpop.permute.xlu0 %862
    %864 = vrot.lane.b32.xlu0 %v245, 72
    %v865 = vpop.permute.xlu0 %864
    %v866 = vsel %vm264, %v859, 0
    %v868 = vsel %vm264, %v861, 0
    %v870 = vsel %vm264, %v863, 0
    %v872 = vsel %vm264, %v865, 0
    %874 = vmatprep.subr.mxu0 0.0
    %875 = vmatpush1.xpose.msra.mxu0 %v870
    %876 = vmatprep.subr.mxu0 0.0
    %877 = vmatpush1.xpose.msra.mxu0 %v872
    %878 = vmatprep.subr.mxu0 0.0
    %879 = vmatpush1.xpose.msra.mxu0 0.0
    %880 = vmatprep.subr.mxu0 0.0
    %881 = vmatpush1.xpose.msra.mxu0 0.0
    %882 = vmatprep.subr.mxu0 0.0
    %883 = vmatpush1.xpose.msra.mxu0 0.0
    %884 = vmatprep.subr.mxu0 0.0
    %885 = vmatpush1.xpose.msra.mxu0 0.0
    %886 = vmatprep.subr.mxu0 0.0
    %887 = vmatpush1.xpose.msra.mxu0 0.0
    %888 = vmatprep.subr.mxu0 0.0
    %889 = vmatpush1.xpose.msra.mxu0 0.0
    %890 = vmatprep.subr.mxu0 0.0
    %891 = vmatpush1.xpose.msra.mxu0 0.0
    %892 = vmatprep.subr.mxu0 0.0
    %893 = vmatpush1.xpose.msra.mxu0 0.0
    %894 = vmatprep.subr.mxu0 0.0
    %895 = vmatpush1.xpose.msra.mxu0 0.0
    %896 = vmatprep.subr.mxu0 0.0
    %897 = vmatpush1.xpose.msra.mxu0 0.0
    %898 = vmatprep.subr.mxu0 0.0
    %899 = vmatpush1.xpose.msra.mxu0 0.0
    %900 = vmatprep.subr.mxu0 0.0
    %901 = vmatpush1.xpose.msra.mxu0 0.0
    %902 = vmatprep.subr.mxu0 0.0
    %903 = vmatpush1.xpose.msra.mxu0 0.0
    %904 = vmatprep.subr.mxu0 0.0
    %905 = vmatpush1.xpose.msra.mxu0 0.0
    %906 = vmatprep.subr.mxu0 0.0
    %907 = vmatpush1.xpose.msra.mxu0 0.0
    %908 = vmatprep.subr.mxu0 0.0
    %909 = vmatpush1.xpose.msra.mxu0 0.0
    %910 = vmatprep.subr.mxu0 0.0
    %911 = vmatpush1.xpose.msra.mxu0 0.0
    %912 = vmatprep.subr.mxu0 0.0
    %913 = vmatpush1.xpose.msra.mxu0 0.0
    %914 = vmatprep.subr.mxu0 0.0
    %915 = vmatpush1.xpose.msra.mxu0 0.0
    %916 = vmatprep.subr.mxu0 0.0
    %917 = vmatpush1.xpose.msra.mxu0 0.0
    %918 = vmatprep.subr.mxu0 0.0
    %919 = vmatpush1.xpose.msra.mxu0 0.0
    %920 = vmatprep.subr.mxu0 0.0
    %921 = vmatpush1.xpose.msra.mxu0 0.0
    %922 = vmatprep.subr.mxu0 0.0
    %923 = vmatpush1.xpose.msra.mxu0 0.0
    %924 = vmatprep.subr.mxu0 0.0
    %925 = vmatpush1.xpose.msra.mxu0 0.0
    %926 = vmatprep.subr.mxu0 0.0
    %927 = vmatpush1.xpose.msra.mxu0 0.0
    %928 = vmatprep.subr.mxu0 0.0
    %929 = vmatpush1.xpose.msra.mxu0 0.0
    %930 = vmatprep.subr.mxu0 0.0
    %931 = vmatpush1.xpose.msra.mxu0 0.0
    %932 = vmatprep.subr.mxu0 0.0
    %933 = vmatpush1.xpose.msra.mxu0 0.0
    %934 = vmatprep.subr.mxu0 0.0
    %935 = vmatpush1.xpose.msra.mxu0 0.0
    %936 = vmatprep.subr.mxu0 0.0
    %937 = vmatpush1.xpose.msra.mxu0 0.0
    %938 = vmatprep.mubr.f32.mxu0 0.0
    %939 = vmatmul.mubr.f32.gmra.mrb[0].mxu0 %v866
    %v940 = vpop.f32.mrb[0].mxu0
    %v941 = vadd.f32 0.0, %v940
    %v942 = vpop.f32.mrb[0].mxu0
    %943 = vmatprep.mubr.f32.mxu0 0.0
    %944 = vmatmul.mubr.f32.gmra.mrb[0].mxu0 %v868
    %v945 = vpop.f32.mrb[0].mxu0
    %v946 = vadd.f32 0.0, %v945
    %v947 = vpop.f32.mrb[0].mxu0
    %948 = vdwg.mxu0
    %v949 = vsel %vm348, %v941, -inf
    %950 = vmax.xlane.f32.xlu0 %v949
    %v951 = vpop.xlane.xlu0 %950
    %v952 = vsel %vm348, %v946, -inf
    %953 = vmax.xlane.f32.xlu0 %v952
    %v954 = vpop.xlane.xlu0 %953
    %v955 = vsub.f32 %v941, %v951
    %v956 = vsub.f32 %v946, %v954
    %v957 = vmul.f32 %v955, 1.442695
    %v958 = vpow.pop %v957
    %v959 = vmul.f32 %v956, 1.442695
    %v960 = vpow.pop %v959
    %v961 = vsel %vm348, %v958, 0.0
    %962 = vadd.xlane.f32.xlu0 %v961
    %v963 = vpop.xlane.xlu0 %962
    %v964 = vsel %vm348, %v960, 0.0
    %965 = vadd.xlane.f32.xlu0 %v964
    %v966 = vpop.xlane.xlu0 %965
    %v967 = vrcp.pop %v963
    %v968 = vrcp.pop %v966
    %v969 = vmul.f32 %v958, %v967
    %v970 = vmul.f32 %v960, %v968
    %971 = vrot.lane.b32.xlu0 %v240, 40
    %v972 = vpop.permute.xlu0 %971
    %973 = vrot.lane.b32.xlu0 %v245, 40
    %v974 = vpop.permute.xlu0 %973
    %v978 = vsel %vm348, %v969, 0
    %v981 = vsel %vm348, %v970, 0
    %983 = vmatprep.subr.mxu0 0.0
    %984 = vmatpush1.msra.mxu0 %v972
    %985 = vmatprep.subr.mxu0 0.0
    %986 = vmatpush1.msra.mxu0 %v974
    %987 = vmatprep.subr.mxu0 0.0
    %988 = vmatpush1.msra.mxu0 0.0
    %989 = vmatprep.subr.mxu0 0.0
    %990 = vmatpush1.msra.mxu0 0.0
    %991 = vmatprep.subr.mxu0 0.0
    %992 = vmatpush1.msra.mxu0 0.0
    %993 = vmatprep.subr.mxu0 0.0
    %994 = vmatpush1.msra.mxu0 0.0
    %995 = vmatprep.subr.mxu0 0.0
    %996 = vmatpush1.msra.mxu0 0.0
    %997 = vmatprep.subr.mxu0 0.0
    %998 = vmatpush1.msra.mxu0 0.0
    %999 = vmatprep.subr.mxu0 0.0
    %1000 = vmatpush1.msra.mxu0 0.0
    %1001 = vmatprep.subr.mxu0 0.0
    %1002 = vmatpush1.msra.mxu0 0.0
    %1003 = vmatprep.subr.mxu0 0.0
    %1004 = vmatpush1.msra.mxu0 0.0
    %1005 = vmatprep.subr.mxu0 0.0
    %1006 = vmatpush1.msra.mxu0 0.0
    %1007 = vmatprep.subr.mxu0 0.0
    %1008 = vmatpush1.msra.mxu0 0.0
    %1009 = vmatprep.subr.mxu0 0.0
    %1010 = vmatpush1.msra.mxu0 0.0
    %1011 = vmatprep.subr.mxu0 0.0
    %1012 = vmatpush1.msra.mxu0 0.0
    %1013 = vmatprep.subr.mxu0 0.0
    %1014 = vmatpush1.msra.mxu0 0.0
    %1015 = vmatprep.subr.mxu0 0.0
    %1016 = vmatpush1.msra.mxu0 0.0
    %1017 = vmatprep.subr.mxu0 0.0
    %1018 = vmatpush1.msra.mxu0 0.0
    %1019 = vmatprep.subr.mxu0 0.0
    %1020 = vmatpush1.msra.mxu0 0.0
    %1021 = vmatprep.subr.mxu0 0.0
    %1022 = vmatpush1.msra.mxu0 0.0
    %1023 = vmatprep.subr.mxu0 0.0
    %1024 = vmatpush1.msra.mxu0 0.0
    %1025 = vmatprep.subr.mxu0 0.0
    %1026 = vmatpush1.msra.mxu0 0.0
    %1027 = vmatprep.subr.mxu0 0.0
    %1028 = vmatpush1.msra.mxu0 0.0
    %1029 = vmatprep.subr.mxu0 0.0
    %1030 = vmatpush1.msra.mxu0 0.0
    %1031 = vmatprep.subr.mxu0 0.0
    %1032 = vmatpush1.msra.mxu0 0.0
    %1033 = vmatprep.subr.mxu0 0.0
    %1034 = vmatpush1.msra.mxu0 0.0
    %1035 = vmatprep.subr.mxu0 0.0
    %1036 = vmatpush1.msra.mxu0 0.0
    %1037 = vmatprep.subr.mxu0 0.0
    %1038 = vmatpush1.msra.mxu0 0.0
    %1039 = vmatprep.subr.mxu0 0.0
    %1040 = vmatpush1.msra.mxu0 0.0
    %1041 = vmatprep.subr.mxu0 0.0
    %1042 = vmatpush1.msra.mxu0 0.0
    %1043 = vmatprep.subr.mxu0 0.0
    %1044 = vmatpush1.msra.mxu0 0.0
    %1045 = vmatprep.subr.mxu0 0.0
    %1046 = vmatpush1.msra.mxu0 0.0
    %1047 = vmatprep.mubr.f32.mxu0 0.0
    %1048 = vmatmul.mubr.f32.gmra.mrb[0].mxu0 %v978
    %v1049 = vpop.f32.mrb[0].mxu0
    %v1050 = vadd.f32 0.0, %v1049
    %v1051 = vpop.f32.mrb[0].mxu0
    %1052 = vmatprep.mubr.f32.mxu0 0.0
    %1053 = vmatmul.mubr.f32.gmra.mrb[0].mxu0 %v981
    %v1054 = vpop.f32.mrb[0].mxu0
    %v1055 = vadd.f32 0.0, %v1054
    %v1056 = vpop.f32.mrb[0].mxu0
    %1057 = vdwg.mxu0
    %1060 = vrot.lane.b32.xlu0 %v650, 8
    %v1061 = vpop.permute.xlu0 %1060
    %1062 = vrot.lane.b32.xlu0 %v655, 8
    %v1063 = vpop.permute.xlu0 %1062
    %1068 = vrot.lane.b32.xlu0 %v850, 16
    %v1069 = vpop.permute.xlu0 %1068
    %1070 = vrot.lane.b32.xlu0 %v855, 16
    %v1071 = vpop.permute.xlu0 %1070
    %1076 = vrot.lane.b32.xlu0 %v1050, 24
    %v1077 = vpop.permute.xlu0 %1076
    %1078 = vrot.lane.b32.xlu0 %v1055, 24
    %v1079 = vpop.permute.xlu0 %1078
    %v1082 = vsel %vm264, %v450, %v1061
    %v1083 = vsel %vm264, %v455, %v1063
    %v1084 = vsel %vm348, %v1082, %v1069
    %v1085 = vsel %vm348, %v1083, %v1071
    %vm1086 = vcmask 195584
    %v1087 = vsel %vm1086, %v1084, %v1077
    %v1088 = vsel %vm1086, %v1085, %v1079
    %1091 = vrot.lane.b32.xlu0 %v250, 96
    %v1092 = vpop.permute.xlu0 %1091
    %1093 = vrot.lane.b32.xlu0 %v255, 96
    %v1094 = vpop.permute.xlu0 %1093
    %v1095 = vsel %vm264, %v250, 0
    %v1097 = vsel %vm264, %v255, 0
    %v1099 = vsel %vm264, %v1092, 0
    %v1101 = vsel %vm264, %v1094, 0
    %1103 = vmatprep.subr.mxu0 0.0
    %1104 = vmatpush1.xpose.msra.mxu0 %v1099
    %1105 = vmatprep.subr.mxu0 0.0
    %1106 = vmatpush1.xpose.msra.mxu0 %v1101
    %1107 = vmatprep.subr.mxu0 0.0
    %1108 = vmatpush1.xpose.msra.mxu0 0.0
    %1109 = vmatprep.subr.mxu0 0.0
    %1110 = vmatpush1.xpose.msra.mxu0 0.0
    %1111 = vmatprep.subr.mxu0 0.0
    %1112 = vmatpush1.xpose.msra.mxu0 0.0
    %1113 = vmatprep.subr.mxu0 0.0
    %1114 = vmatpush1.xpose.msra.mxu0 0.0
    %1115 = vmatprep.subr.mxu0 0.0
    %1116 = vmatpush1.xpose.msra.mxu0 0.0
    %1117 = vmatprep.subr.mxu0 0.0
    %1118 = vmatpush1.xpose.msra.mxu0 0.0
    %1119 = vmatprep.subr.mxu0 0.0
    %1120 = vmatpush1.xpose.msra.mxu0 0.0
    %1121 = vmatprep.subr.mxu0 0.0
    %1122 = vmatpush1.xpose.msra.mxu0 0.0
    %1123 = vmatprep.subr.mxu0 0.0
    %1124 = vmatpush1.xpose.msra.mxu0 0.0
    %1125 = vmatprep.subr.mxu0 0.0
    %1126 = vmatpush1.xpose.msra.mxu0 0.0
    %1127 = vmatprep.subr.mxu0 0.0
    %1128 = vmatpush1.xpose.msra.mxu0 0.0
    %1129 = vmatprep.subr.mxu0 0.0
    %1130 = vmatpush1.xpose.msra.mxu0 0.0
    %1131 = vmatprep.subr.mxu0 0.0
    %1132 = vmatpush1.xpose.msra.mxu0 0.0
    %1133 = vmatprep.subr.mxu0 0.0
    %1134 = vmatpush1.xpose.msra.mxu0 0.0
    %1135 = vmatprep.subr.mxu0 0.0
    %1136 = vmatpush1.xpose.msra.mxu0 0.0
    %1137 = vmatprep.subr.mxu0 0.0
    %1138 = vmatpush1.xpose.msra.mxu0 0.0
    %1139 = vmatprep.subr.mxu0 0.0
    %1140 = vmatpush1.xpose.msra.mxu0 0.0
    %1141 = vmatprep.subr.mxu0 0.0
    %1142 = vmatpush1.xpose.msra.mxu0 0.0
    %1143 = vmatprep.subr.mxu0 0.0
    %1144 = vmatpush1.xpose.msra.mxu0 0.0
    %1145 = vmatprep.subr.mxu0 0.0
    %1146 = vmatpush1.xpose.msra.mxu0 0.0
    %1147 = vmatprep.subr.mxu0 0.0
    %1148 = vmatpush1.xpose.msra.mxu0 0.0
    %1149 = vmatprep.subr.mxu0 0.0
    %1150 = vmatpush1.xpose.msra.mxu0 0.0
    %1151 = vmatprep.subr.mxu0 0.0
    %1152 = vmatpush1.xpose.msra.mxu0 0.0
    %1153 = vmatprep.subr.mxu0 0.0
    %1154 = vmatpush1.xpose.msra.mxu0 0.0
    %1155 = vmatprep.subr.mxu0 0.0
    %1156 = vmatpush1.xpose.msra.mxu0 0.0
    %1157 = vmatprep.subr.mxu0 0.0
    %1158 = vmatpush1.xpose.msra.mxu0 0.0
    %1159 = vmatprep.subr.mxu0 0.0
    %1160 = vmatpush1.xpose.msra.mxu0 0.0
    %1161 = vmatprep.subr.mxu0 0.0
    %1162 = vmatpush1.xpose.msra.mxu0 0.0
    %1163 = vmatprep.subr.mxu0 0.0
    %1164 = vmatpush1.xpose.msra.mxu0 0.0
    %1165 = vmatprep.subr.mxu0 0.0
    %1166 = vmatpush1.xpose.msra.mxu0 0.0
    %1167 = vmatprep.mubr.f32.mxu0 0.0
    %1168 = vmatmul.mubr.f32.gmra.mrb[0].mxu0 %v1095
    %v1169 = vpop.f32.mrb[0].mxu0
    %v1170 = vadd.f32 0.0, %v1169
    %v1171 = vpop.f32.mrb[0].mxu0
    %1172 = vmatprep.mubr.f32.mxu0 0.0
    %1173 = vmatmul.mubr.f32.gmra.mrb[0].mxu0 %v1097
    %v1174 = vpop.f32.mrb[0].mxu0
    %v1175 = vadd.f32 0.0, %v1174
    %v1176 = vpop.f32.mrb[0].mxu0
    %1177 = vdwg.mxu0
    %v1178 = vsel %vm348, %v1170, -inf
    %1179 = vmax.xlane.f32.xlu0 %v1178
    %v1180 = vpop.xlane.xlu0 %1179
    %v1181 = vsel %vm348, %v1175, -inf
    %1182 = vmax.xlane.f32.xlu0 %v1181
    %v1183 = vpop.xlane.xlu0 %1182
    %v1184 = vsub.f32 %v1170, %v1180
    %v1185 = vsub.f32 %v1175, %v1183
    %v1186 = vmul.f32 %v1184, 1.442695
    %v1187 = vpow.pop %v1186
    %v1188 = vmul.f32 %v1185, 1.442695
    %v1189 = vpow.pop %v1188
    %v1190 = vsel %vm348, %v1187, 0.0
    %1191 = vadd.xlane.f32.xlu0 %v1190
    %v1192 = vpop.xlane.xlu0 %1191
    %v1193 = vsel %vm348, %v1189, 0.0
    %1194 = vadd.xlane.f32.xlu0 %v1193
    %v1195 = vpop.xlane.xlu0 %1194
    %v1196 = vrcp.pop %v1192
    %v1197 = vrcp.pop %v1195
    %v1198 = vmul.f32 %v1187, %v1196
    %v1199 = vmul.f32 %v1189, %v1197
    %1200 = vrot.lane.b32.xlu0 %v250, 64
    %v1201 = vpop.permute.xlu0 %1200
    %1202 = vrot.lane.b32.xlu0 %v255, 64
    %v1203 = vpop.permute.xlu0 %1202
    %v1207 = vsel %vm348, %v1198, 0
    %v1210 = vsel %vm348, %v1199, 0
    %1212 = vmatprep.subr.mxu0 0.0
    %1213 = vmatpush1.msra.mxu0 %v1201
    %1214 = vmatprep.subr.mxu0 0.0
    %1215 = vmatpush1.msra.mxu0 %v1203
    %1216 = vmatprep.subr.mxu0 0.0
    %1217 = vmatpush1.msra.mxu0 0.0
    %1218 = vmatprep.subr.mxu0 0.0
    %1219 = vmatpush1.msra.mxu0 0.0
    %1220 = vmatprep.subr.mxu0 0.0
    %1221 = vmatpush1.msra.mxu0 0.0
    %1222 = vmatprep.subr.mxu0 0.0
    %1223 = vmatpush1.msra.mxu0 0.0
    %1224 = vmatprep.subr.mxu0 0.0
    %1225 = vmatpush1.msra.mxu0 0.0
    %1226 = vmatprep.subr.mxu0 0.0
    %1227 = vmatpush1.msra.mxu0 0.0
    %1228 = vmatprep.subr.mxu0 0.0
    %1229 = vmatpush1.msra.mxu0 0.0
    %1230 = vmatprep.subr.mxu0 0.0
    %1231 = vmatpush1.msra.mxu0 0.0
    %1232 = vmatprep.subr.mxu0 0.0
    %1233 = vmatpush1.msra.mxu0 0.0
    %1234 = vmatprep.subr.mxu0 0.0
    %1235 = vmatpush1.msra.mxu0 0.0
    %1236 = vmatprep.subr.mxu0 0.0
    %1237 = vmatpush1.msra.mxu0 0.0
    %1238 = vmatprep.subr.mxu0 0.0
    %1239 = vmatpush1.msra.mxu0 0.0
    %1240 = vmatprep.subr.mxu0 0.0
    %1241 = vmatpush1.msra.mxu0 0.0
    %1242 = vmatprep.subr.mxu0 0.0
    %1243 = vmatpush1.msra.mxu0 0.0
    %1244 = vmatprep.subr.mxu0 0.0
    %1245 = vmatpush1.msra.mxu0 0.0
    %1246 = vmatprep.subr.mxu0 0.0
    %1247 = vmatpush1.msra.mxu0 0.0
    %1248 = vmatprep.subr.mxu0 0.0
    %1249 = vmatpush1.msra.mxu0 0.0
    %1250 = vmatprep.subr.mxu0 0.0
    %1251 = vmatpush1.msra.mxu0 0.0
    %1252 = vmatprep.subr.mxu0 0.0
    %1253 = vmatpush1.msra.mxu0 0.0
    %1254 = vmatprep.subr.mxu0 0.0
    %1255 = vmatpush1.msra.mxu0 0.0
    %1256 = vmatprep.subr.mxu0 0.0
    %1257 = vmatpush1.msra.mxu0 0.0
    %1258 = vmatprep.subr.mxu0 0.0
    %1259 = vmatpush1.msra.mxu0 0.0
    %1260 = vmatprep.subr.mxu0 0.0
    %1261 = vmatpush1.msra.mxu0 0.0
    %1262 = vmatprep.subr.mxu0 0.0
    %1263 = vmatpush1.msra.mxu0 0.0
    %1264 = vmatprep.subr.mxu0 0.0
    %1265 = vmatpush1.msra.mxu0 0.0
    %1266 = vmatprep.subr.mxu0 0.0
    %1267 = vmatpush1.msra.mxu0 0.0
    %1268 = vmatprep.subr.mxu0 0.0
    %1269 = vmatpush1.msra.mxu0 0.0
    %1270 = vmatprep.subr.mxu0 0.0
    %1271 = vmatpush1.msra.mxu0 0.0
    %1272 = vmatprep.subr.mxu0 0.0
    %1273 = vmatpush1.msra.mxu0 0.0
    %1274 = vmatprep.subr.mxu0 0.0
    %1275 = vmatpush1.msra.mxu0 0.0
    %1276 = vmatprep.mubr.f32.mxu0 0.0
    %1277 = vmatmul.mubr.f32.gmra.mrb[0].mxu0 %v1207
    %v1278 = vpop.f32.mrb[0].mxu0
    %v1279 = vadd.f32 0.0, %v1278
    %v1280 = vpop.f32.mrb[0].mxu0
    %1281 = vmatprep.mubr.f32.mxu0 0.0
    %1282 = vmatmul.mubr.f32.gmra.mrb[0].mxu0 %v1210
    %v1283 = vpop.f32.mrb[0].mxu0
    %v1284 = vadd.f32 0.0, %v1283
    %v1285 = vpop.f32.mrb[0].mxu0
    %1286 = vdwg.mxu0
    %1287 = vrot.lane.b32.xlu0 %v250, 120
    %v1288 = vpop.permute.xlu0 %1287
    %1289 = vrot.lane.b32.xlu0 %v255, 120
    %v1290 = vpop.permute.xlu0 %1289
    %1291 = vrot.lane.b32.xlu0 %v250, 88
    %v1292 = vpop.permute.xlu0 %1291
    %1293 = vrot.lane.b32.xlu0 %v255, 88
    %v1294 = vpop.permute.xlu0 %1293
    %v1295 = vsel %vm264, %v1288, 0
    %v1297 = vsel %vm264, %v1290, 0
    %v1299 = vsel %vm264, %v1292, 0
    %v1301 = vsel %vm264, %v1294, 0
    %1303 = vmatprep.subr.mxu0 0.0
    %1304 = vmatpush1.xpose.msra.mxu0 %v1299
    %1305 = vmatprep.subr.mxu0 0.0
    %1306 = vmatpush1.xpose.msra.mxu0 %v1301
    %1307 = vmatprep.subr.mxu0 0.0
    %1308 = vmatpush1.xpose.msra.mxu0 0.0
    %1309 = vmatprep.subr.mxu0 0.0
    %1310 = vmatpush1.xpose.msra.mxu0 0.0
    %1311 = vmatprep.subr.mxu0 0.0
    %1312 = vmatpush1.xpose.msra.mxu0 0.0
    %1313 = vmatprep.subr.mxu0 0.0
    %1314 = vmatpush1.xpose.msra.mxu0 0.0
    %1315 = vmatprep.subr.mxu0 0.0
    %1316 = vmatpush1.xpose.msra.mxu0 0.0
    %1317 = vmatprep.subr.mxu0 0.0
    %1318 = vmatpush1.xpose.msra.mxu0 0.0
    %1319 = vmatprep.subr.mxu0 0.0
    %1320 = vmatpush1.xpose.msra.mxu0 0.0
    %1321 = vmatprep.subr.mxu0 0.0
    %1322 = vmatpush1.xpose.msra.mxu0 0.0
    %1323 = vmatprep.subr.mxu0 0.0
    %1324 = vmatpush1.xpose.msra.mxu0 0.0
    %1325 = vmatprep.subr.mxu0 0.0
    %1326 = vmatpush1.xpose.msra.mxu0 0.0
    %1327 = vmatprep.subr.mxu0 0.0
    %1328 = vmatpush1.xpose.msra.mxu0 0.0
    %1329 = vmatprep.subr.mxu0 0.0
    %1330 = vmatpush1.xpose.msra.mxu0 0.0
    %1331 = vmatprep.subr.mxu0 0.0
    %1332 = vmatpush1.xpose.msra.mxu0 0.0
    %1333 = vmatprep.subr.mxu0 0.0
    %1334 = vmatpush1.xpose.msra.mxu0 0.0
    %1335 = vmatprep.subr.mxu0 0.0
    %1336 = vmatpush1.xpose.msra.mxu0 0.0
    %1337 = vmatprep.subr.mxu0 0.0
    %1338 = vmatpush1.xpose.msra.mxu0 0.0
    %1339 = vmatprep.subr.mxu0 0.0
    %1340 = vmatpush1.xpose.msra.mxu0 0.0
    %1341 = vmatprep.subr.mxu0 0.0
    %1342 = vmatpush1.xpose.msra.mxu0 0.0
    %1343 = vmatprep.subr.mxu0 0.0
    %1344 = vmatpush1.xpose.msra.mxu0 0.0
    %1345 = vmatprep.subr.mxu0 0.0
    %1346 = vmatpush1.xpose.msra.mxu0 0.0
    %1347 = vmatprep.subr.mxu0 0.0
    %1348 = vmatpush1.xpose.msra.mxu0 0.0
    %1349 = vmatprep.subr.mxu0 0.0
    %1350 = vmatpush1.xpose.msra.mxu0 0.0
    %1351 = vmatprep.subr.mxu0 0.0
    %1352 = vmatpush1.xpose.msra.mxu0 0.0
    %1353 = vmatprep.subr.mxu0 0.0
    %1354 = vmatpush1.xpose.msra.mxu0 0.0
    %1355 = vmatprep.subr.mxu0 0.0
    %1356 = vmatpush1.xpose.msra.mxu0 0.0
    %1357 = vmatprep.subr.mxu0 0.0
    %1358 = vmatpush1.xpose.msra.mxu0 0.0
    %1359 = vmatprep.subr.mxu0 0.0
    %1360 = vmatpush1.xpose.msra.mxu0 0.0
    %1361 = vmatprep.subr.mxu0 0.0
    %1362 = vmatpush1.xpose.msra.mxu0 0.0
    %1363 = vmatprep.subr.mxu0 0.0
    %1364 = vmatpush1.xpose.msra.mxu0 0.0
    %1365 = vmatprep.subr.mxu0 0.0
    %1366 = vmatpush1.xpose.msra.mxu0 0.0
    %1367 = vmatprep.mubr.f32.mxu0 0.0
    %1368 = vmatmul.mubr.f32.gmra.mrb[0].mxu0 %v1295
    %v1369 = vpop.f32.mrb[0].mxu0
    %v1370 = vadd.f32 0.0, %v1369
    %v1371 = vpop.f32.mrb[0].mxu0
    %1372 = vmatprep.mubr.f32.mxu0 0.0
    %1373 = vmatmul.mubr.f32.gmra.mrb[0].mxu0 %v1297
    %v1374 = vpop.f32.mrb[0].mxu0
    %v1375 = vadd.f32 0.0, %v1374
    %v1376 = vpop.f32.mrb[0].mxu0
    %1377 = vdwg.mxu0
    %v1378 = vsel %vm348, %v1370, -inf
    %1379 = vmax.xlane.f32.xlu0 %v1378
    %v1380 = vpop.xlane.xlu0 %1379
    %v1381 = vsel %vm348, %v1375, -inf
    %1382 = vmax.xlane.f32.xlu0 %v1381
    %v1383 = vpop.xlane.xlu0 %1382
    %v1384 = vsub.f32 %v1370, %v1380
    %v1385 = vsub.f32 %v1375, %v1383
    %v1386 = vmul.f32 %v1384, 1.442695
    %v1387 = vpow.pop %v1386
    %v1388 = vmul.f32 %v1385, 1.442695
    %v1389 = vpow.pop %v1388
    %v1390 = vsel %vm348, %v1387, 0.0
    %1391 = vadd.xlane.f32.xlu0 %v1390
    %v1392 = vpop.xlane.xlu0 %1391
    %v1393 = vsel %vm348, %v1389, 0.0
    %1394 = vadd.xlane.f32.xlu0 %v1393
    %v1395 = vpop.xlane.xlu0 %1394
    %v1396 = vrcp.pop %v1392
    %v1397 = vrcp.pop %v1395
    %v1398 = vmul.f32 %v1387, %v1396
    %v1399 = vmul.f32 %v1389, %v1397
    %1400 = vrot.lane.b32.xlu0 %v250, 56
    %v1401 = vpop.permute.xlu0 %1400
    %1402 = vrot.lane.b32.xlu0 %v255, 56
    %v1403 = vpop.permute.xlu0 %1402
    %v1407 = vsel %vm348, %v1398, 0
    %v1410 = vsel %vm348, %v1399, 0
    %1412 = vmatprep.subr.mxu0 0.0
    %1413 = vmatpush1.msra.mxu0 %v1401
    %1414 = vmatprep.subr.mxu0 0.0
    %1415 = vmatpush1.msra.mxu0 %v1403
    %1416 = vmatprep.subr.mxu0 0.0
    %1417 = vmatpush1.msra.mxu0 0.0
    %1418 = vmatprep.subr.mxu0 0.0
    %1419 = vmatpush1.msra.mxu0 0.0
    %1420 = vmatprep.subr.mxu0 0.0
    %1421 = vmatpush1.msra.mxu0 0.0
    %1422 = vmatprep.subr.mxu0 0.0
    %1423 = vmatpush1.msra.mxu0 0.0
    %1424 = vmatprep.subr.mxu0 0.0
    %1425 = vmatpush1.msra.mxu0 0.0
    %1426 = vmatprep.subr.mxu0 0.0
    %1427 = vmatpush1.msra.mxu0 0.0
    %1428 = vmatprep.subr.mxu0 0.0
    %1429 = vmatpush1.msra.mxu0 0.0
    %1430 = vmatprep.subr.mxu0 0.0
    %1431 = vmatpush1.msra.mxu0 0.0
    %1432 = vmatprep.subr.mxu0 0.0
    %1433 = vmatpush1.msra.mxu0 0.0
    %1434 = vmatprep.subr.mxu0 0.0
    %1435 = vmatpush1.msra.mxu0 0.0
    %1436 = vmatprep.subr.mxu0 0.0
    %1437 = vmatpush1.msra.mxu0 0.0
    %1438 = vmatprep.subr.mxu0 0.0
    %1439 = vmatpush1.msra.mxu0 0.0
    %1440 = vmatprep.subr.mxu0 0.0
    %1441 = vmatpush1.msra.mxu0 0.0
    %1442 = vmatprep.subr.mxu0 0.0
    %1443 = vmatpush1.msra.mxu0 0.0
    %1444 = vmatprep.subr.mxu0 0.0
    %1445 = vmatpush1.msra.mxu0 0.0
    %1446 = vmatprep.subr.mxu0 0.0
    %1447 = vmatpush1.msra.mxu0 0.0
    %1448 = vmatprep.subr.mxu0 0.0
    %1449 = vmatpush1.msra.mxu0 0.0
    %1450 = vmatprep.subr.mxu0 0.0
    %1451 = vmatpush1.msra.mxu0 0.0
    %1452 = vmatprep.subr.mxu0 0.0
    %1453 = vmatpush1.msra.mxu0 0.0
    %1454 = vmatprep.subr.mxu0 0.0
    %1455 = vmatpush1.msra.mxu0 0.0
    %1456 = vmatprep.subr.mxu0 0.0
    %1457 = vmatpush1.msra.mxu0 0.0
    %1458 = vmatprep.subr.mxu0 0.0
    %1459 = vmatpush1.msra.mxu0 0.0
    %1460 = vmatprep.subr.mxu0 0.0
    %1461 = vmatpush1.msra.mxu0 0.0
    %1462 = vmatprep.subr.mxu0 0.0
    %1463 = vmatpush1.msra.mxu0 0.0
    %1464 = vmatprep.subr.mxu0 0.0
    %1465 = vmatpush1.msra.mxu0 0.0
    %1466 = vmatprep.subr.mxu0 0.0
    %1467 = vmatpush1.msra.mxu0 0.0
    %1468 = vmatprep.subr.mxu0 0.0
    %1469 = vmatpush1.msra.mxu0 0.0
    %1470 = vmatprep.subr.mxu0 0.0
    %1471 = vmatpush1.msra.mxu0 0.0
    %1472 = vmatprep.subr.mxu0 0.0
    %1473 = vmatpush1.msra.mxu0 0.0
    %1474 = vmatprep.subr.mxu0 0.0
    %1475 = vmatpush1.msra.mxu0 0.0
    %1476 = vmatprep.mubr.f32.mxu0 0.0
    %1477 = vmatmul.mubr.f32.gmra.mrb[0].mxu0 %v1407
    %v1478 = vpop.f32.mrb[0].mxu0
    %v1479 = vadd.f32 0.0, %v1478
    %v1480 = vpop.f32.mrb[0].mxu0
    %1481 = vmatprep.mubr.f32.mxu0 0.0
    %1482 = vmatmul.mubr.f32.gmra.mrb[0].mxu0 %v1410
    %v1483 = vpop.f32.mrb[0].mxu0
    %v1484 = vadd.f32 0.0, %v1483
    %v1485 = vpop.f32.mrb[0].mxu0
    %1486 = vdwg.mxu0
    %1487 = vrot.lane.b32.xlu0 %v250, 112
    %v1488 = vpop.permute.xlu0 %1487
    %1489 = vrot.lane.b32.xlu0 %v255, 112
    %v1490 = vpop.permute.xlu0 %1489
    %1491 = vrot.lane.b32.xlu0 %v250, 80
    %v1492 = vpop.permute.xlu0 %1491
    %1493 = vrot.lane.b32.xlu0 %v255, 80
    %v1494 = vpop.permute.xlu0 %1493
    %v1495 = vsel %vm264, %v1488, 0
    %v1497 = vsel %vm264, %v1490, 0
    %v1499 = vsel %vm264, %v1492, 0
    %v1501 = vsel %vm264, %v1494, 0
    %1503 = vmatprep.subr.mxu0 0.0
    %1504 = vmatpush1.xpose.msra.mxu0 %v1499
    %1505 = vmatprep.subr.mxu0 0.0
    %1506 = vmatpush1.xpose.msra.mxu0 %v1501
    %1507 = vmatprep.subr.mxu0 0.0
    %1508 = vmatpush1.xpose.msra.mxu0 0.0
    %1509 = vmatprep.subr.mxu0 0.0
    %1510 = vmatpush1.xpose.msra.mxu0 0.0
    %1511 = vmatprep.subr.mxu0 0.0
    %1512 = vmatpush1.xpose.msra.mxu0 0.0
    %1513 = vmatprep.subr.mxu0 0.0
    %1514 = vmatpush1.xpose.msra.mxu0 0.0
    %1515 = vmatprep.subr.mxu0 0.0
    %1516 = vmatpush1.xpose.msra.mxu0 0.0
    %1517 = vmatprep.subr.mxu0 0.0
    %1518 = vmatpush1.xpose.msra.mxu0 0.0
    %1519 = vmatprep.subr.mxu0 0.0
    %1520 = vmatpush1.xpose.msra.mxu0 0.0
    %1521 = vmatprep.subr.mxu0 0.0
    %1522 = vmatpush1.xpose.msra.mxu0 0.0
    %1523 = vmatprep.subr.mxu0 0.0
    %1524 = vmatpush1.xpose.msra.mxu0 0.0
    %1525 = vmatprep.subr.mxu0 0.0
    %1526 = vmatpush1.xpose.msra.mxu0 0.0
    %1527 = vmatprep.subr.mxu0 0.0
    %1528 = vmatpush1.xpose.msra.mxu0 0.0
    %1529 = vmatprep.subr.mxu0 0.0
    %1530 = vmatpush1.xpose.msra.mxu0 0.0
    %1531 = vmatprep.subr.mxu0 0.0
    %1532 = vmatpush1.xpose.msra.mxu0 0.0
    %1533 = vmatprep.subr.mxu0 0.0
    %1534 = vmatpush1.xpose.msra.mxu0 0.0
    %1535 = vmatprep.subr.mxu0 0.0
    %1536 = vmatpush1.xpose.msra.mxu0 0.0
    %1537 = vmatprep.subr.mxu0 0.0
    %1538 = vmatpush1.xpose.msra.mxu0 0.0
    %1539 = vmatprep.subr.mxu0 0.0
    %1540 = vmatpush1.xpose.msra.mxu0 0.0
    %1541 = vmatprep.subr.mxu0 0.0
    %1542 = vmatpush1.xpose.msra.mxu0 0.0
    %1543 = vmatprep.subr.mxu0 0.0
    %1544 = vmatpush1.xpose.msra.mxu0 0.0
    %1545 = vmatprep.subr.mxu0 0.0
    %1546 = vmatpush1.xpose.msra.mxu0 0.0
    %1547 = vmatprep.subr.mxu0 0.0
    %1548 = vmatpush1.xpose.msra.mxu0 0.0
    %1549 = vmatprep.subr.mxu0 0.0
    %1550 = vmatpush1.xpose.msra.mxu0 0.0
    %1551 = vmatprep.subr.mxu0 0.0
    %1552 = vmatpush1.xpose.msra.mxu0 0.0
    %1553 = vmatprep.subr.mxu0 0.0
    %1554 = vmatpush1.xpose.msra.mxu0 0.0
    %1555 = vmatprep.subr.mxu0 0.0
    %1556 = vmatpush1.xpose.msra.mxu0 0.0
    %1557 = vmatprep.subr.mxu0 0.0
    %1558 = vmatpush1.xpose.msra.mxu0 0.0
    %1559 = vmatprep.subr.mxu0 0.0
    %1560 = vmatpush1.xpose.msra.mxu0 0.0
    %1561 = vmatprep.subr.mxu0 0.0
    %1562 = vmatpush1.xpose.msra.mxu0 0.0
    %1563 = vmatprep.subr.mxu0 0.0
    %1564 = vmatpush1.xpose.msra.mxu0 0.0
    %1565 = vmatprep.subr.mxu0 0.0
    %1566 = vmatpush1.xpose.msra.mxu0 0.0
    %1567 = vmatprep.mubr.f32.mxu0 0.0
    %1568 = vmatmul.mubr.f32.gmra.mrb[0].mxu0 %v1495
    %v1569 = vpop.f32.mrb[0].mxu0
    %v1570 = vadd.f32 0.0, %v1569
    %v1571 = vpop.f32.mrb[0].mxu0
    %1572 = vmatprep.mubr.f32.mxu0 0.0
    %1573 = vmatmul.mubr.f32.gmra.mrb[0].mxu0 %v1497
    %v1574 = vpop.f32.mrb[0].mxu0
    %v1575 = vadd.f32 0.0, %v1574
    %v1576 = vpop.f32.mrb[0].mxu0
    %1577 = vdwg.mxu0
    %v1578 = vsel %vm348, %v1570, -inf
    %1579 = vmax.xlane.f32.xlu0 %v1578
    %v1580 = vpop.xlane.xlu0 %1579
    %v1581 = vsel %vm348, %v1575, -inf
    %1582 = vmax.xlane.f32.xlu0 %v1581
    %v1583 = vpop.xlane.xlu0 %1582
    %v1584 = vsub.f32 %v1570, %v1580
    %v1585 = vsub.f32 %v1575, %v1583
    %v1586 = vmul.f32 %v1584, 1.442695
    %v1587 = vpow.pop %v1586
    %v1588 = vmul.f32 %v1585, 1.442695
    %v1589 = vpow.pop %v1588
    %v1590 = vsel %vm348, %v1587, 0.0
    %1591 = vadd.xlane.f32.xlu0 %v1590
    %v1592 = vpop.xlane.xlu0 %1591
    %v1593 = vsel %vm348, %v1589, 0.0
    %1594 = vadd.xlane.f32.xlu0 %v1593
    %v1595 = vpop.xlane.xlu0 %1594
    %v1596 = vrcp.pop %v1592
    %v1597 = vrcp.pop %v1595
    %v1598 = vmul.f32 %v1587, %v1596
    %v1599 = vmul.f32 %v1589, %v1597
    %1600 = vrot.lane.b32.xlu0 %v250, 48
    %v1601 = vpop.permute.xlu0 %1600
    %1602 = vrot.lane.b32.xlu0 %v255, 48
    %v1603 = vpop.permute.xlu0 %1602
    %v1607 = vsel %vm348, %v1598, 0
    %v1610 = vsel %vm348, %v1599, 0
    %1612 = vmatprep.subr.mxu0 0.0
    %1613 = vmatpush1.msra.mxu0 %v1601
    %1614 = vmatprep.subr.mxu0 0.0
    %1615 = vmatpush1.msra.mxu0 %v1603
    %1616 = vmatprep.subr.mxu0 0.0
    %1617 = vmatpush1.msra.mxu0 0.0
    %1618 = vmatprep.subr.mxu0 0.0
    %1619 = vmatpush1.msra.mxu0 0.0
    %1620 = vmatprep.subr.mxu0 0.0
    %1621 = vmatpush1.msra.mxu0 0.0
    %1622 = vmatprep.subr.mxu0 0.0
    %1623 = vmatpush1.msra.mxu0 0.0
    %1624 = vmatprep.subr.mxu0 0.0
    %1625 = vmatpush1.msra.mxu0 0.0
    %1626 = vmatprep.subr.mxu0 0.0
    %1627 = vmatpush1.msra.mxu0 0.0
    %1628 = vmatprep.subr.mxu0 0.0
    %1629 = vmatpush1.msra.mxu0 0.0
    %1630 = vmatprep.subr.mxu0 0.0
    %1631 = vmatpush1.msra.mxu0 0.0
    %1632 = vmatprep.subr.mxu0 0.0
    %1633 = vmatpush1.msra.mxu0 0.0
    %1634 = vmatprep.subr.mxu0 0.0
    %1635 = vmatpush1.msra.mxu0 0.0
    %1636 = vmatprep.subr.mxu0 0.0
    %1637 = vmatpush1.msra.mxu0 0.0
    %1638 = vmatprep.subr.mxu0 0.0
    %1639 = vmatpush1.msra.mxu0 0.0
    %1640 = vmatprep.subr.mxu0 0.0
    %1641 = vmatpush1.msra.mxu0 0.0
    %1642 = vmatprep.subr.mxu0 0.0
    %1643 = vmatpush1.msra.mxu0 0.0
    %1644 = vmatprep.subr.mxu0 0.0
    %1645 = vmatpush1.msra.mxu0 0.0
    %1646 = vmatprep.subr.mxu0 0.0
    %1647 = vmatpush1.msra.mxu0 0.0
    %1648 = vmatprep.subr.mxu0 0.0
    %1649 = vmatpush1.msra.mxu0 0.0
    %1650 = vmatprep.subr.mxu0 0.0
    %1651 = vmatpush1.msra.mxu0 0.0
    %1652 = vmatprep.subr.mxu0 0.0
    %1653 = vmatpush1.msra.mxu0 0.0
    %1654 = vmatprep.subr.mxu0 0.0
    %1655 = vmatpush1.msra.mxu0 0.0
    %1656 = vmatprep.subr.mxu0 0.0
    %1657 = vmatpush1.msra.mxu0 0.0
    %1658 = vmatprep.subr.mxu0 0.0
    %1659 = vmatpush1.msra.mxu0 0.0
    %1660 = vmatprep.subr.mxu0 0.0
    %1661 = vmatpush1.msra.mxu0 0.0
    %1662 = vmatprep.subr.mxu0 0.0
    %1663 = vmatpush1.msra.mxu0 0.0
    %1664 = vmatprep.subr.mxu0 0.0
    %1665 = vmatpush1.msra.mxu0 0.0
    %1666 = vmatprep.subr.mxu0 0.0
    %1667 = vmatpush1.msra.mxu0 0.0
    %1668 = vmatprep.subr.mxu0 0.0
    %1669 = vmatpush1.msra.mxu0 0.0
    %1670 = vmatprep.subr.mxu0 0.0
    %1671 = vmatpush1.msra.mxu0 0.0
    %1672 = vmatprep.subr.mxu0 0.0
    %1673 = vmatpush1.msra.mxu0 0.0
    %1674 = vmatprep.subr.mxu0 0.0
    %1675 = vmatpush1.msra.mxu0 0.0
    %1676 = vmatprep.mubr.f32.mxu0 0.0
    %1677 = vmatmul.mubr.f32.gmra.mrb[0].mxu0 %v1607
    %v1678 = vpop.f32.mrb[0].mxu0
    %v1679 = vadd.f32 0.0, %v1678
    %v1680 = vpop.f32.mrb[0].mxu0
    %1681 = vmatprep.mubr.f32.mxu0 0.0
    %1682 = vmatmul.mubr.f32.gmra.mrb[0].mxu0 %v1610
    %v1683 = vpop.f32.mrb[0].mxu0
    %v1684 = vadd.f32 0.0, %v1683
    %v1685 = vpop.f32.mrb[0].mxu0
    %1686 = vdwg.mxu0
    %1687 = vrot.lane.b32.xlu0 %v250, 104
    %v1688 = vpop.permute.xlu0 %1687
    %1689 = vrot.lane.b32.xlu0 %v255, 104
    %v1690 = vpop.permute.xlu0 %1689
    %1691 = vrot.lane.b32.xlu0 %v250, 72
    %v1692 = vpop.permute.xlu0 %1691
    %1693 = vrot.lane.b32.xlu0 %v255, 72
    %v1694 = vpop.permute.xlu0 %1693
    %v1695 = vsel %vm264, %v1688, 0
    %v1697 = vsel %vm264, %v1690, 0
    %v1699 = vsel %vm264, %v1692, 0
    %v1701 = vsel %vm264, %v1694, 0
    %1703 = vmatprep.subr.mxu0 0.0
    %1704 = vmatpush1.xpose.msra.mxu0 %v1699
    %1705 = vmatprep.subr.mxu0 0.0
    %1706 = vmatpush1.xpose.msra.mxu0 %v1701
    %1707 = vmatprep.subr.mxu0 0.0
    %1708 = vmatpush1.xpose.msra.mxu0 0.0
    %1709 = vmatprep.subr.mxu0 0.0
    %1710 = vmatpush1.xpose.msra.mxu0 0.0
    %1711 = vmatprep.subr.mxu0 0.0
    %1712 = vmatpush1.xpose.msra.mxu0 0.0
    %1713 = vmatprep.subr.mxu0 0.0
    %1714 = vmatpush1.xpose.msra.mxu0 0.0
    %1715 = vmatprep.subr.mxu0 0.0
    %1716 = vmatpush1.xpose.msra.mxu0 0.0
    %1717 = vmatprep.subr.mxu0 0.0
    %1718 = vmatpush1.xpose.msra.mxu0 0.0
    %1719 = vmatprep.subr.mxu0 0.0
    %1720 = vmatpush1.xpose.msra.mxu0 0.0
    %1721 = vmatprep.subr.mxu0 0.0
    %1722 = vmatpush1.xpose.msra.mxu0 0.0
    %1723 = vmatprep.subr.mxu0 0.0
    %1724 = vmatpush1.xpose.msra.mxu0 0.0
    %1725 = vmatprep.subr.mxu0 0.0
    %1726 = vmatpush1.xpose.msra.mxu0 0.0
    %1727 = vmatprep.subr.mxu0 0.0
    %1728 = vmatpush1.xpose.msra.mxu0 0.0
    %1729 = vmatprep.subr.mxu0 0.0
    %1730 = vmatpush1.xpose.msra.mxu0 0.0
    %1731 = vmatprep.subr.mxu0 0.0
    %1732 = vmatpush1.xpose.msra.mxu0 0.0
    %1733 = vmatprep.subr.mxu0 0.0
    %1734 = vmatpush1.xpose.msra.mxu0 0.0
    %1735 = vmatprep.subr.mxu0 0.0
    %1736 = vmatpush1.xpose.msra.mxu0 0.0
    %1737 = vmatprep.subr.mxu0 0.0
    %1738 = vmatpush1.xpose.msra.mxu0 0.0
    %1739 = vmatprep.subr.mxu0 0.0
    %1740 = vmatpush1.xpose.msra.mxu0 0.0
    %1741 = vmatprep.subr.mxu0 0.0
    %1742 = vmatpush1.xpose.msra.mxu0 0.0
    %1743 = vmatprep.subr.mxu0 0.0
    %1744 = vmatpush1.xpose.msra.mxu0 0.0
    %1745 = vmatprep.subr.mxu0 0.0
    %1746 = vmatpush1.xpose.msra.mxu0 0.0
    %1747 = vmatprep.subr.mxu0 0.0
    %1748 = vmatpush1.xpose.msra.mxu0 0.0
    %1749 = vmatprep.subr.mxu0 0.0
    %1750 = vmatpush1.xpose.msra.mxu0 0.0
    %1751 = vmatprep.subr.mxu0 0.0
    %1752 = vmatpush1.xpose.msra.mxu0 0.0
    %1753 = vmatprep.subr.mxu0 0.0
    %1754 = vmatpush1.xpose.msra.mxu0 0.0
    %1755 = vmatprep.subr.mxu0 0.0
    %1756 = vmatpush1.xpose.msra.mxu0 0.0
    %1757 = vmatprep.subr.mxu0 0.0
    %1758 = vmatpush1.xpose.msra.mxu0 0.0
    %1759 = vmatprep.subr.mxu0 0.0
    %1760 = vmatpush1.xpose.msra.mxu0 0.0
    %1761 = vmatprep.subr.mxu0 0.0
    %1762 = vmatpush1.xpose.msra.mxu0 0.0
    %1763 = vmatprep.subr.mxu0 0.0
    %1764 = vmatpush1.xpose.msra.mxu0 0.0
    %1765 = vmatprep.subr.mxu0 0.0
    %1766 = vmatpush1.xpose.msra.mxu0 0.0
    %1767 = vmatprep.mubr.f32.mxu0 0.0
    %1768 = vmatmul.mubr.f32.gmra.mrb[0].mxu0 %v1695
    %v1769 = vpop.f32.mrb[0].mxu0
    %v1770 = vadd.f32 0.0, %v1769
    %v1771 = vpop.f32.mrb[0].mxu0
    %1772 = vmatprep.mubr.f32.mxu0 0.0
    %1773 = vmatmul.mubr.f32.gmra.mrb[0].mxu0 %v1697
    %v1774 = vpop.f32.mrb[0].mxu0
    %v1775 = vadd.f32 0.0, %v1774
    %v1776 = vpop.f32.mrb[0].mxu0
    %1777 = vdwg.mxu0
    %v1778 = vsel %vm348, %v1770, -inf
    %1779 = vmax.xlane.f32.xlu0 %v1778
    %v1780 = vpop.xlane.xlu0 %1779
    %v1781 = vsel %vm348, %v1775, -inf
    %1782 = vmax.xlane.f32.xlu0 %v1781
    %v1783 = vpop.xlane.xlu0 %1782
    %v1784 = vsub.f32 %v1770, %v1780
    %v1785 = vsub.f32 %v1775, %v1783
    %v1786 = vmul.f32 %v1784, 1.442695
    %v1787 = vpow.pop %v1786
    %v1788 = vmul.f32 %v1785, 1.442695
    %v1789 = vpow.pop %v1788
    %v1790 = vsel %vm348, %v1787, 0.0
    %1791 = vadd.xlane.f32.xlu0 %v1790
    %v1792 = vpop.xlane.xlu0 %1791
    %v1793 = vsel %vm348, %v1789, 0.0
    %1794 = vadd.xlane.f32.xlu0 %v1793
    %v1795 = vpop.xlane.xlu0 %1794
    %v1796 = vrcp.pop %v1792
    %v1797 = vrcp.pop %v1795
    %v1798 = vmul.f32 %v1787, %v1796
    %v1799 = vmul.f32 %v1789, %v1797
    %1800 = vrot.lane.b32.xlu0 %v250, 40
    %v1801 = vpop.permute.xlu0 %1800
    %1802 = vrot.lane.b32.xlu0 %v255, 40
    %v1803 = vpop.permute.xlu0 %1802
    %v1807 = vsel %vm348, %v1798, 0
    %v1810 = vsel %vm348, %v1799, 0
    %1812 = vmatprep.subr.mxu0 0.0
    %1813 = vmatpush1.msra.mxu0 %v1801
    %1814 = vmatprep.subr.mxu0 0.0
    %1815 = vmatpush1.msra.mxu0 %v1803
    %1816 = vmatprep.subr.mxu0 0.0
    %1817 = vmatpush1.msra.mxu0 0.0
    %1818 = vmatprep.subr.mxu0 0.0
    %1819 = vmatpush1.msra.mxu0 0.0
    %1820 = vmatprep.subr.mxu0 0.0
    %1821 = vmatpush1.msra.mxu0 0.0
    %1822 = vmatprep.subr.mxu0 0.0
    %1823 = vmatpush1.msra.mxu0 0.0
    %1824 = vmatprep.subr.mxu0 0.0
    %1825 = vmatpush1.msra.mxu0 0.0
    %1826 = vmatprep.subr.mxu0 0.0
    %1827 = vmatpush1.msra.mxu0 0.0
    %1828 = vmatprep.subr.mxu0 0.0
    %1829 = vmatpush1.msra.mxu0 0.0
    %1830 = vmatprep.subr.mxu0 0.0
    %1831 = vmatpush1.msra.mxu0 0.0
    %1832 = vmatprep.subr.mxu0 0.0
    %1833 = vmatpush1.msra.mxu0 0.0
    %1834 = vmatprep.subr.mxu0 0.0
    %1835 = vmatpush1.msra.mxu0 0.0
    %1836 = vmatprep.subr.mxu0 0.0
    %1837 = vmatpush1.msra.mxu0 0.0
    %1838 = vmatprep.subr.mxu0 0.0
    %1839 = vmatpush1.msra.mxu0 0.0
    %1840 = vmatprep.subr.mxu0 0.0
    %1841 = vmatpush1.msra.mxu0 0.0
    %1842 = vmatprep.subr.mxu0 0.0
    %1843 = vmatpush1.msra.mxu0 0.0
    %1844 = vmatprep.subr.mxu0 0.0
    %1845 = vmatpush1.msra.mxu0 0.0
    %1846 = vmatprep.subr.mxu0 0.0
    %1847 = vmatpush1.msra.mxu0 0.0
    %1848 = vmatprep.subr.mxu0 0.0
    %1849 = vmatpush1.msra.mxu0 0.0
    %1850 = vmatprep.subr.mxu0 0.0
    %1851 = vmatpush1.msra.mxu0 0.0
    %1852 = vmatprep.subr.mxu0 0.0
    %1853 = vmatpush1.msra.mxu0 0.0
    %1854 = vmatprep.subr.mxu0 0.0
    %1855 = vmatpush1.msra.mxu0 0.0
    %1856 = vmatprep.subr.mxu0 0.0
    %1857 = vmatpush1.msra.mxu0 0.0
    %1858 = vmatprep.subr.mxu0 0.0
    %1859 = vmatpush1.msra.mxu0 0.0
    %1860 = vmatprep.subr.mxu0 0.0
    %1861 = vmatpush1.msra.mxu0 0.0
    %1862 = vmatprep.subr.mxu0 0.0
    %1863 = vmatpush1.msra.mxu0 0.0
    %1864 = vmatprep.subr.mxu0 0.0
    %1865 = vmatpush1.msra.mxu0 0.0
    %1866 = vmatprep.subr.mxu0 0.0
    %1867 = vmatpush1.msra.mxu0 0.0
    %1868 = vmatprep.subr.mxu0 0.0
    %1869 = vmatpush1.msra.mxu0 0.0
    %1870 = vmatprep.subr.mxu0 0.0
    %1871 = vmatpush1.msra.mxu0 0.0
    %1872 = vmatprep.subr.mxu0 0.0
    %1873 = vmatpush1.msra.mxu0 0.0
    %1874 = vmatprep.subr.mxu0 0.0
    %1875 = vmatpush1.msra.mxu0 0.0
    %1876 = vmatprep.mubr.f32.mxu0 0.0
    %1877 = vmatmul.mubr.f32.gmra.mrb[0].mxu0 %v1807
    %v1878 = vpop.f32.mrb[0].mxu0
    %v1879 = vadd.f32 0.0, %v1878
    %v1880 = vpop.f32.mrb[0].mxu0
    %1881 = vmatprep.mubr.f32.mxu0 0.0
    %1882 = vmatmul.mubr.f32.gmra.mrb[0].mxu0 %v1810
    %v1883 = vpop.f32.mrb[0].mxu0
    %v1884 = vadd.f32 0.0, %v1883
    %v1885 = vpop.f32.mrb[0].mxu0
    %1886 = vdwg.mxu0
    %1889 = vrot.lane.b32.xlu0 %v1479, 8
    %v1890 = vpop.permute.xlu0 %1889
    %1891 = vrot.lane.b32.xlu0 %v1484, 8
    %v1892 = vpop.permute.xlu0 %1891
    %1897 = vrot.lane.b32.xlu0 %v1679, 16
    %v1898 = vpop.permute.xlu0 %1897
    %1899 = vrot.lane.b32.xlu0 %v1684, 16
    %v1900 = vpop.permute.xlu0 %1899
    %1905 = vrot.lane.b32.xlu0 %v1879, 24
    %v1906 = vpop.permute.xlu0 %1905
    %1907 = vrot.lane.b32.xlu0 %v1884, 24
    %v1908 = vpop.permute.xlu0 %1907
    %v1911 = vsel %vm264, %v1279, %v1890
    %v1912 = vsel %vm264, %v1284, %v1892
    %v1913 = vsel %vm348, %v1911, %v1898
    %v1914 = vsel %vm348, %v1912, %v1900
    %v1915 = vsel %vm1086, %v1913, %v1906
    %v1916 = vsel %vm1086, %v1914, %v1908
    %v1917 = vlaneseq
    %v1918 = vshrl.u32 %v1917, 7
    %v1919 = vsub.s32 1, %v1918
    %v1920 = vrot.slane %v156, %v1919
    %1925 = vrot.lane.b32.xlu0 %v140, 32
    %v1926 = vpop.permute.xlu0 %1925
    %1927 = vrot.lane.b32.xlu0 %v142, 32
    %v1928 = vpop.permute.xlu0 %1927
    %1929 = vrot.lane.b32.xlu0 %v144, 32
    %v1930 = vpop.permute.xlu0 %1929
    %1931 = vrot.lane.b32.xlu0 %v146, 32
    %v1932 = vpop.permute.xlu0 %1931
    %v1938 = vsel %vm42, %v1087, 0
    %v1941 = vsel %vm42, %v1088, 0
    %v1944 = vsel %vm42, %v1915, 0
    %v1947 = vsel %vm42, %v1916, 0
    %1949 = vmatprep.subr.mxu0 0.0
    %1950 = vmatpush1.msra.mxu0 %v1926
    %1951 = vmatprep.subr.mxu0 0.0
    %1952 = vmatpush1.msra.mxu0 %v1928
    %1953 = vmatprep.subr.mxu0 0.0
    %1954 = vmatpush1.msra.mxu0 %v1930
    %1955 = vmatprep.subr.mxu0 0.0
    %1956 = vmatpush1.msra.mxu0 %v1932
    %1957 = vmatprep.subr.mxu0 0.0
    %1958 = vmatpush1.msra.mxu0 0.0
    %1959 = vmatprep.subr.mxu0 0.0
    %1960 = vmatpush1.msra.mxu0 0.0
    %1961 = vmatprep.subr.mxu0 0.0
    %1962 = vmatpush1.msra.mxu0 0.0
    %1963 = vmatprep.subr.mxu0 0.0
    %1964 = vmatpush1.msra.mxu0 0.0
    %1965 = vmatprep.subr.mxu0 0.0
    %1966 = vmatpush1.msra.mxu0 0.0
    %1967 = vmatprep.subr.mxu0 0.0
    %1968 = vmatpush1.msra.mxu0 0.0
    %1969 = vmatprep.subr.mxu0 0.0
    %1970 = vmatpush1.msra.mxu0 0.0
    %1971 = vmatprep.subr.mxu0 0.0
    %1972 = vmatpush1.msra.mxu0 0.0
    %1973 = vmatprep.subr.mxu0 0.0
    %1974 = vmatpush1.msra.mxu0 0.0
    %1975 = vmatprep.subr.mxu0 0.0
    %1976 = vmatpush1.msra.mxu0 0.0
    %1977 = vmatprep.subr.mxu0 0.0
    %1978 = vmatpush1.msra.mxu0 0.0
    %1979 = vmatprep.subr.mxu0 0.0
    %1980 = vmatpush1.msra.mxu0 0.0
    %1981 = vmatprep.subr.mxu0 0.0
    %1982 = vmatpush1.msra.mxu0 0.0
    %1983 = vmatprep.subr.mxu0 0.0
    %1984 = vmatpush1.msra.mxu0 0.0
    %1985 = vmatprep.subr.mxu0 0.0
    %1986 = vmatpush1.msra.mxu0 0.0
    %1987 = vmatprep.subr.mxu0 0.0
    %1988 = vmatpush1.msra.mxu0 0.0
    %1989 = vmatprep.subr.mxu0 0.0
    %1990 = vmatpush1.msra.mxu0 0.0
    %1991 = vmatprep.subr.mxu0 0.0
    %1992 = vmatpush1.msra.mxu0 0.0
    %1993 = vmatprep.subr.mxu0 0.0
    %1994 = vmatpush1.msra.mxu0 0.0
    %1995 = vmatprep.subr.mxu0 0.0
    %1996 = vmatpush1.msra.mxu0 0.0
    %1997 = vmatprep.subr.mxu0 0.0
    %1998 = vmatpush1.msra.mxu0 0.0
    %1999 = vmatprep.subr.mxu0 0.0
    %2000 = vmatpush1.msra.mxu0 0.0
    %2001 = vmatprep.subr.mxu0 0.0
    %2002 = vmatpush1.msra.mxu0 0.0
    %2003 = vmatprep.subr.mxu0 0.0
    %2004 = vmatpush1.msra.mxu0 0.0
    %2005 = vmatprep.subr.mxu0 0.0
    %2006 = vmatpush1.msra.mxu0 0.0
    %2007 = vmatprep.subr.mxu0 0.0
    %2008 = vmatpush1.msra.mxu0 0.0
    %2009 = vmatprep.subr.mxu0 0.0
    %2010 = vmatpush1.msra.mxu0 0.0
    %2011 = vmatprep.subr.mxu0 0.0
    %2012 = vmatpush1.msra.mxu0 0.0
    %2013 = vmatprep.mubr.f32.mxu0 0.0
    %2014 = vmatmul.mubr.f32.gmra.mrb[0].mxu0 %v1938
    %v2015 = vpop.f32.mrb[0].mxu0
    %v2016 = vadd.f32 %v1920, %v2015
    %v2017 = vpop.f32.mrb[0].mxu0
    %2018 = vmatprep.mubr.f32.mxu0 0.0
    %2019 = vmatmul.mubr.f32.gmra.mrb[0].mxu0 %v1941
    %v2020 = vpop.f32.mrb[0].mxu0
    %v2021 = vadd.f32 %v1920, %v2020
    %v2022 = vpop.f32.mrb[0].mxu0
    %2023 = vmatprep.mubr.f32.mxu0 0.0
    %2024 = vmatmul.mubr.f32.gmra.mrb[0].mxu0 %v1944
    %v2025 = vpop.f32.mrb[0].mxu0
    %v2026 = vadd.f32 %v1920, %v2025
    %v2027 = vpop.f32.mrb[0].mxu0
    %2028 = vmatprep.mubr.f32.mxu0 0.0
    %2029 = vmatmul.mubr.f32.gmra.mrb[0].mxu0 %v1947
    %v2030 = vpop.f32.mrb[0].mxu0
    %v2031 = vadd.f32 %v1920, %v2030
    %v2032 = vpop.f32.mrb[0].mxu0
    %2033 = vdwg.mxu0
    %v2034 = vadd.f32 %v2016, %v122
    %v2035 = vadd.f32 %v2021, %v127
    %v2036 = vadd.f32 %v2026, %v132
    %v2037 = vadd.f32 %v2031, %v137
    %v2038 = vsel %vm42, %v2034, 0.0
    %2039 = vadd.xlane.f32.xlu0 %v2038
    %v2040 = vpop.xlane.xlu0 %2039
    %v2041 = vsel %vm42, %v2035, 0.0
    %2042 = vadd.xlane.f32.xlu0 %v2041
    %v2043 = vpop.xlane.xlu0 %2042
    %v2044 = vsel %vm42, %v2036, 0.0
    %2045 = vadd.xlane.f32.xlu0 %v2044
    %v2046 = vpop.xlane.xlu0 %2045
    %v2047 = vsel %vm42, %v2037, 0.0
    %2048 = vadd.xlane.f32.xlu0 %v2047
    %v2049 = vpop.xlane.xlu0 %2048
    %v2050 = vrcp.pop 32.0
    %v2051 = vmul.f32 %v2040, %v2050
    %v2052 = vmul.f32 %v2043, %v2050
    %v2053 = vmul.f32 %v2046, %v2050
    %v2054 = vmul.f32 %v2049, %v2050
    %v2055 = vsub.f32 %v2034, %v2051
    %v2056 = vsub.f32 %v2035, %v2052
    %v2057 = vsub.f32 %v2036, %v2053
    %v2058 = vsub.f32 %v2037, %v2054
    %v2059 = vmul.f32 %v2055, %v2055
    %v2060 = vmul.f32 %v2056, %v2056
    %v2061 = vmul.f32 %v2057, %v2057
    %v2062 = vmul.f32 %v2058, %v2058
    %v2063 = vsel %vm42, %v2059, 0.0
    %2064 = vadd.xlane.f32.xlu0 %v2063
    %v2065 = vpop.xlane.xlu0 %2064
    %v2066 = vsel %vm42, %v2060, 0.0
    %2067 = vadd.xlane.f32.xlu0 %v2066
    %v2068 = vpop.xlane.xlu0 %2067
    %v2069 = vsel %vm42, %v2061, 0.0
    %2070 = vadd.xlane.f32.xlu0 %v2069
    %v2071 = vpop.xlane.xlu0 %2070
    %v2072 = vsel %vm42, %v2062, 0.0
    %2073 = vadd.xlane.f32.xlu0 %v2072
    %v2074 = vpop.xlane.xlu0 %2073
    %v2075 = vmul.f32 %v2065, %v2050
    %v2076 = vmul.f32 %v2068, %v2050
    %v2077 = vmul.f32 %v2071, %v2050
    %v2078 = vmul.f32 %v2074, %v2050
    %v2079 = vadd.f32 %v2075, 1e-12
    %v2080 = vadd.f32 %v2076, 1e-12
    %v2081 = vadd.f32 %v2077, 1e-12
    %v2082 = vadd.f32 %v2078, 1e-12
    %v2083 = vrsqrt.pop %v2079
    %v2084 = vrsqrt.pop %v2080
    %v2085 = vrsqrt.pop %v2081
    %v2086 = vrsqrt.pop %v2082
    %v2087 = vmul.f32 %v2055, %v2083
    %v2088 = vmul.f32 %v2056, %v2084
    %v2089 = vmul.f32 %v2057, %v2085
    %v2090 = vmul.f32 %v2058, %v2086
    %v2091 = vlaneseq
    %v2092 = vshrl.u32 %v2091, 7
    %v2093 = vsub.s32 4, %v2092
    %v2094 = vrot.slane %v156, %v2093
    %v2095 = vmul.f32 %v2087, %v2094
    %v2096 = vmul.f32 %v2088, %v2094
    %v2097 = vmul.f32 %v2089, %v2094
    %v2098 = vmul.f32 %v2090, %v2094
    %v2099 = vlaneseq
    %v2100 = vshrl.u32 %v2099, 7
    %v2101 = vsub.s32 5, %v2100
    %v2102 = vrot.slane %v156, %v2101
    %v2103 = vadd.f32 %v2095, %v2102
    %v2104 = vadd.f32 %v2096, %v2102
    %v2105 = vadd.f32 %v2097, %v2102
    %v2106 = vadd.f32 %v2098, %v2102
    %v2107 = vlaneseq
    %v2108 = vshrl.u32 %v2107, 7
    %v2109 = vsub.s32 2, %v2108
    %v2110 = vrot.slane %v156, %v2109
    %v2112 = vsel %vm42, %v2103, 0
    %v2115 = vsel %vm42, %v2104, 0
    %v2118 = vsel %vm42, %v2105, 0
    %v2121 = vsel %vm42, %v2106, 0
    %2123 = vmatprep.subr.mxu0 0.0
    %2124 = vmatpush1.msra.mxu0 %v141
    %2125 = vmatprep.subr.mxu0 0.0
    %2126 = vmatpush1.msra.mxu0 %v143
    %2127 = vmatprep.subr.mxu0 0.0
    %2128 = vmatpush1.msra.mxu0 %v145
    %2129 = vmatprep.subr.mxu0 0.0
    %2130 = vmatpush1.msra.mxu0 %v147
    %2131 = vmatprep.subr.mxu0 0.0
    %2132 = vmatpush1.msra.mxu0 0.0
    %2133 = vmatprep.subr.mxu0 0.0
    %2134 = vmatpush1.msra.mxu0 0.0
    %2135 = vmatprep.subr.mxu0 0.0
    %2136 = vmatpush1.msra.mxu0 0.0
    %2137 = vmatprep.subr.mxu0 0.0
    %2138 = vmatpush1.msra.mxu0 0.0
    %2139 = vmatprep.subr.mxu0 0.0
    %2140 = vmatpush1.msra.mxu0 0.0
    %2141 = vmatprep.subr.mxu0 0.0
    %2142 = vmatpush1.msra.mxu0 0.0
    %2143 = vmatprep.subr.mxu0 0.0
    %2144 = vmatpush1.msra.mxu0 0.0
    %2145 = vmatprep.subr.mxu0 0.0
    %2146 = vmatpush1.msra.mxu0 0.0
    %2147 = vmatprep.subr.mxu0 0.0
    %2148 = vmatpush1.msra.mxu0 0.0
    %2149 = vmatprep.subr.mxu0 0.0
    %2150 = vmatpush1.msra.mxu0 0.0
    %2151 = vmatprep.subr.mxu0 0.0
    %2152 = vmatpush1.msra.mxu0 0.0
    %2153 = vmatprep.subr.mxu0 0.0
    %2154 = vmatpush1.msra.mxu0 0.0
    %2155 = vmatprep.subr.mxu0 0.0
    %2156 = vmatpush1.msra.mxu0 0.0
    %2157 = vmatprep.subr.mxu0 0.0
    %2158 = vmatpush1.msra.mxu0 0.0
    %2159 = vmatprep.subr.mxu0 0.0
    %2160 = vmatpush1.msra.mxu0 0.0
    %2161 = vmatprep.subr.mxu0 0.0
    %2162 = vmatpush1.msra.mxu0 0.0
    %2163 = vmatprep.subr.mxu0 0.0
    %2164 = vmatpush1.msra.mxu0 0.0
    %2165 = vmatprep.subr.mxu0 0.0
    %2166 = vmatpush1.msra.mxu0 0.0
    %2167 = vmatprep.subr.mxu0 0.0
    %2168 = vmatpush1.msra.mxu0 0.0
    %2169 = vmatprep.subr.mxu0 0.0
    %2170 = vmatpush1.msra.mxu0 0.0
    %2171 = vmatprep.subr.mxu0 0.0
    %2172 = vmatpush1.msra.mxu0 0.0
    %2173 = vmatprep.subr.mxu0 0.0
    %2174 = vmatpush1.msra.mxu0 0.0
    %2175 = vmatprep.subr.mxu0 0.0
    %2176 = vmatpush1.msra.mxu0 0.0
    %2177 = vmatprep.subr.mxu0 0.0
    %2178 = vmatpush1.msra.mxu0 0.0
    %2179 = vmatprep.subr.mxu0 0.0
    %2180 = vmatpush1.msra.mxu0 0.0
    %2181 = vmatprep.subr.mxu0 0.0
    %2182 = vmatpush1.msra.mxu0 0.0
    %2183 = vmatprep.subr.mxu0 0.0
    %2184 = vmatpush1.msra.mxu0 0.0
    %2185 = vmatprep.subr.mxu0 0.0
    %2186 = vmatpush1.msra.mxu0 0.0
    %2187 = vmatprep.mubr.f32.mxu0 0.0
    %2188 = vmatmul.mubr.f32.gmra.mrb[0].mxu0 %v2112
    %v2189 = vpop.f32.mrb[0].mxu0
    %v2190 = vadd.f32 %v2110, %v2189
    %v2191 = vpop.f32.mrb[0].mxu0
    %2192 = vmatprep.mubr.f32.mxu0 0.0
    %2193 = vmatmul.mubr.f32.gmra.mrb[0].mxu0 %v2115
    %v2194 = vpop.f32.mrb[0].mxu0
    %v2195 = vadd.f32 %v2110, %v2194
    %v2196 = vpop.f32.mrb[0].mxu0
    %2197 = vmatprep.mubr.f32.mxu0 0.0
    %2198 = vmatmul.mubr.f32.gmra.mrb[0].mxu0 %v2118
    %v2199 = vpop.f32.mrb[0].mxu0
    %v2200 = vadd.f32 %v2110, %v2199
    %v2201 = vpop.f32.mrb[0].mxu0
    %2202 = vmatprep.mubr.f32.mxu0 0.0
    %2203 = vmatmul.mubr.f32.gmra.mrb[0].mxu0 %v2121
    %v2204 = vpop.f32.mrb[0].mxu0
    %v2205 = vadd.f32 %v2110, %v2204
    %v2206 = vpop.f32.mrb[0].mxu0
    %2207 = vdwg.mxu0
    %v2208 = vmul.f32 %v2190, 0.5
    %v2209 = vmul.f32 %v2195, 0.5
    %v2210 = vmul.f32 %v2200, 0.5
    %v2211 = vmul.f32 %v2205, 0.5
    %v2212 = vmul.f32 %v2190, 0.70710677
    %v2213 = vmul.f32 %v2195, 0.70710677
    %v2214 = vmul.f32 %v2200, 0.70710677
    %v2215 = vmul.f32 %v2205, 0.70710677
    %v2216 = verf.f32.pop %v2212
    %v2217 = verf.f32.pop %v2213
    %v2218 = verf.f32.pop %v2214
    %v2219 = verf.f32.pop %v2215
    %v2220 = vadd.f32 %v2216, 1.0
    %v2221 = vadd.f32 %v2217, 1.0
    %v2222 = vadd.f32 %v2218, 1.0
    %v2223 = vadd.f32 %v2219, 1.0
    %v2224 = vmul.f32 %v2208, %v2220
    %v2225 = vmul.f32 %v2209, %v2221
    %v2226 = vmul.f32 %v2210, %v2222
    %v2227 = vmul.f32 %v2211, %v2223
    %v2228 = vlaneseq
    %v2229 = vshrl.u32 %v2228, 7
    %v2230 = vsub.s32 3, %v2229
    %v2231 = vrot.slane %v156, %v2230
    %vm2232 = vcmask 523264
    %v2234 = vsel %vm2232, %v2224, 0
    %v2237 = vsel %vm2232, %v2225, 0
    %v2240 = vsel %vm2232, %v2226, 0
    %v2243 = vsel %vm2232, %v2227, 0
    %2245 = vmatprep.subr.mxu0 0.0
    %2246 = vmatpush1.msra.mxu0 %v148
    %2247 = vmatprep.subr.mxu0 0.0
    %2248 = vmatpush1.msra.mxu0 %v149
    %2249 = vmatprep.subr.mxu0 0.0
    %2250 = vmatpush1.msra.mxu0 %v150
    %2251 = vmatprep.subr.mxu0 0.0
    %2252 = vmatpush1.msra.mxu0 %v151
    %2253 = vmatprep.subr.mxu0 0.0
    %2254 = vmatpush1.msra.mxu0 %v152
    %2255 = vmatprep.subr.mxu0 0.0
    %2256 = vmatpush1.msra.mxu0 %v153
    %2257 = vmatprep.subr.mxu0 0.0
    %2258 = vmatpush1.msra.mxu0 %v154
    %2259 = vmatprep.subr.mxu0 0.0
    %2260 = vmatpush1.msra.mxu0 %v155
    %2261 = vmatprep.subr.mxu0 0.0
    %2262 = vmatpush1.msra.mxu0 0.0
    %2263 = vmatprep.subr.mxu0 0.0
    %2264 = vmatpush1.msra.mxu0 0.0
    %2265 = vmatprep.subr.mxu0 0.0
    %2266 = vmatpush1.msra.mxu0 0.0
    %2267 = vmatprep.subr.mxu0 0.0
    %2268 = vmatpush1.msra.mxu0 0.0
    %2269 = vmatprep.subr.mxu0 0.0
    %2270 = vmatpush1.msra.mxu0 0.0
    %2271 = vmatprep.subr.mxu0 0.0
    %2272 = vmatpush1.msra.mxu0 0.0
    %2273 = vmatprep.subr.mxu0 0.0
    %2274 = vmatpush1.msra.mxu0 0.0
    %2275 = vmatprep.subr.mxu0 0.0
    %2276 = vmatpush1.msra.mxu0 0.0
    %2277 = vmatprep.subr.mxu0 0.0
    %2278 = vmatpush1.msra.mxu0 0.0
    %2279 = vmatprep.subr.mxu0 0.0
    %2280 = vmatpush1.msra.mxu0 0.0
    %2281 = vmatprep.subr.mxu0 0.0
    %2282 = vmatpush1.msra.mxu0 0.0
    %2283 = vmatprep.subr.mxu0 0.0
    %2284 = vmatpush1.msra.mxu0 0.0
    %2285 = vmatprep.subr.mxu0 0.0
    %2286 = vmatpush1.msra.mxu0 0.0
    %2287 = vmatprep.subr.mxu0 0.0
    %2288 = vmatpush1.msra.mxu0 0.0
    %2289 = vmatprep.subr.mxu0 0.0
    %2290 = vmatpush1.msra.mxu0 0.0
    %2291 = vmatprep.subr.mxu0 0.0
    %2292 = vmatpush1.msra.mxu0 0.0
    %2293 = vmatprep.subr.mxu0 0.0
    %2294 = vmatpush1.msra.mxu0 0.0
    %2295 = vmatprep.subr.mxu0 0.0
    %2296 = vmatpush1.msra.mxu0 0.0
    %2297 = vmatprep.subr.mxu0 0.0
    %2298 = vmatpush1.msra.mxu0 0.0
    %2299 = vmatprep.subr.mxu0 0.0
    %2300 = vmatpush1.msra.mxu0 0.0
    %2301 = vmatprep.subr.mxu0 0.0
    %2302 = vmatpush1.msra.mxu0 0.0
    %2303 = vmatprep.subr.mxu0 0.0
    %2304 = vmatpush1.msra.mxu0 0.0
    %2305 = vmatprep.subr.mxu0 0.0
    %2306 = vmatpush1.msra.mxu0 0.0
    %2307 = vmatprep.subr.mxu0 0.0
    %2308 = vmatpush1.msra.mxu0 0.0
    %2309 = vmatprep.mubr.f32.mxu0 0.0
    %2310 = vmatmul.mubr.f32.gmra.mrb[0].mxu0 %v2234
    %v2311 = vpop.f32.mrb[0].mxu0
    %v2312 = vadd.f32 %v2231, %v2311
    %v2313 = vpop.f32.mrb[0].mxu0
    %2314 = vmatprep.mubr.f32.mxu0 0.0
    %2315 = vmatmul.mubr.f32.gmra.mrb[0].mxu0 %v2237
    %v2316 = vpop.f32.mrb[0].mxu0
    %v2317 = vadd.f32 %v2231, %v2316
    %v2318 = vpop.f32.mrb[0].mxu0
    %2319 = vmatprep.mubr.f32.mxu0 0.0
    %2320 = vmatmul.mubr.f32.gmra.mrb[0].mxu0 %v2240
    %v2321 = vpop.f32.mrb[0].mxu0
    %v2322 = vadd.f32 %v2231, %v2321
    %v2323 = vpop.f32.mrb[0].mxu0
    %2324 = vmatprep.mubr.f32.mxu0 0.0
    %2325 = vmatmul.mubr.f32.gmra.mrb[0].mxu0 %v2243
    %v2326 = vpop.f32.mrb[0].mxu0
    %v2327 = vadd.f32 %v2231, %v2326
    %v2328 = vpop.f32.mrb[0].mxu0
    %2329 = vdwg.mxu0
    %v2330 = vadd.f32 %v2312, %v2103
    %v2331 = vadd.f32 %v2317, %v2104
    %v2332 = vadd.f32 %v2322, %v2105
    %v2333 = vadd.f32 %v2327, %v2106
    %v2334 = vsel %vm42, %v2330, 0.0
    %2335 = vadd.xlane.f32.xlu0 %v2334
    %v2336 = vpop.xlane.xlu0 %2335
    %v2337 = vsel %vm42, %v2331, 0.0
    %2338 = vadd.xlane.f32.xlu0 %v2337
    %v2339 = vpop.xlane.xlu0 %2338
    %v2340 = vsel %vm42, %v2332, 0.0
    %2341 = vadd.xlane.f32.xlu0 %v2340
    %v2342 = vpop.xlane.xlu0 %2341
    %v2343 = vsel %vm42, %v2333, 0.0
    %2344 = vadd.xlane.f32.xlu0 %v2343
    %v2345 = vpop.xlane.xlu0 %2344
    %v2346 = vmul.f32 %v2336, %v2050
    %v2347 = vmul.f32 %v2339, %v2050
    %v2348 = vmul.f32 %v2342, %v2050
    %v2349 = vmul.f32 %v2345, %v2050
    %v2350 = vsub.f32 %v2330, %v2346
    %v2351 = vsub.f32 %v2331, %v2347
    %v2352 = vsub.f32 %v2332, %v2348
    %v2353 = vsub.f32 %v2333, %v2349
    %v2354 = vmul.f32 %v2350, %v2350
    %v2355 = vmul.f32 %v2351, %v2351
    %v2356 = vmul.f32 %v2352, %v2352
    %v2357 = vmul.f32 %v2353, %v2353
    %v2358 = vsel %vm42, %v2354, 0.0
    %2359 = vadd.xlane.f32.xlu0 %v2358
    %v2360 = vpop.xlane.xlu0 %2359
    %v2361 = vsel %vm42, %v2355, 0.0
    %2362 = vadd.xlane.f32.xlu0 %v2361
    %v2363 = vpop.xlane.xlu0 %2362
    %v2364 = vsel %vm42, %v2356, 0.0
    %2365 = vadd.xlane.f32.xlu0 %v2364
    %v2366 = vpop.xlane.xlu0 %2365
    %v2367 = vsel %vm42, %v2357, 0.0
    %2368 = vadd.xlane.f32.xlu0 %v2367
    %v2369 = vpop.xlane.xlu0 %2368
    %v2370 = vmul.f32 %v2360, %v2050
    %v2371 = vmul.f32 %v2363, %v2050
    %v2372 = vmul.f32 %v2366, %v2050
    %v2373 = vmul.f32 %v2369, %v2050
    %v2374 = vadd.f32 %v2370, 1e-12
    %v2375 = vadd.f32 %v2371, 1e-12
    %v2376 = vadd.f32 %v2372, 1e-12
    %v2377 = vadd.f32 %v2373, 1e-12
    %v2378 = vrsqrt.pop %v2374
    %v2379 = vrsqrt.pop %v2375
    %v2380 = vrsqrt.pop %v2376
    %v2381 = vrsqrt.pop %v2377
    %v2382 = vmul.f32 %v2350, %v2378
    %v2383 = vmul.f32 %v2351, %v2379
    %v2384 = vmul.f32 %v2352, %v2380
    %v2385 = vmul.f32 %v2353, %v2381
    %v2386 = vlaneseq
    %v2387 = vshrl.u32 %v2386, 7
    %v2388 = vsub.s32 6, %v2387
    %v2389 = vrot.slane %v156, %v2388
    %v2390 = vmul.f32 %v2382, %v2389
    %v2391 = vmul.f32 %v2383, %v2389
    %v2392 = vmul.f32 %v2384, %v2389
    %v2393 = vmul.f32 %v2385, %v2389
    %v2394 = vlaneseq
    %v2395 = vshrl.u32 %v2394, 7
    %v2396 = vsub.s32 7, %v2395
    %v2397 = vrot.slane %v156, %v2396
    %v2398 = vadd.f32 %v2390, %v2397
    %v2399 = vadd.f32 %v2391, %v2397
    %v2400 = vadd.f32 %v2392, %v2397
    %v2401 = vadd.f32 %v2393, %v2397
    %s2402 = scalar_lea.vmem %s4, 64
    %v2403 = vld [vmem:[%s2402] sm:$0xff]
    %v2404 = vld [vmem:[%s2402 + $0x8] sm:$0xff]
    %v2405 = vld [vmem:[%s2402 + $0x10] sm:$0xff]
    %v2406 = vld [vmem:[%s2402 + $0x18] sm:$0xff]
    %v2407 = vld [vmem:[%s2402 + $0x20] sm:$0xff]
    %v2408 = vld [vmem:[%s2402 + $0x28] sm:$0xff]
    %v2409 = vld [vmem:[%s2402 + $0x30] sm:$0xff]
    %v2410 = vld [vmem:[%s2402 + $0x38] sm:$0xff]
    %s2411 = scalar_lea.vmem %s5, 64
    %v2412 = vld [vmem:[%s2411] sm:$0xff]
    %v2413 = vld [vmem:[%s2411 + $0x8] sm:$0xff]
    %v2414 = vld [vmem:[%s2411 + $0x10] sm:$0xff]
    %v2415 = vld [vmem:[%s2411 + $0x18] sm:$0xff]
    %v2416 = vld [vmem:[%s2411 + $0x20] sm:$0xff]
    %v2417 = vld [vmem:[%s2411 + $0x28] sm:$0xff]
    %v2418 = vld [vmem:[%s2411 + $0x30] sm:$0xff]
    %v2419 = vld [vmem:[%s2411 + $0x38] sm:$0xff]
    %s2420 = scalar_lea.vmem %s6, 8
    %v2421 = vld [vmem:[%s2420] sm:$0xff]
    %v2422 = vlaneseq
    %v2423 = vshrl.u32 %v2422, 7
    %v2424 = vsub.s32 0, %v2423
    %v2425 = vrot.slane %v2421, %v2424
    %v2427 = vsel %vm42, %v2398, 0
    %v2430 = vsel %vm42, %v2399, 0
    %v2433 = vsel %vm42, %v2400, 0
    %v2436 = vsel %vm42, %v2401, 0
    %2438 = vmatprep.subr.mxu0 0.0
    %2439 = vmatpush1.msra.mxu0 %v2403
    %2440 = vmatprep.subr.mxu0 0.0
    %2441 = vmatpush1.msra.mxu0 %v2405
    %2442 = vmatprep.subr.mxu0 0.0
    %2443 = vmatpush1.msra.mxu0 %v2407
    %2444 = vmatprep.subr.mxu0 0.0
    %2445 = vmatpush1.msra.mxu0 %v2409
    %2446 = vmatprep.subr.mxu0 0.0
    %2447 = vmatpush1.msra.mxu0 0.0
    %2448 = vmatprep.subr.mxu0 0.0
    %2449 = vmatpush1.msra.mxu0 0.0
    %2450 = vmatprep.subr.mxu0 0.0
    %2451 = vmatpush1.msra.mxu0 0.0
    %2452 = vmatprep.subr.mxu0 0.0
    %2453 = vmatpush1.msra.mxu0 0.0
    %2454 = vmatprep.subr.mxu0 0.0
    %2455 = vmatpush1.msra.mxu0 0.0
    %2456 = vmatprep.subr.mxu0 0.0
    %2457 = vmatpush1.msra.mxu0 0.0
    %2458 = vmatprep.subr.mxu0 0.0
    %2459 = vmatpush1.msra.mxu0 0.0
    %2460 = vmatprep.subr.mxu0 0.0
    %2461 = vmatpush1.msra.mxu0 0.0
    %2462 = vmatprep.subr.mxu0 0.0
    %2463 = vmatpush1.msra.mxu0 0.0
    %2464 = vmatprep.subr.mxu0 0.0
    %2465 = vmatpush1.msra.mxu0 0.0
    %2466 = vmatprep.subr.mxu0 0.0
    %2467 = vmatpush1.msra.mxu0 0.0
    %2468 = vmatprep.subr.mxu0 0.0
    %2469 = vmatpush1.msra.mxu0 0.0
    %2470 = vmatprep.subr.mxu0 0.0
    %2471 = vmatpush1.msra.mxu0 0.0
    %2472 = vmatprep.subr.mxu0 0.0
    %2473 = vmatpush1.msra.mxu0 0.0
    %2474 = vmatprep.subr.mxu0 0.0
    %2475 = vmatpush1.msra.mxu0 0.0
    %2476 = vmatprep.subr.mxu0 0.0
    %2477 = vmatpush1.msra.mxu0 0.0
    %2478 = vmatprep.subr.mxu0 0.0
    %2479 = vmatpush1.msra.mxu0 0.0
    %2480 = vmatprep.subr.mxu0 0.0
    %2481 = vmatpush1.msra.mxu0 0.0
    %2482 = vmatprep.subr.mxu0 0.0
    %2483 = vmatpush1.msra.mxu0 0.0
    %2484 = vmatprep.subr.mxu0 0.0
    %2485 = vmatpush1.msra.mxu0 0.0
    %2486 = vmatprep.subr.mxu0 0.0
    %2487 = vmatpush1.msra.mxu0 0.0
    %2488 = vmatprep.subr.mxu0 0.0
    %2489 = vmatpush1.msra.mxu0 0.0
    %2490 = vmatprep.subr.mxu0 0.0
    %2491 = vmatpush1.msra.mxu0 0.0
    %2492 = vmatprep.subr.mxu0 0.0
    %2493 = vmatpush1.msra.mxu0 0.0
    %2494 = vmatprep.subr.mxu0 0.0
    %2495 = vmatpush1.msra.mxu0 0.0
    %2496 = vmatprep.subr.mxu0 0.0
    %2497 = vmatpush1.msra.mxu0 0.0
    %2498 = vmatprep.subr.mxu0 0.0
    %2499 = vmatpush1.msra.mxu0 0.0
    %2500 = vmatprep.subr.mxu0 0.0
    %2501 = vmatpush1.msra.mxu0 0.0
    %2502 = vmatprep.mubr.f32.mxu0 0.0
    %2503 = vmatmul.mubr.f32.gmra.mrb[0].mxu0 %v2427
    %v2504 = vpop.f32.mrb[0].mxu0
    %v2505 = vadd.f32 %v2425, %v2504
    %v2506 = vpop.f32.mrb[0].mxu0
    %2507 = vmatprep.mubr.f32.mxu0 0.0
    %2508 = vmatmul.mubr.f32.gmra.mrb[0].mxu0 %v2430
    %v2509 = vpop.f32.mrb[0].mxu0
    %v2510 = vadd.f32 %v2425, %v2509
    %v2511 = vpop.f32.mrb[0].mxu0
    %2512 = vmatprep.mubr.f32.mxu0 0.0
    %2513 = vmatmul.mubr.f32.gmra.mrb[0].mxu0 %v2433
    %v2514 = vpop.f32.mrb[0].mxu0
    %v2515 = vadd.f32 %v2425, %v2514
    %v2516 = vpop.f32.mrb[0].mxu0
    %2517 = vmatprep.mubr.f32.mxu0 0.0
    %2518 = vmatmul.mubr.f32.gmra.mrb[0].mxu0 %v2436
    %v2519 = vpop.f32.mrb[0].mxu0
    %v2520 = vadd.f32 %v2425, %v2519
    %v2521 = vpop.f32.mrb[0].mxu0
    %2522 = vdwg.mxu0
    %2525 = vrot.lane.b32.xlu0 %v2505, 96
    %v2526 = vpop.permute.xlu0 %2525
    %2527 = vrot.lane.b32.xlu0 %v2510, 96
    %v2528 = vpop.permute.xlu0 %2527
    %v2529 = vsel %vm264, %v2505, 0
    %v2531 = vsel %vm264, %v2510, 0
    %v2533 = vsel %vm264, %v2526, 0
    %v2535 = vsel %vm264, %v2528, 0
    %2537 = vmatprep.subr.mxu0 0.0
    %2538 = vmatpush1.xpose.msra.mxu0 %v2533
    %2539 = vmatprep.subr.mxu0 0.0
    %2540 = vmatpush1.xpose.msra.mxu0 %v2535
    %2541 = vmatprep.subr.mxu0 0.0
    %2542 = vmatpush1.xpose.msra.mxu0 0.0
    %2543 = vmatprep.subr.mxu0 0.0
    %2544 = vmatpush1.xpose.msra.mxu0 0.0
    %2545 = vmatprep.subr.mxu0 0.0
    %2546 = vmatpush1.xpose.msra.mxu0 0.0
    %2547 = vmatprep.subr.mxu0 0.0
    %2548 = vmatpush1.xpose.msra.mxu0 0.0
    %2549 = vmatprep.subr.mxu0 0.0
    %2550 = vmatpush1.xpose.msra.mxu0 0.0
    %2551 = vmatprep.subr.mxu0 0.0
    %2552 = vmatpush1.xpose.msra.mxu0 0.0
    %2553 = vmatprep.subr.mxu0 0.0
    %2554 = vmatpush1.xpose.msra.mxu0 0.0
    %2555 = vmatprep.subr.mxu0 0.0
    %2556 = vmatpush1.xpose.msra.mxu0 0.0
    %2557 = vmatprep.subr.mxu0 0.0
    %2558 = vmatpush1.xpose.msra.mxu0 0.0
    %2559 = vmatprep.subr.mxu0 0.0
    %2560 = vmatpush1.xpose.msra.mxu0 0.0
    %2561 = vmatprep.subr.mxu0 0.0
    %2562 = vmatpush1.xpose.msra.mxu0 0.0
    %2563 = vmatprep.subr.mxu0 0.0
    %2564 = vmatpush1.xpose.msra.mxu0 0.0
    %2565 = vmatprep.subr.mxu0 0.0
    %2566 = vmatpush1.xpose.msra.mxu0 0.0
    %2567 = vmatprep.subr.mxu0 0.0
    %2568 = vmatpush1.xpose.msra.mxu0 0.0
    %2569 = vmatprep.subr.mxu0 0.0
    %2570 = vmatpush1.xpose.msra.mxu0 0.0
    %2571 = vmatprep.subr.mxu0 0.0
    %2572 = vmatpush1.xpose.msra.mxu0 0.0
    %2573 = vmatprep.subr.mxu0 0.0
    %2574 = vmatpush1.xpose.msra.mxu0 0.0
    %2575 = vmatprep.subr.mxu0 0.0
    %2576 = vmatpush1.xpose.msra.mxu0 0.0
    %2577 = vmatprep.subr.mxu0 0.0
    %2578 = vmatpush1.xpose.msra.mxu0 0.0
    %2579 = vmatprep.subr.mxu0 0.0
    %2580 = vmatpush1.xpose.msra.mxu0 0.0
    %2581 = vmatprep.subr.mxu0 0.0
    %2582 = vmatpush1.xpose.msra.mxu0 0.0
    %2583 = vmatprep.subr.mxu0 0.0
    %2584 = vmatpush1.xpose.msra.mxu0 0.0
    %2585 = vmatprep.subr.mxu0 0.0
    %2586 = vmatpush1.xpose.msra.mxu0 0.0
    %2587 = vmatprep.subr.mxu0 0.0
    %2588 = vmatpush1.xpose.msra.mxu0 0.0
    %2589 = vmatprep.subr.mxu0 0.0
    %2590 = vmatpush1.xpose.msra.mxu0 0.0
    %2591 = vmatprep.subr.mxu0 0.0
    %2592 = vmatpush1.xpose.msra.mxu0 0.0
    %2593 = vmatprep.subr.mxu0 0.0
    %2594 = vmatpush1.xpose.msra.mxu0 0.0
    %2595 = vmatprep.subr.mxu0 0.0
    %2596 = vmatpush1.xpose.msra.mxu0 0.0
    %2597 = vmatprep.subr.mxu0 0.0
    %2598 = vmatpush1.xpose.msra.mxu0 0.0
    %2599 = vmatprep.subr.mxu0 0.0
    %2600 = vmatpush1.xpose.msra.mxu0 0.0
    %2601 = vmatprep.mubr.f32.mxu0 0.0
    %2602 = vmatmul.mubr.f32.gmra.mrb[0].mxu0 %v2529
    %v2603 = vpop.f32.mrb[0].mxu0
    %v2604 = vadd.f32 0.0, %v2603
    %v2605 = vpop.f32.mrb[0].mxu0
    %2606 = vmatprep.mubr.f32.mxu0 0.0
    %2607 = vmatmul.mubr.f32.gmra.mrb[0].mxu0 %v2531
    %v2608 = vpop.f32.mrb[0].mxu0
    %v2609 = vadd.f32 0.0, %v2608
    %v2610 = vpop.f32.mrb[0].mxu0
    %2611 = vdwg.mxu0
    %v2612 = vsel %vm348, %v2604, -inf
    %2613 = vmax.xlane.f32.xlu0 %v2612
    %v2614 = vpop.xlane.xlu0 %2613
    %v2615 = vsel %vm348, %v2609, -inf
    %2616 = vmax.xlane.f32.xlu0 %v2615
    %v2617 = vpop.xlane.xlu0 %2616
    %v2618 = vsub.f32 %v2604, %v2614
    %v2619 = vsub.f32 %v2609, %v2617
    %v2620 = vmul.f32 %v2618, 1.442695
    %v2621 = vpow.pop %v2620
    %v2622 = vmul.f32 %v2619, 1.442695
    %v2623 = vpow.pop %v2622
    %v2624 = vsel %vm348, %v2621, 0.0
    %2625 = vadd.xlane.f32.xlu0 %v2624
    %v2626 = vpop.xlane.xlu0 %2625
    %v2627 = vsel %vm348, %v2623, 0.0
    %2628 = vadd.xlane.f32.xlu0 %v2627
    %v2629 = vpop.xlane.xlu0 %2628
    %v2630 = vrcp.pop %v2626
    %v2631 = vrcp.pop %v2629
    %v2632 = vmul.f32 %v2621, %v2630
    %v2633 = vmul.f32 %v2623, %v2631
    %2634 = vrot.lane.b32.xlu0 %v2505, 64
    %v2635 = vpop.permute.xlu0 %2634
    %2636 = vrot.lane.b32.xlu0 %v2510, 64
    %v2637 = vpop.permute.xlu0 %2636
    %v2641 = vsel %vm348, %v2632, 0
    %v2644 = vsel %vm348, %v2633, 0
    %2646 = vmatprep.subr.mxu0 0.0
    %2647 = vmatpush1.msra.mxu0 %v2635
    %2648 = vmatprep.subr.mxu0 0.0
    %2649 = vmatpush1.msra.mxu0 %v2637
    %2650 = vmatprep.subr.mxu0 0.0
    %2651 = vmatpush1.msra.mxu0 0.0
    %2652 = vmatprep.subr.mxu0 0.0
    %2653 = vmatpush1.msra.mxu0 0.0
    %2654 = vmatprep.subr.mxu0 0.0
    %2655 = vmatpush1.msra.mxu0 0.0
    %2656 = vmatprep.subr.mxu0 0.0
    %2657 = vmatpush1.msra.mxu0 0.0
    %2658 = vmatprep.subr.mxu0 0.0
    %2659 = vmatpush1.msra.mxu0 0.0
    %2660 = vmatprep.subr.mxu0 0.0
    %2661 = vmatpush1.msra.mxu0 0.0
    %2662 = vmatprep.subr.mxu0 0.0
    %2663 = vmatpush1.msra.mxu0 0.0
    %2664 = vmatprep.subr.mxu0 0.0
    %2665 = vmatpush1.msra.mxu0 0.0
    %2666 = vmatprep.subr.mxu0 0.0
    %2667 = vmatpush1.msra.mxu0 0.0
    %2668 = vmatprep.subr.mxu0 0.0
    %2669 = vmatpush1.msra.mxu0 0.0
    %2670 = vmatprep.subr.mxu0 0.0
    %2671 = vmatpush1.msra.mxu0 0.0
    %2672 = vmatprep.subr.mxu0 0.0
    %2673 = vmatpush1.msra.mxu0 0.0
    %2674 = vmatprep.subr.mxu0 0.0
    %2675 = vmatpush1.msra.mxu0 0.0
    %2676 = vmatprep.subr.mxu0 0.0
    %2677 = vmatpush1.msra.mxu0 0.0
    %2678 = vmatprep.subr.mxu0 0.0
    %2679 = vmatpush1.msra.mxu0 0.0
    %2680 = vmatprep.subr.mxu0 0.0
    %2681 = vmatpush1.msra.mxu0 0.0
    %2682 = vmatprep.subr.mxu0 0.0
    %2683 = vmatpush1.msra.mxu0 0.0
    %2684 = vmatprep.subr.mxu0 0.0
    %2685 = vmatpush1.msra.mxu0 0.0
    %2686 = vmatprep.subr.mxu0 0.0
    %2687 = vmatpush1.msra.mxu0 0.0
    %2688 = vmatprep.subr.mxu0 0.0
    %2689 = vmatpush1.msra.mxu0 0.0
    %2690 = vmatprep.subr.mxu0 0.0
    %2691 = vmatpush1.msra.mxu0 0.0
    %2692 = vmatprep.subr.mxu0 0.0
    %2693 = vmatpush1.msra.mxu0 0.0
    %2694 = vmatprep.subr.mxu0 0.0
    %2695 = vmatpush1.msra.mxu0 0.0
    %2696 = vmatprep.subr.mxu0 0.0
    %2697 = vmatpush1.msra.mxu0 0.0
    %2698 = vmatprep.subr.mxu0 0.0
    %2699 = vmatpush1.msra.mxu0 0.0
    %2700 = vmatprep.subr.mxu0 0.0
    %2701 = vmatpush1.msra.mxu0 0.0
    %2702 = vmatprep.subr.mxu0 0.0
    %2703 = vmatpush1.msra.mxu0 0.0
    %2704 = vmatprep.subr.mxu0 0.0
    %2705 = vmatpush1.msra.mxu0 0.0
    %2706 = vmatprep.subr.mxu0 0.0
    %2707 = vmatpush1.msra.mxu0 0.0
    %2708 = vmatprep.subr.mxu0 0.0
    %2709 = vmatpush1.msra.mxu0 0.0
    %2710 = vmatprep.mubr.f32.mxu0 0.0
    %2711 = vmatmul.mubr.f32.gmra.mrb[0].mxu0 %v2641
    %v2712 = vpop.f32.mrb[0].mxu0
    %v2713 = vadd.f32 0.0, %v2712
    %v2714 = vpop.f32.mrb[0].mxu0
    %2715 = vmatprep.mubr.f32.mxu0 0.0
    %2716 = vmatmul.mubr.f32.gmra.mrb[0].mxu0 %v2644
    %v2717 = vpop.f32.mrb[0].mxu0
    %v2718 = vadd.f32 0.0, %v2717
    %v2719 = vpop.f32.mrb[0].mxu0
    %2720 = vdwg.mxu0
    %2721 = vrot.lane.b32.xlu0 %v2505, 120
    %v2722 = vpop.permute.xlu0 %2721
    %2723 = vrot.lane.b32.xlu0 %v2510, 120
    %v2724 = vpop.permute.xlu0 %2723
    %2725 = vrot.lane.b32.xlu0 %v2505, 88
    %v2726 = vpop.permute.xlu0 %2725
    %2727 = vrot.lane.b32.xlu0 %v2510, 88
    %v2728 = vpop.permute.xlu0 %2727
    %v2729 = vsel %vm264, %v2722, 0
    %v2731 = vsel %vm264, %v2724, 0
    %v2733 = vsel %vm264, %v2726, 0
    %v2735 = vsel %vm264, %v2728, 0
    %2737 = vmatprep.subr.mxu0 0.0
    %2738 = vmatpush1.xpose.msra.mxu0 %v2733
    %2739 = vmatprep.subr.mxu0 0.0
    %2740 = vmatpush1.xpose.msra.mxu0 %v2735
    %2741 = vmatprep.subr.mxu0 0.0
    %2742 = vmatpush1.xpose.msra.mxu0 0.0
    %2743 = vmatprep.subr.mxu0 0.0
    %2744 = vmatpush1.xpose.msra.mxu0 0.0
    %2745 = vmatprep.subr.mxu0 0.0
    %2746 = vmatpush1.xpose.msra.mxu0 0.0
    %2747 = vmatprep.subr.mxu0 0.0
    %2748 = vmatpush1.xpose.msra.mxu0 0.0
    %2749 = vmatprep.subr.mxu0 0.0
    %2750 = vmatpush1.xpose.msra.mxu0 0.0
    %2751 = vmatprep.subr.mxu0 0.0
    %2752 = vmatpush1.xpose.msra.mxu0 0.0
    %2753 = vmatprep.subr.mxu0 0.0
    %2754 = vmatpush1.xpose.msra.mxu0 0.0
    %2755 = vmatprep.subr.mxu0 0.0
    %2756 = vmatpush1.xpose.msra.mxu0 0.0
    %2757 = vmatprep.subr.mxu0 0.0
    %2758 = vmatpush1.xpose.msra.mxu0 0.0
    %2759 = vmatprep.subr.mxu0 0.0
    %2760 = vmatpush1.xpose.msra.mxu0 0.0
    %2761 = vmatprep.subr.mxu0 0.0
    %2762 = vmatpush1.xpose.msra.mxu0 0.0
    %2763 = vmatprep.subr.mxu0 0.0
    %2764 = vmatpush1.xpose.msra.mxu0 0.0
    %2765 = vmatprep.subr.mxu0 0.0
    %2766 = vmatpush1.xpose.msra.mxu0 0.0
    %2767 = vmatprep.subr.mxu0 0.0
    %2768 = vmatpush1.xpose.msra.mxu0 0.0
    %2769 = vmatprep.subr.mxu0 0.0
    %2770 = vmatpush1.xpose.msra.mxu0 0.0
    %2771 = vmatprep.subr.mxu0 0.0
    %2772 = vmatpush1.xpose.msra.mxu0 0.0
    %2773 = vmatprep.subr.mxu0 0.0
    %2774 = vmatpush1.xpose.msra.mxu0 0.0
    %2775 = vmatprep.subr.mxu0 0.0
    %2776 = vmatpush1.xpose.msra.mxu0 0.0
    %2777 = vmatprep.subr.mxu0 0.0
    %2778 = vmatpush1.xpose.msra.mxu0 0.0
    %2779 = vmatprep.subr.mxu0 0.0
    %2780 = vmatpush1.xpose.msra.mxu0 0.0
    %2781 = vmatprep.subr.mxu0 0.0
    %2782 = vmatpush1.xpose.msra.mxu0 0.0
    %2783 = vmatprep.subr.mxu0 0.0
    %2784 = vmatpush1.xpose.msra.mxu0 0.0
    %2785 = vmatprep.subr.mxu0 0.0
    %2786 = vmatpush1.xpose.msra.mxu0 0.0
    %2787 = vmatprep.subr.mxu0 0.0
    %2788 = vmatpush1.xpose.msra.mxu0 0.0
    %2789 = vmatprep.subr.mxu0 0.0
    %2790 = vmatpush1.xpose.msra.mxu0 0.0
    %2791 = vmatprep.subr.mxu0 0.0
    %2792 = vmatpush1.xpose.msra.mxu0 0.0
    %2793 = vmatprep.subr.mxu0 0.0
    %2794 = vmatpush1.xpose.msra.mxu0 0.0
    %2795 = vmatprep.subr.mxu0 0.0
    %2796 = vmatpush1.xpose.msra.mxu0 0.0
    %2797 = vmatprep.subr.mxu0 0.0
    %2798 = vmatpush1.xpose.msra.mxu0 0.0
    %2799 = vmatprep.subr.mxu0 0.0
    %2800 = vmatpush1.xpose.msra.mxu0 0.0
    %2801 = vmatprep.mubr.f32.mxu0 0.0
    %2802 = vmatmul.mubr.f32.gmra.mrb[0].mxu0 %v2729
    %v2803 = vpop.f32.mrb[0].mxu0
    %v2804 = vadd.f32 0.0, %v2803
    %v2805 = vpop.f32.mrb[0].mxu0
    %2806 = vmatprep.mubr.f32.mxu0 0.0
    %2807 = vmatmul.mubr.f32.gmra.mrb[0].mxu0 %v2731
    %v2808 = vpop.f32.mrb[0].mxu0
    %v2809 = vadd.f32 0.0, %v2808
    %v2810 = vpop.f32.mrb[0].mxu0
    %2811 = vdwg.mxu0
    %v2812 = vsel %vm348, %v2804, -inf
    %2813 = vmax.xlane.f32.xlu0 %v2812
    %v2814 = vpop.xlane.xlu0 %2813
    %v2815 = vsel %vm348, %v2809, -inf
    %2816 = vmax.xlane.f32.xlu0 %v2815
    %v2817 = vpop.xlane.xlu0 %2816
    %v2818 = vsub.f32 %v2804, %v2814
    %v2819 = vsub.f32 %v2809, %v2817
    %v2820 = vmul.f32 %v2818, 1.442695
    %v2821 = vpow.pop %v2820
    %v2822 = vmul.f32 %v2819, 1.442695
    %v2823 = vpow.pop %v2822
    %v2824 = vsel %vm348, %v2821, 0.0
    %2825 = vadd.xlane.f32.xlu0 %v2824
    %v2826 = vpop.xlane.xlu0 %2825
    %v2827 = vsel %vm348, %v2823, 0.0
    %2828 = vadd.xlane.f32.xlu0 %v2827
    %v2829 = vpop.xlane.xlu0 %2828
    %v2830 = vrcp.pop %v2826
    %v2831 = vrcp.pop %v2829
    %v2832 = vmul.f32 %v2821, %v2830
    %v2833 = vmul.f32 %v2823, %v2831
    %2834 = vrot.lane.b32.xlu0 %v2505, 56
    %v2835 = vpop.permute.xlu0 %2834
    %2836 = vrot.lane.b32.xlu0 %v2510, 56
    %v2837 = vpop.permute.xlu0 %2836
    %v2841 = vsel %vm348, %v2832, 0
    %v2844 = vsel %vm348, %v2833, 0
    %2846 = vmatprep.subr.mxu0 0.0
    %2847 = vmatpush1.msra.mxu0 %v2835
    %2848 = vmatprep.subr.mxu0 0.0
    %2849 = vmatpush1.msra.mxu0 %v2837
    %2850 = vmatprep.subr.mxu0 0.0
    %2851 = vmatpush1.msra.mxu0 0.0
    %2852 = vmatprep.subr.mxu0 0.0
    %2853 = vmatpush1.msra.mxu0 0.0
    %2854 = vmatprep.subr.mxu0 0.0
    %2855 = vmatpush1.msra.mxu0 0.0
    %2856 = vmatprep.subr.mxu0 0.0
    %2857 = vmatpush1.msra.mxu0 0.0
    %2858 = vmatprep.subr.mxu0 0.0
    %2859 = vmatpush1.msra.mxu0 0.0
    %2860 = vmatprep.subr.mxu0 0.0
    %2861 = vmatpush1.msra.mxu0 0.0
    %2862 = vmatprep.subr.mxu0 0.0
    %2863 = vmatpush1.msra.mxu0 0.0
    %2864 = vmatprep.subr.mxu0 0.0
    %2865 = vmatpush1.msra.mxu0 0.0
    %2866 = vmatprep.subr.mxu0 0.0
    %2867 = vmatpush1.msra.mxu0 0.0
    %2868 = vmatprep.subr.mxu0 0.0
    %2869 = vmatpush1.msra.mxu0 0.0
    %2870 = vmatprep.subr.mxu0 0.0
    %2871 = vmatpush1.msra.mxu0 0.0
    %2872 = vmatprep.subr.mxu0 0.0
    %2873 = vmatpush1.msra.mxu0 0.0
    %2874 = vmatprep.subr.mxu0 0.0
    %2875 = vmatpush1.msra.mxu0 0.0
    %2876 = vmatprep.subr.mxu0 0.0
    %2877 = vmatpush1.msra.mxu0 0.0
    %2878 = vmatprep.subr.mxu0 0.0
    %2879 = vmatpush1.msra.mxu0 0.0
    %2880 = vmatprep.subr.mxu0 0.0
    %2881 = vmatpush1.msra.mxu0 0.0
    %2882 = vmatprep.subr.mxu0 0.0
    %2883 = vmatpush1.msra.mxu0 0.0
    %2884 = vmatprep.subr.mxu0 0.0
    %2885 = vmatpush1.msra.mxu0 0.0
    %2886 = vmatprep.subr.mxu0 0.0
    %2887 = vmatpush1.msra.mxu0 0.0
    %2888 = vmatprep.subr.mxu0 0.0
    %2889 = vmatpush1.msra.mxu0 0.0
    %2890 = vmatprep.subr.mxu0 0.0
    %2891 = vmatpush1.msra.mxu0 0.0
    %2892 = vmatprep.subr.mxu0 0.0
    %2893 = vmatpush1.msra.mxu0 0.0
    %2894 = vmatprep.subr.mxu0 0.0
    %2895 = vmatpush1.msra.mxu0 0.0
    %2896 = vmatprep.subr.mxu0 0.0
    %2897 = vmatpush1.msra.mxu0 0.0
    %2898 = vmatprep.subr.mxu0 0.0
    %2899 = vmatpush1.msra.mxu0 0.0
    %2900 = vmatprep.subr.mxu0 0.0
    %2901 = vmatpush1.msra.mxu0 0.0
    %2902 = vmatprep.subr.mxu0 0.0
    %2903 = vmatpush1.msra.mxu0 0.0
    %2904 = vmatprep.subr.mxu0 0.0
    %2905 = vmatpush1.msra.mxu0 0.0
    %2906 = vmatprep.subr.mxu0 0.0
    %2907 = vmatpush1.msra.mxu0 0.0
    %2908 = vmatprep.subr.mxu0 0.0
    %2909 = vmatpush1.msra.mxu0 0.0
    %2910 = vmatprep.mubr.f32.mxu0 0.0
    %2911 = vmatmul.mubr.f32.gmra.mrb[0].mxu0 %v2841
    %v2912 = vpop.f32.mrb[0].mxu0
    %v2913 = vadd.f32 0.0, %v2912
    %v2914 = vpop.f32.mrb[0].mxu0
    %2915 = vmatprep.mubr.f32.mxu0 0.0
    %2916 = vmatmul.mubr.f32.gmra.mrb[0].mxu0 %v2844
    %v2917 = vpop.f32.mrb[0].mxu0
    %v2918 = vadd.f32 0.0, %v2917
    %v2919 = vpop.f32.mrb[0].mxu0
    %2920 = vdwg.mxu0
    %2921 = vrot.lane.b32.xlu0 %v2505, 112
    %v2922 = vpop.permute.xlu0 %2921
    %2923 = vrot.lane.b32.xlu0 %v2510, 112
    %v2924 = vpop.permute.xlu0 %2923
    %2925 = vrot.lane.b32.xlu0 %v2505, 80
    %v2926 = vpop.permute.xlu0 %2925
    %2927 = vrot.lane.b32.xlu0 %v2510, 80
    %v2928 = vpop.permute.xlu0 %2927
    %v2929 = vsel %vm264, %v2922, 0
    %v2931 = vsel %vm264, %v2924, 0
    %v2933 = vsel %vm264, %v2926, 0
    %v2935 = vsel %vm264, %v2928, 0
    %2937 = vmatprep.subr.mxu0 0.0
    %2938 = vmatpush1.xpose.msra.mxu0 %v2933
    %2939 = vmatprep.subr.mxu0 0.0
    %2940 = vmatpush1.xpose.msra.mxu0 %v2935
    %2941 = vmatprep.subr.mxu0 0.0
    %2942 = vmatpush1.xpose.msra.mxu0 0.0
    %2943 = vmatprep.subr.mxu0 0.0
    %2944 = vmatpush1.xpose.msra.mxu0 0.0
    %2945 = vmatprep.subr.mxu0 0.0
    %2946 = vmatpush1.xpose.msra.mxu0 0.0
    %2947 = vmatprep.subr.mxu0 0.0
    %2948 = vmatpush1.xpose.msra.mxu0 0.0
    %2949 = vmatprep.subr.mxu0 0.0
    %2950 = vmatpush1.xpose.msra.mxu0 0.0
    %2951 = vmatprep.subr.mxu0 0.0
    %2952 = vmatpush1.xpose.msra.mxu0 0.0
    %2953 = vmatprep.subr.mxu0 0.0
    %2954 = vmatpush1.xpose.msra.mxu0 0.0
    %2955 = vmatprep.subr.mxu0 0.0
    %2956 = vmatpush1.xpose.msra.mxu0 0.0
    %2957 = vmatprep.subr.mxu0 0.0
    %2958 = vmatpush1.xpose.msra.mxu0 0.0
    %2959 = vmatprep.subr.mxu0 0.0
    %2960 = vmatpush1.xpose.msra.mxu0 0.0
    %2961 = vmatprep.subr.mxu0 0.0
    %2962 = vmatpush1.xpose.msra.mxu0 0.0
    %2963 = vmatprep.subr.mxu0 0.0
    %2964 = vmatpush1.xpose.msra.mxu0 0.0
    %2965 = vmatprep.subr.mxu0 0.0
    %2966 = vmatpush1.xpose.msra.mxu0 0.0
    %2967 = vmatprep.subr.mxu0 0.0
    %2968 = vmatpush1.xpose.msra.mxu0 0.0
    %2969 = vmatprep.subr.mxu0 0.0
    %2970 = vmatpush1.xpose.msra.mxu0 0.0
    %2971 = vmatprep.subr.mxu0 0.0
    %2972 = vmatpush1.xpose.msra.mxu0 0.0
    %2973 = vmatprep.subr.mxu0 0.0
    %2974 = vmatpush1.xpose.msra.mxu0 0.0
    %2975 = vmatprep.subr.mxu0 0.0
    %2976 = vmatpush1.xpose.msra.mxu0 0.0
    %2977 = vmatprep.subr.mxu0 0.0
    %2978 = vmatpush1.xpose.msra.mxu0 0.0
    %2979 = vmatprep.subr.mxu0 0.0
    %2980 = vmatpush1.xpose.msra.mxu0 0.0
    %2981 = vmatprep.subr.mxu0 0.0
    %2982 = vmatpush1.xpose.msra.mxu0 0.0
    %2983 = vmatprep.subr.mxu0 0.0
    %2984 = vmatpush1.xpose.msra.mxu0 0.0
    %2985 = vmatprep.subr.mxu0 0.0
    %2986 = vmatpush1.xpose.msra.mxu0 0.0
    %2987 = vmatprep.subr.mxu0 0.0
    %2988 = vmatpush1.xpose.msra.mxu0 0.0
    %2989 = vmatprep.subr.mxu0 0.0
    %2990 = vmatpush1.xpose.msra.mxu0 0.0
    %2991 = vmatprep.subr.mxu0 0.0
    %2992 = vmatpush1.xpose.msra.mxu0 0.0
    %2993 = vmatprep.subr.mxu0 0.0
    %2994 = vmatpush1.xpose.msra.mxu0 0.0
    %2995 = vmatprep.subr.mxu0 0.0
    %2996 = vmatpush1.xpose.msra.mxu0 0.0
    %2997 = vmatprep.subr.mxu0 0.0
    %2998 = vmatpush1.xpose.msra.mxu0 0.0
    %2999 = vmatprep.subr.mxu0 0.0
    %3000 = vmatpush1.xpose.msra.mxu0 0.0
    %3001 = vmatprep.mubr.f32.mxu0 0.0
    %3002 = vmatmul.mubr.f32.gmra.mrb[0].mxu0 %v2929
    %v3003 = vpop.f32.mrb[0].mxu0
    %v3004 = vadd.f32 0.0, %v3003
    %v3005 = vpop.f32.mrb[0].mxu0
    %3006 = vmatprep.mubr.f32.mxu0 0.0
    %3007 = vmatmul.mubr.f32.gmra.mrb[0].mxu0 %v2931
    %v3008 = vpop.f32.mrb[0].mxu0
    %v3009 = vadd.f32 0.0, %v3008
    %v3010 = vpop.f32.mrb[0].mxu0
    %3011 = vdwg.mxu0
    %v3012 = vsel %vm348, %v3004, -inf
    %3013 = vmax.xlane.f32.xlu0 %v3012
    %v3014 = vpop.xlane.xlu0 %3013
    %v3015 = vsel %vm348, %v3009, -inf
    %3016 = vmax.xlane.f32.xlu0 %v3015
    %v3017 = vpop.xlane.xlu0 %3016
    %v3018 = vsub.f32 %v3004, %v3014
    %v3019 = vsub.f32 %v3009, %v3017
    %v3020 = vmul.f32 %v3018, 1.442695
    %v3021 = vpow.pop %v3020
    %v3022 = vmul.f32 %v3019, 1.442695
    %v3023 = vpow.pop %v3022
    %v3024 = vsel %vm348, %v3021, 0.0
    %3025 = vadd.xlane.f32.xlu0 %v3024
    %v3026 = vpop.xlane.xlu0 %3025
    %v3027 = vsel %vm348, %v3023, 0.0
    %3028 = vadd.xlane.f32.xlu0 %v3027
    %v3029 = vpop.xlane.xlu0 %3028
    %v3030 = vrcp.pop %v3026
    %v3031 = vrcp.pop %v3029
    %v3032 = vmul.f32 %v3021, %v3030
    %v3033 = vmul.f32 %v3023, %v3031
    %3034 = vrot.lane.b32.xlu0 %v2505, 48
    %v3035 = vpop.permute.xlu0 %3034
    %3036 = vrot.lane.b32.xlu0 %v2510, 48
    %v3037 = vpop.permute.xlu0 %3036
    %v3041 = vsel %vm348, %v3032, 0
    %v3044 = vsel %vm348, %v3033, 0
    %3046 = vmatprep.subr.mxu0 0.0
    %3047 = vmatpush1.msra.mxu0 %v3035
    %3048 = vmatprep.subr.mxu0 0.0
    %3049 = vmatpush1.msra.mxu0 %v3037
    %3050 = vmatprep.subr.mxu0 0.0
    %3051 = vmatpush1.msra.mxu0 0.0
    %3052 = vmatprep.subr.mxu0 0.0
    %3053 = vmatpush1.msra.mxu0 0.0
    %3054 = vmatprep.subr.mxu0 0.0
    %3055 = vmatpush1.msra.mxu0 0.0
    %3056 = vmatprep.subr.mxu0 0.0
    %3057 = vmatpush1.msra.mxu0 0.0
    %3058 = vmatprep.subr.mxu0 0.0
    %3059 = vmatpush1.msra.mxu0 0.0
    %3060 = vmatprep.subr.mxu0 0.0
    %3061 = vmatpush1.msra.mxu0 0.0
    %3062 = vmatprep.subr.mxu0 0.0
    %3063 = vmatpush1.msra.mxu0 0.0
    %3064 = vmatprep.subr.mxu0 0.0
    %3065 = vmatpush1.msra.mxu0 0.0
    %3066 = vmatprep.subr.mxu0 0.0
    %3067 = vmatpush1.msra.mxu0 0.0
    %3068 = vmatprep.subr.mxu0 0.0
    %3069 = vmatpush1.msra.mxu0 0.0
    %3070 = vmatprep.subr.mxu0 0.0
    %3071 = vmatpush1.msra.mxu0 0.0
    %3072 = vmatprep.subr.mxu0 0.0
    %3073 = vmatpush1.msra.mxu0 0.0
    %3074 = vmatprep.subr.mxu0 0.0
    %3075 = vmatpush1.msra.mxu0 0.0
    %3076 = vmatprep.subr.mxu0 0.0
    %3077 = vmatpush1.msra.mxu0 0.0
    %3078 = vmatprep.subr.mxu0 0.0
    %3079 = vmatpush1.msra.mxu0 0.0
    %3080 = vmatprep.subr.mxu0 0.0
    %3081 = vmatpush1.msra.mxu0 0.0
    %3082 = vmatprep.subr.mxu0 0.0
    %3083 = vmatpush1.msra.mxu0 0.0
    %3084 = vmatprep.subr.mxu0 0.0
    %3085 = vmatpush1.msra.mxu0 0.0
    %3086 = vmatprep.subr.mxu0 0.0
    %3087 = vmatpush1.msra.mxu0 0.0
    %3088 = vmatprep.subr.mxu0 0.0
    %3089 = vmatpush1.msra.mxu0 0.0
    %3090 = vmatprep.subr.mxu0 0.0
    %3091 = vmatpush1.msra.mxu0 0.0
    %3092 = vmatprep.subr.mxu0 0.0
    %3093 = vmatpush1.msra.mxu0 0.0
    %3094 = vmatprep.subr.mxu0 0.0
    %3095 = vmatpush1.msra.mxu0 0.0
    %3096 = vmatprep.subr.mxu0 0.0
    %3097 = vmatpush1.msra.mxu0 0.0
    %3098 = vmatprep.subr.mxu0 0.0
    %3099 = vmatpush1.msra.mxu0 0.0
    %3100 = vmatprep.subr.mxu0 0.0
    %3101 = vmatpush1.msra.mxu0 0.0
    %3102 = vmatprep.subr.mxu0 0.0
    %3103 = vmatpush1.msra.mxu0 0.0
    %3104 = vmatprep.subr.mxu0 0.0
    %3105 = vmatpush1.msra.mxu0 0.0
    %3106 = vmatprep.subr.mxu0 0.0
    %3107 = vmatpush1.msra.mxu0 0.0
    %3108 = vmatprep.subr.mxu0 0.0
    %3109 = vmatpush1.msra.mxu0 0.0
    %3110 = vmatprep.mubr.f32.mxu0 0.0
    %3111 = vmatmul.mubr.f32.gmra.mrb[0].mxu0 %v3041
    %v3112 = vpop.f32.mrb[0].mxu0
    %v3113 = vadd.f32 0.0, %v3112
    %v3114 = vpop.f32.mrb[0].mxu0
    %3115 = vmatprep.mubr.f32.mxu0 0.0
    %3116 = vmatmul.mubr.f32.gmra.mrb[0].mxu0 %v3044
    %v3117 = vpop.f32.mrb[0].mxu0
    %v3118 = vadd.f32 0.0, %v3117
    %v3119 = vpop.f32.mrb[0].mxu0
    %3120 = vdwg.mxu0
    %3121 = vrot.lane.b32.xlu0 %v2505, 104
    %v3122 = vpop.permute.xlu0 %3121
    %3123 = vrot.lane.b32.xlu0 %v2510, 104
    %v3124 = vpop.permute.xlu0 %3123
    %3125 = vrot.lane.b32.xlu0 %v2505, 72
    %v3126 = vpop.permute.xlu0 %3125
    %3127 = vrot.lane.b32.xlu0 %v2510, 72
    %v3128 = vpop.permute.xlu0 %3127
    %v3129 = vsel %vm264, %v3122, 0
    %v3131 = vsel %vm264, %v3124, 0
    %v3133 = vsel %vm264, %v3126, 0
    %v3135 = vsel %vm264, %v3128, 0
    %3137 = vmatprep.subr.mxu0 0.0
    %3138 = vmatpush1.xpose.msra.mxu0 %v3133
    %3139 = vmatprep.subr.mxu0 0.0
    %3140 = vmatpush1.xpose.msra.mxu0 %v3135
    %3141 = vmatprep.subr.mxu0 0.0
    %3142 = vmatpush1.xpose.msra.mxu0 0.0
    %3143 = vmatprep.subr.mxu0 0.0
    %3144 = vmatpush1.xpose.msra.mxu0 0.0
    %3145 = vmatprep.subr.mxu0 0.0
    %3146 = vmatpush1.xpose.msra.mxu0 0.0
    %3147 = vmatprep.subr.mxu0 0.0
    %3148 = vmatpush1.xpose.msra.mxu0 0.0
    %3149 = vmatprep.subr.mxu0 0.0
    %3150 = vmatpush1.xpose.msra.mxu0 0.0
    %3151 = vmatprep.subr.mxu0 0.0
    %3152 = vmatpush1.xpose.msra.mxu0 0.0
    %3153 = vmatprep.subr.mxu0 0.0
    %3154 = vmatpush1.xpose.msra.mxu0 0.0
    %3155 = vmatprep.subr.mxu0 0.0
    %3156 = vmatpush1.xpose.msra.mxu0 0.0
    %3157 = vmatprep.subr.mxu0 0.0
    %3158 = vmatpush1.xpose.msra.mxu0 0.0
    %3159 = vmatprep.subr.mxu0 0.0
    %3160 = vmatpush1.xpose.msra.mxu0 0.0
    %3161 = vmatprep.subr.mxu0 0.0
    %3162 = vmatpush1.xpose.msra.mxu0 0.0
    %3163 = vmatprep.subr.mxu0 0.0
    %3164 = vmatpush1.xpose.msra.mxu0 0.0
    %3165 = vmatprep.subr.mxu0 0.0
    %3166 = vmatpush1.xpose.msra.mxu0 0.0
    %3167 = vmatprep.subr.mxu0 0.0
    %3168 = vmatpush1.xpose.msra.mxu0 0.0
    %3169 = vmatprep.subr.mxu0 0.0
    %3170 = vmatpush1.xpose.msra.mxu0 0.0
    %3171 = vmatprep.subr.mxu0 0.0
    %3172 = vmatpush1.xpose.msra.mxu0 0.0
    %3173 = vmatprep.subr.mxu0 0.0
    %3174 = vmatpush1.xpose.msra.mxu0 0.0
    %3175 = vmatprep.subr.mxu0 0.0
    %3176 = vmatpush1.xpose.msra.mxu0 0.0
    %3177 = vmatprep.subr.mxu0 0.0
    %3178 = vmatpush1.xpose.msra.mxu0 0.0
    %3179 = vmatprep.subr.mxu0 0.0
    %3180 = vmatpush1.xpose.msra.mxu0 0.0
    %3181 = vmatprep.subr.mxu0 0.0
    %3182 = vmatpush1.xpose.msra.mxu0 0.0
    %3183 = vmatprep.subr.mxu0 0.0
    %3184 = vmatpush1.xpose.msra.mxu0 0.0
    %3185 = vmatprep.subr.mxu0 0.0
    %3186 = vmatpush1.xpose.msra.mxu0 0.0
    %3187 = vmatprep.subr.mxu0 0.0
    %3188 = vmatpush1.xpose.msra.mxu0 0.0
    %3189 = vmatprep.subr.mxu0 0.0
    %3190 = vmatpush1.xpose.msra.mxu0 0.0
    %3191 = vmatprep.subr.mxu0 0.0
    %3192 = vmatpush1.xpose.msra.mxu0 0.0
    %3193 = vmatprep.subr.mxu0 0.0
    %3194 = vmatpush1.xpose.msra.mxu0 0.0
    %3195 = vmatprep.subr.mxu0 0.0
    %3196 = vmatpush1.xpose.msra.mxu0 0.0
    %3197 = vmatprep.subr.mxu0 0.0
    %3198 = vmatpush1.xpose.msra.mxu0 0.0
    %3199 = vmatprep.subr.mxu0 0.0
    %3200 = vmatpush1.xpose.msra.mxu0 0.0
    %3201 = vmatprep.mubr.f32.mxu0 0.0
    %3202 = vmatmul.mubr.f32.gmra.mrb[0].mxu0 %v3129
    %v3203 = vpop.f32.mrb[0].mxu0
    %v3204 = vadd.f32 0.0, %v3203
    %v3205 = vpop.f32.mrb[0].mxu0
    %3206 = vmatprep.mubr.f32.mxu0 0.0
    %3207 = vmatmul.mubr.f32.gmra.mrb[0].mxu0 %v3131
    %v3208 = vpop.f32.mrb[0].mxu0
    %v3209 = vadd.f32 0.0, %v3208
    %v3210 = vpop.f32.mrb[0].mxu0
    %3211 = vdwg.mxu0
    %v3212 = vsel %vm348, %v3204, -inf
    %3213 = vmax.xlane.f32.xlu0 %v3212
    %v3214 = vpop.xlane.xlu0 %3213
    %v3215 = vsel %vm348, %v3209, -inf
    %3216 = vmax.xlane.f32.xlu0 %v3215
    %v3217 = vpop.xlane.xlu0 %3216
    %v3218 = vsub.f32 %v3204, %v3214
    %v3219 = vsub.f32 %v3209, %v3217
    %v3220 = vmul.f32 %v3218, 1.442695
    %v3221 = vpow.pop %v3220
    %v3222 = vmul.f32 %v3219, 1.442695
    %v3223 = vpow.pop %v3222
    %v3224 = vsel %vm348, %v3221, 0.0
    %3225 = vadd.xlane.f32.xlu0 %v3224
    %v3226 = vpop.xlane.xlu0 %3225
    %v3227 = vsel %vm348, %v3223, 0.0
    %3228 = vadd.xlane.f32.xlu0 %v3227
    %v3229 = vpop.xlane.xlu0 %3228
    %v3230 = vrcp.pop %v3226
    %v3231 = vrcp.pop %v3229
    %v3232 = vmul.f32 %v3221, %v3230
    %v3233 = vmul.f32 %v3223, %v3231
    %3234 = vrot.lane.b32.xlu0 %v2505, 40
    %v3235 = vpop.permute.xlu0 %3234
    %3236 = vrot.lane.b32.xlu0 %v2510, 40
    %v3237 = vpop.permute.xlu0 %3236
    %v3241 = vsel %vm348, %v3232, 0
    %v3244 = vsel %vm348, %v3233, 0
    %3246 = vmatprep.subr.mxu0 0.0
    %3247 = vmatpush1.msra.mxu0 %v3235
    %3248 = vmatprep.subr.mxu0 0.0
    %3249 = vmatpush1.msra.mxu0 %v3237
    %3250 = vmatprep.subr.mxu0 0.0
    %3251 = vmatpush1.msra.mxu0 0.0
    %3252 = vmatprep.subr.mxu0 0.0
    %3253 = vmatpush1.msra.mxu0 0.0
    %3254 = vmatprep.subr.mxu0 0.0
    %3255 = vmatpush1.msra.mxu0 0.0
    %3256 = vmatprep.subr.mxu0 0.0
    %3257 = vmatpush1.msra.mxu0 0.0
    %3258 = vmatprep.subr.mxu0 0.0
    %3259 = vmatpush1.msra.mxu0 0.0
    %3260 = vmatprep.subr.mxu0 0.0
    %3261 = vmatpush1.msra.mxu0 0.0
    %3262 = vmatprep.subr.mxu0 0.0
    %3263 = vmatpush1.msra.mxu0 0.0
    %3264 = vmatprep.subr.mxu0 0.0
    %3265 = vmatpush1.msra.mxu0 0.0
    %3266 = vmatprep.subr.mxu0 0.0
    %3267 = vmatpush1.msra.mxu0 0.0
    %3268 = vmatprep.subr.mxu0 0.0
    %3269 = vmatpush1.msra.mxu0 0.0
    %3270 = vmatprep.subr.mxu0 0.0
    %3271 = vmatpush1.msra.mxu0 0.0
    %3272 = vmatprep.subr.mxu0 0.0
    %3273 = vmatpush1.msra.mxu0 0.0
    %3274 = vmatprep.subr.mxu0 0.0
    %3275 = vmatpush1.msra.mxu0 0.0
    %3276 = vmatprep.subr.mxu0 0.0
    %3277 = vmatpush1.msra.mxu0 0.0
    %3278 = vmatprep.subr.mxu0 0.0
    %3279 = vmatpush1.msra.mxu0 0.0
    %3280 = vmatprep.subr.mxu0 0.0
    %3281 = vmatpush1.msra.mxu0 0.0
    %3282 = vmatprep.subr.mxu0 0.0
    %3283 = vmatpush1.msra.mxu0 0.0
    %3284 = vmatprep.subr.mxu0 0.0
    %3285 = vmatpush1.msra.mxu0 0.0
    %3286 = vmatprep.subr.mxu0 0.0
    %3287 = vmatpush1.msra.mxu0 0.0
    %3288 = vmatprep.subr.mxu0 0.0
    %3289 = vmatpush1.msra.mxu0 0.0
    %3290 = vmatprep.subr.mxu0 0.0
    %3291 = vmatpush1.msra.mxu0 0.0
    %3292 = vmatprep.subr.mxu0 0.0
    %3293 = vmatpush1.msra.mxu0 0.0
    %3294 = vmatprep.subr.mxu0 0.0
    %3295 = vmatpush1.msra.mxu0 0.0
    %3296 = vmatprep.subr.mxu0 0.0
    %3297 = vmatpush1.msra.mxu0 0.0
    %3298 = vmatprep.subr.mxu0 0.0
    %3299 = vmatpush1.msra.mxu0 0.0
    %3300 = vmatprep.subr.mxu0 0.0
    %3301 = vmatpush1.msra.mxu0 0.0
    %3302 = vmatprep.subr.mxu0 0.0
    %3303 = vmatpush1.msra.mxu0 0.0
    %3304 = vmatprep.subr.mxu0 0.0
    %3305 = vmatpush1.msra.mxu0 0.0
    %3306 = vmatprep.subr.mxu0 0.0
    %3307 = vmatpush1.msra.mxu0 0.0
    %3308 = vmatprep.subr.mxu0 0.0
    %3309 = vmatpush1.msra.mxu0 0.0
    %3310 = vmatprep.mubr.f32.mxu0 0.0
    %3311 = vmatmul.mubr.f32.gmra.mrb[0].mxu0 %v3241
    %v3312 = vpop.f32.mrb[0].mxu0
    %v3313 = vadd.f32 0.0, %v3312
    %v3314 = vpop.f32.mrb[0].mxu0
    %3315 = vmatprep.mubr.f32.mxu0 0.0
    %3316 = vmatmul.mubr.f32.gmra.mrb[0].mxu0 %v3244
    %v3317 = vpop.f32.mrb[0].mxu0
    %v3318 = vadd.f32 0.0, %v3317
    %v3319 = vpop.f32.mrb[0].mxu0
    %3320 = vdwg.mxu0
    %3323 = vrot.lane.b32.xlu0 %v2913, 8
    %v3324 = vpop.permute.xlu0 %3323
    %3325 = vrot.lane.b32.xlu0 %v2918, 8
    %v3326 = vpop.permute.xlu0 %3325
    %3331 = vrot.lane.b32.xlu0 %v3113, 16
    %v3332 = vpop.permute.xlu0 %3331
    %3333 = vrot.lane.b32.xlu0 %v3118, 16
    %v3334 = vpop.permute.xlu0 %3333
    %3339 = vrot.lane.b32.xlu0 %v3313, 24
    %v3340 = vpop.permute.xlu0 %3339
    %3341 = vrot.lane.b32.xlu0 %v3318, 24
    %v3342 = vpop.permute.xlu0 %3341
    %v3345 = vsel %vm264, %v2713, %v3324
    %v3346 = vsel %vm264, %v2718, %v3326
    %v3347 = vsel %vm348, %v3345, %v3332
    %v3348 = vsel %vm348, %v3346, %v3334
    %v3349 = vsel %vm1086, %v3347, %v3340
    %v3350 = vsel %vm1086, %v3348, %v3342
    %3353 = vrot.lane.b32.xlu0 %v2515, 96
    %v3354 = vpop.permute.xlu0 %3353
    %3355 = vrot.lane.b32.xlu0 %v2520, 96
    %v3356 = vpop.permute.xlu0 %3355
    %v3357 = vsel %vm264, %v2515, 0
    %v3359 = vsel %vm264, %v2520, 0
    %v3361 = vsel %vm264, %v3354, 0
    %v3363 = vsel %vm264, %v3356, 0
    %3365 = vmatprep.subr.mxu0 0.0
    %3366 = vmatpush1.xpose.msra.mxu0 %v3361
    %3367 = vmatprep.subr.mxu0 0.0
    %3368 = vmatpush1.xpose.msra.mxu0 %v3363
    %3369 = vmatprep.subr.mxu0 0.0
    %3370 = vmatpush1.xpose.msra.mxu0 0.0
    %3371 = vmatprep.subr.mxu0 0.0
    %3372 = vmatpush1.xpose.msra.mxu0 0.0
    %3373 = vmatprep.subr.mxu0 0.0
    %3374 = vmatpush1.xpose.msra.mxu0 0.0
    %3375 = vmatprep.subr.mxu0 0.0
    %3376 = vmatpush1.xpose.msra.mxu0 0.0
    %3377 = vmatprep.subr.mxu0 0.0
    %3378 = vmatpush1.xpose.msra.mxu0 0.0
    %3379 = vmatprep.subr.mxu0 0.0
    %3380 = vmatpush1.xpose.msra.mxu0 0.0
    %3381 = vmatprep.subr.mxu0 0.0
    %3382 = vmatpush1.xpose.msra.mxu0 0.0
    %3383 = vmatprep.subr.mxu0 0.0
    %3384 = vmatpush1.xpose.msra.mxu0 0.0
    %3385 = vmatprep.subr.mxu0 0.0
    %3386 = vmatpush1.xpose.msra.mxu0 0.0
    %3387 = vmatprep.subr.mxu0 0.0
    %3388 = vmatpush1.xpose.msra.mxu0 0.0
    %3389 = vmatprep.subr.mxu0 0.0
    %3390 = vmatpush1.xpose.msra.mxu0 0.0
    %3391 = vmatprep.subr.mxu0 0.0
    %3392 = vmatpush1.xpose.msra.mxu0 0.0
    %3393 = vmatprep.subr.mxu0 0.0
    %3394 = vmatpush1.xpose.msra.mxu0 0.0
    %3395 = vmatprep.subr.mxu0 0.0
    %3396 = vmatpush1.xpose.msra.mxu0 0.0
    %3397 = vmatprep.subr.mxu0 0.0
    %3398 = vmatpush1.xpose.msra.mxu0 0.0
    %3399 = vmatprep.subr.mxu0 0.0
    %3400 = vmatpush1.xpose.msra.mxu0 0.0
    %3401 = vmatprep.subr.mxu0 0.0
    %3402 = vmatpush1.xpose.msra.mxu0 0.0
    %3403 = vmatprep.subr.mxu0 0.0
    %3404 = vmatpush1.xpose.msra.mxu0 0.0
    %3405 = vmatprep.subr.mxu0 0.0
    %3406 = vmatpush1.xpose.msra.mxu0 0.0
    %3407 = vmatprep.subr.mxu0 0.0
    %3408 = vmatpush1.xpose.msra.mxu0 0.0
    %3409 = vmatprep.subr.mxu0 0.0
    %3410 = vmatpush1.xpose.msra.mxu0 0.0
    %3411 = vmatprep.subr.mxu0 0.0
    %3412 = vmatpush1.xpose.msra.mxu0 0.0
    %3413 = vmatprep.subr.mxu0 0.0
    %3414 = vmatpush1.xpose.msra.mxu0 0.0
    %3415 = vmatprep.subr.mxu0 0.0
    %3416 = vmatpush1.xpose.msra.mxu0 0.0
    %3417 = vmatprep.subr.mxu0 0.0
    %3418 = vmatpush1.xpose.msra.mxu0 0.0
    %3419 = vmatprep.subr.mxu0 0.0
    %3420 = vmatpush1.xpose.msra.mxu0 0.0
    %3421 = vmatprep.subr.mxu0 0.0
    %3422 = vmatpush1.xpose.msra.mxu0 0.0
    %3423 = vmatprep.subr.mxu0 0.0
    %3424 = vmatpush1.xpose.msra.mxu0 0.0
    %3425 = vmatprep.subr.mxu0 0.0
    %3426 = vmatpush1.xpose.msra.mxu0 0.0
    %3427 = vmatprep.subr.mxu0 0.0
    %3428 = vmatpush1.xpose.msra.mxu0 0.0
    %3429 = vmatprep.mubr.f32.mxu0 0.0
    %3430 = vmatmul.mubr.f32.gmra.mrb[0].mxu0 %v3357
    %v3431 = vpop.f32.mrb[0].mxu0
    %v3432 = vadd.f32 0.0, %v3431
    %v3433 = vpop.f32.mrb[0].mxu0
    %3434 = vmatprep.mubr.f32.mxu0 0.0
    %3435 = vmatmul.mubr.f32.gmra.mrb[0].mxu0 %v3359
    %v3436 = vpop.f32.mrb[0].mxu0
    %v3437 = vadd.f32 0.0, %v3436
    %v3438 = vpop.f32.mrb[0].mxu0
    %3439 = vdwg.mxu0
    %v3440 = vsel %vm348, %v3432, -inf
    %3441 = vmax.xlane.f32.xlu0 %v3440
    %v3442 = vpop.xlane.xlu0 %3441
    %v3443 = vsel %vm348, %v3437, -inf
    %3444 = vmax.xlane.f32.xlu0 %v3443
    %v3445 = vpop.xlane.xlu0 %3444
    %v3446 = vsub.f32 %v3432, %v3442
    %v3447 = vsub.f32 %v3437, %v3445
    %v3448 = vmul.f32 %v3446, 1.442695
    %v3449 = vpow.pop %v3448
    %v3450 = vmul.f32 %v3447, 1.442695
    %v3451 = vpow.pop %v3450
    %v3452 = vsel %vm348, %v3449, 0.0
    %3453 = vadd.xlane.f32.xlu0 %v3452
    %v3454 = vpop.xlane.xlu0 %3453
    %v3455 = vsel %vm348, %v3451, 0.0
    %3456 = vadd.xlane.f32.xlu0 %v3455
    %v3457 = vpop.xlane.xlu0 %3456
    %v3458 = vrcp.pop %v3454
    %v3459 = vrcp.pop %v3457
    %v3460 = vmul.f32 %v3449, %v3458
    %v3461 = vmul.f32 %v3451, %v3459
    %3462 = vrot.lane.b32.xlu0 %v2515, 64
    %v3463 = vpop.permute.xlu0 %3462
    %3464 = vrot.lane.b32.xlu0 %v2520, 64
    %v3465 = vpop.permute.xlu0 %3464
    %v3469 = vsel %vm348, %v3460, 0
    %v3472 = vsel %vm348, %v3461, 0
    %3474 = vmatprep.subr.mxu0 0.0
    %3475 = vmatpush1.msra.mxu0 %v3463
    %3476 = vmatprep.subr.mxu0 0.0
    %3477 = vmatpush1.msra.mxu0 %v3465
    %3478 = vmatprep.subr.mxu0 0.0
    %3479 = vmatpush1.msra.mxu0 0.0
    %3480 = vmatprep.subr.mxu0 0.0
    %3481 = vmatpush1.msra.mxu0 0.0
    %3482 = vmatprep.subr.mxu0 0.0
    %3483 = vmatpush1.msra.mxu0 0.0
    %3484 = vmatprep.subr.mxu0 0.0
    %3485 = vmatpush1.msra.mxu0 0.0
    %3486 = vmatprep.subr.mxu0 0.0
    %3487 = vmatpush1.msra.mxu0 0.0
    %3488 = vmatprep.subr.mxu0 0.0
    %3489 = vmatpush1.msra.mxu0 0.0
    %3490 = vmatprep.subr.mxu0 0.0
    %3491 = vmatpush1.msra.mxu0 0.0
    %3492 = vmatprep.subr.mxu0 0.0
    %3493 = vmatpush1.msra.mxu0 0.0
    %3494 = vmatprep.subr.mxu0 0.0
    %3495 = vmatpush1.msra.mxu0 0.0
    %3496 = vmatprep.subr.mxu0 0.0
    %3497 = vmatpush1.msra.mxu0 0.0
    %3498 = vmatprep.subr.mxu0 0.0
    %3499 = vmatpush1.msra.mxu0 0.0
    %3500 = vmatprep.subr.mxu0 0.0
    %3501 = vmatpush1.msra.mxu0 0.0
    %3502 = vmatprep.subr.mxu0 0.0
    %3503 = vmatpush1.msra.mxu0 0.0
    %3504 = vmatprep.subr.mxu0 0.0
    %3505 = vmatpush1.msra.mxu0 0.0
    %3506 = vmatprep.subr.mxu0 0.0
    %3507 = vmatpush1.msra.mxu0 0.0
    %3508 = vmatprep.subr.mxu0 0.0
    %3509 = vmatpush1.msra.mxu0 0.0
    %3510 = vmatprep.subr.mxu0 0.0
    %3511 = vmatpush1.msra.mxu0 0.0
    %3512 = vmatprep.subr.mxu0 0.0
    %3513 = vmatpush1.msra.mxu0 0.0
    %3514 = vmatprep.subr.mxu0 0.0
    %3515 = vmatpush1.msra.mxu0 0.0
    %3516 = vmatprep.subr.mxu0 0.0
    %3517 = vmatpush1.msra.mxu0 0.0
    %3518 = vmatprep.subr.mxu0 0.0
    %3519 = vmatpush1.msra.mxu0 0.0
    %3520 = vmatprep.subr.mxu0 0.0
    %3521 = vmatpush1.msra.mxu0 0.0
    %3522 = vmatprep.subr.mxu0 0.0
    %3523 = vmatpush1.msra.mxu0 0.0
    %3524 = vmatprep.subr.mxu0 0.0
    %3525 = vmatpush1.msra.mxu0 0.0
    %3526 = vmatprep.subr.mxu0 0.0
    %3527 = vmatpush1.msra.mxu0 0.0
    %3528 = vmatprep.subr.mxu0 0.0
    %3529 = vmatpush1.msra.mxu0 0.0
    %3530 = vmatprep.subr.mxu0 0.0
    %3531 = vmatpush1.msra.mxu0 0.0
    %3532 = vmatprep.subr.mxu0 0.0
    %3533 = vmatpush1.msra.mxu0 0.0
    %3534 = vmatprep.subr.mxu0 0.0
    %3535 = vmatpush1.msra.mxu0 0.0
    %3536 = vmatprep.subr.mxu0 0.0
    %3537 = vmatpush1.msra.mxu0 0.0
    %3538 = vmatprep.mubr.f32.mxu0 0.0
    %3539 = vmatmul.mubr.f32.gmra.mrb[0].mxu0 %v3469
    %v3540 = vpop.f32.mrb[0].mxu0
    %v3541 = vadd.f32 0.0, %v3540
    %v3542 = vpop.f32.mrb[0].mxu0
    %3543 = vmatprep.mubr.f32.mxu0 0.0
    %3544 = vmatmul.mubr.f32.gmra.mrb[0].mxu0 %v3472
    %v3545 = vpop.f32.mrb[0].mxu0
    %v3546 = vadd.f32 0.0, %v3545
    %v3547 = vpop.f32.mrb[0].mxu0
    %3548 = vdwg.mxu0
    %3549 = vrot.lane.b32.xlu0 %v2515, 120
    %v3550 = vpop.permute.xlu0 %3549
    %3551 = vrot.lane.b32.xlu0 %v2520, 120
    %v3552 = vpop.permute.xlu0 %3551
    %3553 = vrot.lane.b32.xlu0 %v2515, 88
    %v3554 = vpop.permute.xlu0 %3553
    %3555 = vrot.lane.b32.xlu0 %v2520, 88
    %v3556 = vpop.permute.xlu0 %3555
    %v3557 = vsel %vm264, %v3550, 0
    %v3559 = vsel %vm264, %v3552, 0
    %v3561 = vsel %vm264, %v3554, 0
    %v3563 = vsel %vm264, %v3556, 0
    %3565 = vmatprep.subr.mxu0 0.0
    %3566 = vmatpush1.xpose.msra.mxu0 %v3561
    %3567 = vmatprep.subr.mxu0 0.0
    %3568 = vmatpush1.xpose.msra.mxu0 %v3563
    %3569 = vmatprep.subr.mxu0 0.0
    %3570 = vmatpush1.xpose.msra.mxu0 0.0
    %3571 = vmatprep.subr.mxu0 0.0
    %3572 = vmatpush1.xpose.msra.mxu0 0.0
    %3573 = vmatprep.subr.mxu0 0.0
    %3574 = vmatpush1.xpose.msra.mxu0 0.0
    %3575 = vmatprep.subr.mxu0 0.0
    %3576 = vmatpush1.xpose.msra.mxu0 0.0
    %3577 = vmatprep.subr.mxu0 0.0
    %3578 = vmatpush1.xpose.msra.mxu0 0.0
    %3579 = vmatprep.subr.mxu0 0.0
    %3580 = vmatpush1.xpose.msra.mxu0 0.0
    %3581 = vmatprep.subr.mxu0 0.0
    %3582 = vmatpush1.xpose.msra.mxu0 0.0
    %3583 = vmatprep.subr.mxu0 0.0
    %3584 = vmatpush1.xpose.msra.mxu0 0.0
    %3585 = vmatprep.subr.mxu0 0.0
    %3586 = vmatpush1.xpose.msra.mxu0 0.0
    %3587 = vmatprep.subr.mxu0 0.0
    %3588 = vmatpush1.xpose.msra.mxu0 0.0
    %3589 = vmatprep.subr.mxu0 0.0
    %3590 = vmatpush1.xpose.msra.mxu0 0.0
    %3591 = vmatprep.subr.mxu0 0.0
    %3592 = vmatpush1.xpose.msra.mxu0 0.0
    %3593 = vmatprep.subr.mxu0 0.0
    %3594 = vmatpush1.xpose.msra.mxu0 0.0
    %3595 = vmatprep.subr.mxu0 0.0
    %3596 = vmatpush1.xpose.msra.mxu0 0.0
    %3597 = vmatprep.subr.mxu0 0.0
    %3598 = vmatpush1.xpose.msra.mxu0 0.0
    %3599 = vmatprep.subr.mxu0 0.0
    %3600 = vmatpush1.xpose.msra.mxu0 0.0
    %3601 = vmatprep.subr.mxu0 0.0
    %3602 = vmatpush1.xpose.msra.mxu0 0.0
    %3603 = vmatprep.subr.mxu0 0.0
    %3604 = vmatpush1.xpose.msra.mxu0 0.0
    %3605 = vmatprep.subr.mxu0 0.0
    %3606 = vmatpush1.xpose.msra.mxu0 0.0
    %3607 = vmatprep.subr.mxu0 0.0
    %3608 = vmatpush1.xpose.msra.mxu0 0.0
    %3609 = vmatprep.subr.mxu0 0.0
    %3610 = vmatpush1.xpose.msra.mxu0 0.0
    %3611 = vmatprep.subr.mxu0 0.0
    %3612 = vmatpush1.xpose.msra.mxu0 0.0
    %3613 = vmatprep.subr.mxu0 0.0
    %3614 = vmatpush1.xpose.msra.mxu0 0.0
    %3615 = vmatprep.subr.mxu0 0.0
    %3616 = vmatpush1.xpose.msra.mxu0 0.0
    %3617 = vmatprep.subr.mxu0 0.0
    %3618 = vmatpush1.xpose.msra.mxu0 0.0
    %3619 = vmatprep.subr.mxu0 0.0
    %3620 = vmatpush1.xpose.msra.mxu0 0.0
    %3621 = vmatprep.subr.mxu0 0.0
    %3622 = vmatpush1.xpose.msra.mxu0 0.0
    %3623 = vmatprep.subr.mxu0 0.0
    %3624 = vmatpush1.xpose.msra.mxu0 0.0
    %3625 = vmatprep.subr.mxu0 0.0
    %3626 = vmatpush1.xpose.msra.mxu0 0.0
    %3627 = vmatprep.subr.mxu0 0.0
    %3628 = vmatpush1.xpose.msra.mxu0 0.0
    %3629 = vmatprep.mubr.f32.mxu0 0.0
    %3630 = vmatmul.mubr.f32.gmra.mrb[0].mxu0 %v3557
    %v3631 = vpop.f32.mrb[0].mxu0
    %v3632 = vadd.f32 0.0, %v3631
    %v3633 = vpop.f32.mrb[0].mxu0
    %3634 = vmatprep.mubr.f32.mxu0 0.0
    %3635 = vmatmul.mubr.f32.gmra.mrb[0].mxu0 %v3559
    %v3636 = vpop.f32.mrb[0].mxu0
    %v3637 = vadd.f32 0.0, %v3636
    %v3638 = vpop.f32.mrb[0].mxu0
    %3639 = vdwg.mxu0
    %v3640 = vsel %vm348, %v3632, -inf
    %3641 = vmax.xlane.f32.xlu0 %v3640
    %v3642 = vpop.xlane.xlu0 %3641
    %v3643 = vsel %vm348, %v3637, -inf
    %3644 = vmax.xlane.f32.xlu0 %v3643
    %v3645 = vpop.xlane.xlu0 %3644
    %v3646 = vsub.f32 %v3632, %v3642
    %v3647 = vsub.f32 %v3637, %v3645
    %v3648 = vmul.f32 %v3646, 1.442695
    %v3649 = vpow.pop %v3648
    %v3650 = vmul.f32 %v3647, 1.442695
    %v3651 = vpow.pop %v3650
    %v3652 = vsel %vm348, %v3649, 0.0
    %3653 = vadd.xlane.f32.xlu0 %v3652
    %v3654 = vpop.xlane.xlu0 %3653
    %v3655 = vsel %vm348, %v3651, 0.0
    %3656 = vadd.xlane.f32.xlu0 %v3655
    %v3657 = vpop.xlane.xlu0 %3656
    %v3658 = vrcp.pop %v3654
    %v3659 = vrcp.pop %v3657
    %v3660 = vmul.f32 %v3649, %v3658
    %v3661 = vmul.f32 %v3651, %v3659
    %3662 = vrot.lane.b32.xlu0 %v2515, 56
    %v3663 = vpop.permute.xlu0 %3662
    %3664 = vrot.lane.b32.xlu0 %v2520, 56
    %v3665 = vpop.permute.xlu0 %3664
    %v3669 = vsel %vm348, %v3660, 0
    %v3672 = vsel %vm348, %v3661, 0
    %3674 = vmatprep.subr.mxu0 0.0
    %3675 = vmatpush1.msra.mxu0 %v3663
    %3676 = vmatprep.subr.mxu0 0.0
    %3677 = vmatpush1.msra.mxu0 %v3665
    %3678 = vmatprep.subr.mxu0 0.0
    %3679 = vmatpush1.msra.mxu0 0.0
    %3680 = vmatprep.subr.mxu0 0.0
    %3681 = vmatpush1.msra.mxu0 0.0
    %3682 = vmatprep.subr.mxu0 0.0
    %3683 = vmatpush1.msra.mxu0 0.0
    %3684 = vmatprep.subr.mxu0 0.0
    %3685 = vmatpush1.msra.mxu0 0.0
    %3686 = vmatprep.subr.mxu0 0.0
    %3687 = vmatpush1.msra.mxu0 0.0
    %3688 = vmatprep.subr.mxu0 0.0
    %3689 = vmatpush1.msra.mxu0 0.0
    %3690 = vmatprep.subr.mxu0 0.0
    %3691 = vmatpush1.msra.mxu0 0.0
    %3692 = vmatprep.subr.mxu0 0.0
    %3693 = vmatpush1.msra.mxu0 0.0
    %3694 = vmatprep.subr.mxu0 0.0
    %3695 = vmatpush1.msra.mxu0 0.0
    %3696 = vmatprep.subr.mxu0 0.0
    %3697 = vmatpush1.msra.mxu0 0.0
    %3698 = vmatprep.subr.mxu0 0.0
    %3699 = vmatpush1.msra.mxu0 0.0
    %3700 = vmatprep.subr.mxu0 0.0
    %3701 = vmatpush1.msra.mxu0 0.0
    %3702 = vmatprep.subr.mxu0 0.0
    %3703 = vmatpush1.msra.mxu0 0.0
    %3704 = vmatprep.subr.mxu0 0.0
    %3705 = vmatpush1.msra.mxu0 0.0
    %3706 = vmatprep.subr.mxu0 0.0
    %3707 = vmatpush1.msra.mxu0 0.0
    %3708 = vmatprep.subr.mxu0 0.0
    %3709 = vmatpush1.msra.mxu0 0.0
    %3710 = vmatprep.subr.mxu0 0.0
    %3711 = vmatpush1.msra.mxu0 0.0
    %3712 = vmatprep.subr.mxu0 0.0
    %3713 = vmatpush1.msra.mxu0 0.0
    %3714 = vmatprep.subr.mxu0 0.0
    %3715 = vmatpush1.msra.mxu0 0.0
    %3716 = vmatprep.subr.mxu0 0.0
    %3717 = vmatpush1.msra.mxu0 0.0
    %3718 = vmatprep.subr.mxu0 0.0
    %3719 = vmatpush1.msra.mxu0 0.0
    %3720 = vmatprep.subr.mxu0 0.0
    %3721 = vmatpush1.msra.mxu0 0.0
    %3722 = vmatprep.subr.mxu0 0.0
    %3723 = vmatpush1.msra.mxu0 0.0
    %3724 = vmatprep.subr.mxu0 0.0
    %3725 = vmatpush1.msra.mxu0 0.0
    %3726 = vmatprep.subr.mxu0 0.0
    %3727 = vmatpush1.msra.mxu0 0.0
    %3728 = vmatprep.subr.mxu0 0.0
    %3729 = vmatpush1.msra.mxu0 0.0
    %3730 = vmatprep.subr.mxu0 0.0
    %3731 = vmatpush1.msra.mxu0 0.0
    %3732 = vmatprep.subr.mxu0 0.0
    %3733 = vmatpush1.msra.mxu0 0.0
    %3734 = vmatprep.subr.mxu0 0.0
    %3735 = vmatpush1.msra.mxu0 0.0
    %3736 = vmatprep.subr.mxu0 0.0
    %3737 = vmatpush1.msra.mxu0 0.0
    %3738 = vmatprep.mubr.f32.mxu0 0.0
    %3739 = vmatmul.mubr.f32.gmra.mrb[0].mxu0 %v3669
    %v3740 = vpop.f32.mrb[0].mxu0
    %v3741 = vadd.f32 0.0, %v3740
    %v3742 = vpop.f32.mrb[0].mxu0
    %3743 = vmatprep.mubr.f32.mxu0 0.0
    %3744 = vmatmul.mubr.f32.gmra.mrb[0].mxu0 %v3672
    %v3745 = vpop.f32.mrb[0].mxu0
    %v3746 = vadd.f32 0.0, %v3745
    %v3747 = vpop.f32.mrb[0].mxu0
    %3748 = vdwg.mxu0
    %3749 = vrot.lane.b32.xlu0 %v2515, 112
    %v3750 = vpop.permute.xlu0 %3749
    %3751 = vrot.lane.b32.xlu0 %v2520, 112
    %v3752 = vpop.permute.xlu0 %3751
    %3753 = vrot.lane.b32.xlu0 %v2515, 80
    %v3754 = vpop.permute.xlu0 %3753
    %3755 = vrot.lane.b32.xlu0 %v2520, 80
    %v3756 = vpop.permute.xlu0 %3755
    %v3757 = vsel %vm264, %v3750, 0
    %v3759 = vsel %vm264, %v3752, 0
    %v3761 = vsel %vm264, %v3754, 0
    %v3763 = vsel %vm264, %v3756, 0
    %3765 = vmatprep.subr.mxu0 0.0
    %3766 = vmatpush1.xpose.msra.mxu0 %v3761
    %3767 = vmatprep.subr.mxu0 0.0
    %3768 = vmatpush1.xpose.msra.mxu0 %v3763
    %3769 = vmatprep.subr.mxu0 0.0
    %3770 = vmatpush1.xpose.msra.mxu0 0.0
    %3771 = vmatprep.subr.mxu0 0.0
    %3772 = vmatpush1.xpose.msra.mxu0 0.0
    %3773 = vmatprep.subr.mxu0 0.0
    %3774 = vmatpush1.xpose.msra.mxu0 0.0
    %3775 = vmatprep.subr.mxu0 0.0
    %3776 = vmatpush1.xpose.msra.mxu0 0.0
    %3777 = vmatprep.subr.mxu0 0.0
    %3778 = vmatpush1.xpose.msra.mxu0 0.0
    %3779 = vmatprep.subr.mxu0 0.0
    %3780 = vmatpush1.xpose.msra.mxu0 0.0
    %3781 = vmatprep.subr.mxu0 0.0
    %3782 = vmatpush1.xpose.msra.mxu0 0.0
    %3783 = vmatprep.subr.mxu0 0.0
    %3784 = vmatpush1.xpose.msra.mxu0 0.0
    %3785 = vmatprep.subr.mxu0 0.0
    %3786 = vmatpush1.xpose.msra.mxu0 0.0
    %3787 = vmatprep.subr.mxu0 0.0
    %3788 = vmatpush1.xpose.msra.mxu0 0.0
    %3789 = vmatprep.subr.mxu0 0.0
    %3790 = vmatpush1.xpose.msra.mxu0 0.0
    %3791 = vmatprep.subr.mxu0 0.0
    %3792 = vmatpush1.xpose.msra.mxu0 0.0
    %3793 = vmatprep.subr.mxu0 0.0
    %3794 = vmatpush1.xpose.msra.mxu0 0.0
    %3795 = vmatprep.subr.mxu0 0.0
    %3796 = vmatpush1.xpose.msra.mxu0 0.0
    %3797 = vmatprep.subr.mxu0 0.0
    %3798 = vmatpush1.xpose.msra.mxu0 0.0
    %3799 = vmatprep.subr.mxu0 0.0
    %3800 = vmatpush1.xpose.msra.mxu0 0.0
    %3801 = vmatprep.subr.mxu0 0.0
    %3802 = vmatpush1.xpose.msra.mxu0 0.0
    %3803 = vmatprep.subr.mxu0 0.0
    %3804 = vmatpush1.xpose.msra.mxu0 0.0
    %3805 = vmatprep.subr.mxu0 0.0
    %3806 = vmatpush1.xpose.msra.mxu0 0.0
    %3807 = vmatprep.subr.mxu0 0.0
    %3808 = vmatpush1.xpose.msra.mxu0 0.0
    %3809 = vmatprep.subr.mxu0 0.0
    %3810 = vmatpush1.xpose.msra.mxu0 0.0
    %3811 = vmatprep.subr.mxu0 0.0
    %3812 = vmatpush1.xpose.msra.mxu0 0.0
    %3813 = vmatprep.subr.mxu0 0.0
    %3814 = vmatpush1.xpose.msra.mxu0 0.0
    %3815 = vmatprep.subr.mxu0 0.0
    %3816 = vmatpush1.xpose.msra.mxu0 0.0
    %3817 = vmatprep.subr.mxu0 0.0
    %3818 = vmatpush1.xpose.msra.mxu0 0.0
    %3819 = vmatprep.subr.mxu0 0.0
    %3820 = vmatpush1.xpose.msra.mxu0 0.0
    %3821 = vmatprep.subr.mxu0 0.0
    %3822 = vmatpush1.xpose.msra.mxu0 0.0
    %3823 = vmatprep.subr.mxu0 0.0
    %3824 = vmatpush1.xpose.msra.mxu0 0.0
    %3825 = vmatprep.subr.mxu0 0.0
    %3826 = vmatpush1.xpose.msra.mxu0 0.0
    %3827 = vmatprep.subr.mxu0 0.0
    %3828 = vmatpush1.xpose.msra.mxu0 0.0
    %3829 = vmatprep.mubr.f32.mxu0 0.0
    %3830 = vmatmul.mubr.f32.gmra.mrb[0].mxu0 %v3757
    %v3831 = vpop.f32.mrb[0].mxu0
    %v3832 = vadd.f32 0.0, %v3831
    %v3833 = vpop.f32.mrb[0].mxu0
    %3834 = vmatprep.mubr.f32.mxu0 0.0
    %3835 = vmatmul.mubr.f32.gmra.mrb[0].mxu0 %v3759
    %v3836 = vpop.f32.mrb[0].mxu0
    %v3837 = vadd.f32 0.0, %v3836
    %v3838 = vpop.f32.mrb[0].mxu0
    %3839 = vdwg.mxu0
    %v3840 = vsel %vm348, %v3832, -inf
    %3841 = vmax.xlane.f32.xlu0 %v3840
    %v3842 = vpop.xlane.xlu0 %3841
    %v3843 = vsel %vm348, %v3837, -inf
    %3844 = vmax.xlane.f32.xlu0 %v3843
    %v3845 = vpop.xlane.xlu0 %3844
    %v3846 = vsub.f32 %v3832, %v3842
    %v3847 = vsub.f32 %v3837, %v3845
    %v3848 = vmul.f32 %v3846, 1.442695
    %v3849 = vpow.pop %v3848
    %v3850 = vmul.f32 %v3847, 1.442695
    %v3851 = vpow.pop %v3850
    %v3852 = vsel %vm348, %v3849, 0.0
    %3853 = vadd.xlane.f32.xlu0 %v3852
    %v3854 = vpop.xlane.xlu0 %3853
    %v3855 = vsel %vm348, %v3851, 0.0
    %3856 = vadd.xlane.f32.xlu0 %v3855
    %v3857 = vpop.xlane.xlu0 %3856
    %v3858 = vrcp.pop %v3854
    %v3859 = vrcp.pop %v3857
    %v3860 = vmul.f32 %v3849, %v3858
    %v3861 = vmul.f32 %v3851, %v3859
    %3862 = vrot.lane.b32.xlu0 %v2515, 48
    %v3863 = vpop.permute.xlu0 %3862
    %3864 = vrot.lane.b32.xlu0 %v2520, 48
    %v3865 = vpop.permute.xlu0 %3864
    %v3869 = vsel %vm348, %v3860, 0
    %v3872 = vsel %vm348, %v3861, 0
    %3874 = vmatprep.subr.mxu0 0.0
    %3875 = vmatpush1.msra.mxu0 %v3863
    %3876 = vmatprep.subr.mxu0 0.0
    %3877 = vmatpush1.msra.mxu0 %v3865
    %3878 = vmatprep.subr.mxu0 0.0
    %3879 = vmatpush1.msra.mxu0 0.0
    %3880 = vmatprep.subr.mxu0 0.0
    %3881 = vmatpush1.msra.mxu0 0.0
    %3882 = vmatprep.subr.mxu0 0.0
    %3883 = vmatpush1.msra.mxu0 0.0
    %3884 = vmatprep.subr.mxu0 0.0
    %3885 = vmatpush1.msra.mxu0 0.0
    %3886 = vmatprep.subr.mxu0 0.0
    %3887 = vmatpush1.msra.mxu0 0.0
    %3888 = vmatprep.subr.mxu0 0.0
    %3889 = vmatpush1.msra.mxu0 0.0
    %3890 = vmatprep.subr.mxu0 0.0
    %3891 = vmatpush1.msra.mxu0 0.0
    %3892 = vmatprep.subr.mxu0 0.0
    %3893 = vmatpush1.msra.mxu0 0.0
    %3894 = vmatprep.subr.mxu0 0.0
    %3895 = vmatpush1.msra.mxu0 0.0
    %3896 = vmatprep.subr.mxu0 0.0
    %3897 = vmatpush1.msra.mxu0 0.0
    %3898 = vmatprep.subr.mxu0 0.0
    %3899 = vmatpush1.msra.mxu0 0.0
    %3900 = vmatprep.subr.mxu0 0.0
    %3901 = vmatpush1.msra.mxu0 0.0
    %3902 = vmatprep.subr.mxu0 0.0
    %3903 = vmatpush1.msra.mxu0 0.0
    %3904 = vmatprep.subr.mxu0 0.0
    %3905 = vmatpush1.msra.mxu0 0.0
    %3906 = vmatprep.subr.mxu0 0.0
    %3907 = vmatpush1.msra.mxu0 0.0
    %3908 = vmatprep.subr.mxu0 0.0
    %3909 = vmatpush1.msra.mxu0 0.0
    %3910 = vmatprep.subr.mxu0 0.0
    %3911 = vmatpush1.msra.mxu0 0.0
    %3912 = vmatprep.subr.mxu0 0.0
    %3913 = vmatpush1.msra.mxu0 0.0
    %3914 = vmatprep.subr.mxu0 0.0
    %3915 = vmatpush1.msra.mxu0 0.0
    %3916 = vmatprep.subr.mxu0 0.0
    %3917 = vmatpush1.msra.mxu0 0.0
    %3918 = vmatprep.subr.mxu0 0.0
    %3919 = vmatpush1.msra.mxu0 0.0
    %3920 = vmatprep.subr.mxu0 0.0
    %3921 = vmatpush1.msra.mxu0 0.0
    %3922 = vmatprep.subr.mxu0 0.0
    %3923 = vmatpush1.msra.mxu0 0.0
    %3924 = vmatprep.subr.mxu0 0.0
    %3925 = vmatpush1.msra.mxu0 0.0
    %3926 = vmatprep.subr.mxu0 0.0
    %3927 = vmatpush1.msra.mxu0 0.0
    %3928 = vmatprep.subr.mxu0 0.0
    %3929 = vmatpush1.msra.mxu0 0.0
    %3930 = vmatprep.subr.mxu0 0.0
    %3931 = vmatpush1.msra.mxu0 0.0
    %3932 = vmatprep.subr.mxu0 0.0
    %3933 = vmatpush1.msra.mxu0 0.0
    %3934 = vmatprep.subr.mxu0 0.0
    %3935 = vmatpush1.msra.mxu0 0.0
    %3936 = vmatprep.subr.mxu0 0.0
    %3937 = vmatpush1.msra.mxu0 0.0
    %3938 = vmatprep.mubr.f32.mxu0 0.0
    %3939 = vmatmul.mubr.f32.gmra.mrb[0].mxu0 %v3869
    %v3940 = vpop.f32.mrb[0].mxu0
    %v3941 = vadd.f32 0.0, %v3940
    %v3942 = vpop.f32.mrb[0].mxu0
    %3943 = vmatprep.mubr.f32.mxu0 0.0
    %3944 = vmatmul.mubr.f32.gmra.mrb[0].mxu0 %v3872
    %v3945 = vpop.f32.mrb[0].mxu0
    %v3946 = vadd.f32 0.0, %v3945
    %v3947 = vpop.f32.mrb[0].mxu0
    %3948 = vdwg.mxu0
    %3949 = vrot.lane.b32.xlu0 %v2515, 104
    %v3950 = vpop.permute.xlu0 %3949
    %3951 = vrot.lane.b32.xlu0 %v2520, 104
    %v3952 = vpop.permute.xlu0 %3951
    %3953 = vrot.lane.b32.xlu0 %v2515, 72
    %v3954 = vpop.permute.xlu0 %3953
    %3955 = vrot.lane.b32.xlu0 %v2520, 72
    %v3956 = vpop.permute.xlu0 %3955
    %v3957 = vsel %vm264, %v3950, 0
    %v3959 = vsel %vm264, %v3952, 0
    %v3961 = vsel %vm264, %v3954, 0
    %v3963 = vsel %vm264, %v3956, 0
    %3965 = vmatprep.subr.mxu0 0.0
    %3966 = vmatpush1.xpose.msra.mxu0 %v3961
    %3967 = vmatprep.subr.mxu0 0.0
    %3968 = vmatpush1.xpose.msra.mxu0 %v3963
    %3969 = vmatprep.subr.mxu0 0.0
    %3970 = vmatpush1.xpose.msra.mxu0 0.0
    %3971 = vmatprep.subr.mxu0 0.0
    %3972 = vmatpush1.xpose.msra.mxu0 0.0
    %3973 = vmatprep.subr.mxu0 0.0
    %3974 = vmatpush1.xpose.msra.mxu0 0.0
    %3975 = vmatprep.subr.mxu0 0.0
    %3976 = vmatpush1.xpose.msra.mxu0 0.0
    %3977 = vmatprep.subr.mxu0 0.0
    %3978 = vmatpush1.xpose.msra.mxu0 0.0
    %3979 = vmatprep.subr.mxu0 0.0
    %3980 = vmatpush1.xpose.msra.mxu0 0.0
    %3981 = vmatprep.subr.mxu0 0.0
    %3982 = vmatpush1.xpose.msra.mxu0 0.0
    %3983 = vmatprep.subr.mxu0 0.0
    %3984 = vmatpush1.xpose.msra.mxu0 0.0
    %3985 = vmatprep.subr.mxu0 0.0
    %3986 = vmatpush1.xpose.msra.mxu0 0.0
    %3987 = vmatprep.subr.mxu0 0.0
    %3988 = vmatpush1.xpose.msra.mxu0 0.0
    %3989 = vmatprep.subr.mxu0 0.0
    %3990 = vmatpush1.xpose.msra.mxu0 0.0
    %3991 = vmatprep.subr.mxu0 0.0
    %3992 = vmatpush1.xpose.msra.mxu0 0.0
    %3993 = vmatprep.subr.mxu0 0.0
    %3994 = vmatpush1.xpose.msra.mxu0 0.0
    %3995 = vmatprep.subr.mxu0 0.0
    %3996 = vmatpush1.xpose.msra.mxu0 0.0
    %3997 = vmatprep.subr.mxu0 0.0
    %3998 = vmatpush1.xpose.msra.mxu0 0.0
    %3999 = vmatprep.subr.mxu0 0.0
    %4000 = vmatpush1.xpose.msra.mxu0 0.0
    %4001 = vmatprep.subr.mxu0 0.0
    %4002 = vmatpush1.xpose.msra.mxu0 0.0
    %4003 = vmatprep.subr.mxu0 0.0
    %4004 = vmatpush1.xpose.msra.mxu0 0.0
    %4005 = vmatprep.subr.mxu0 0.0
    %4006 = vmatpush1.xpose.msra.mxu0 0.0
    %4007 = vmatprep.subr.mxu0 0.0
    %4008 = vmatpush1.xpose.msra.mxu0 0.0
    %4009 = vmatprep.subr.mxu0 0.0
    %4010 = vmatpush1.xpose.msra.mxu0 0.0
    %4011 = vmatprep.subr.mxu0 0.0
    %4012 = vmatpush1.xpose.msra.mxu0 0.0
    %4013 = vmatprep.subr.mxu0 0.0
    %4014 = vmatpush1.xpose.msra.mxu0 0.0
    %4015 = vmatprep.subr.mxu0 0.0
    %4016 = vmatpush1.xpose.msra.mxu0 0.0
    %4017 = vmatprep.subr.mxu0 0.0
    %4018 = vmatpush1.xpose.msra.mxu0 0.0
    %4019 = vmatprep.subr.mxu0 0.0
    %4020 = vmatpush1.xpose.msra.mxu0 0.0
    %4021 = vmatprep.subr.mxu0 0.0
    %4022 = vmatpush1.xpose.msra.mxu0 0.0
    %4023 = vmatprep.subr.mxu0 0.0
    %4024 = vmatpush1.xpose.msra.mxu0 0.0
    %4025 = vmatprep.subr.mxu0 0.0
    %4026 = vmatpush1.xpose.msra.mxu0 0.0
    %4027 = vmatprep.subr.mxu0 0.0
    %4028 = vmatpush1.xpose.msra.mxu0 0.0
    %4029 = vmatprep.mubr.f32.mxu0 0.0
    %4030 = vmatmul.mubr.f32.gmra.mrb[0].mxu0 %v3957
    %v4031 = vpop.f32.mrb[0].mxu0
    %v4032 = vadd.f32 0.0, %v4031
    %v4033 = vpop.f32.mrb[0].mxu0
    %4034 = vmatprep.mubr.f32.mxu0 0.0
    %4035 = vmatmul.mubr.f32.gmra.mrb[0].mxu0 %v3959
    %v4036 = vpop.f32.mrb[0].mxu0
    %v4037 = vadd.f32 0.0, %v4036
    %v4038 = vpop.f32.mrb[0].mxu0
    %4039 = vdwg.mxu0
    %v4040 = vsel %vm348, %v4032, -inf
    %4041 = vmax.xlane.f32.xlu0 %v4040
    %v4042 = vpop.xlane.xlu0 %4041
    %v4043 = vsel %vm348, %v4037, -inf
    %4044 = vmax.xlane.f32.xlu0 %v4043
    %v4045 = vpop.xlane.xlu0 %4044
    %v4046 = vsub.f32 %v4032, %v4042
    %v4047 = vsub.f32 %v4037, %v4045
    %v4048 = vmul.f32 %v4046, 1.442695
    %v4049 = vpow.pop %v4048
    %v4050 = vmul.f32 %v4047, 1.442695
    %v4051 = vpow.pop %v4050
    %v4052 = vsel %vm348, %v4049, 0.0
    %4053 = vadd.xlane.f32.xlu0 %v4052
    %v4054 = vpop.xlane.xlu0 %4053
    %v4055 = vsel %vm348, %v4051, 0.0
    %4056 = vadd.xlane.f32.xlu0 %v4055
    %v4057 = vpop.xlane.xlu0 %4056
    %v4058 = vrcp.pop %v4054
    %v4059 = vrcp.pop %v4057
    %v4060 = vmul.f32 %v4049, %v4058
    %v4061 = vmul.f32 %v4051, %v4059
    %4062 = vrot.lane.b32.xlu0 %v2515, 40
    %v4063 = vpop.permute.xlu0 %4062
    %4064 = vrot.lane.b32.xlu0 %v2520, 40
    %v4065 = vpop.permute.xlu0 %4064
    %v4069 = vsel %vm348, %v4060, 0
    %v4072 = vsel %vm348, %v4061, 0
    %4074 = vmatprep.subr.mxu0 0.0
    %4075 = vmatpush1.msra.mxu0 %v4063
    %4076 = vmatprep.subr.mxu0 0.0
    %4077 = vmatpush1.msra.mxu0 %v4065
    %4078 = vmatprep.subr.mxu0 0.0
    %4079 = vmatpush1.msra.mxu0 0.0
    %4080 = vmatprep.subr.mxu0 0.0
    %4081 = vmatpush1.msra.mxu0 0.0
    %4082 = vmatprep.subr.mxu0 0.0
    %4083 = vmatpush1.msra.mxu0 0.0
    %4084 = vmatprep.subr.mxu0 0.0
    %4085 = vmatpush1.msra.mxu0 0.0
    %4086 = vmatprep.subr.mxu0 0.0
    %4087 = vmatpush1.msra.mxu0 0.0
    %4088 = vmatprep.subr.mxu0 0.0
    %4089 = vmatpush1.msra.mxu0 0.0
    %4090 = vmatprep.subr.mxu0 0.0
    %4091 = vmatpush1.msra.mxu0 0.0
    %4092 = vmatprep.subr.mxu0 0.0
    %4093 = vmatpush1.msra.mxu0 0.0
    %4094 = vmatprep.subr.mxu0 0.0
    %4095 = vmatpush1.msra.mxu0 0.0
    %4096 = vmatprep.subr.mxu0 0.0
    %4097 = vmatpush1.msra.mxu0 0.0
    %4098 = vmatprep.subr.mxu0 0.0
    %4099 = vmatpush1.msra.mxu0 0.0
    %4100 = vmatprep.subr.mxu0 0.0
    %4101 = vmatpush1.msra.mxu0 0.0
    %4102 = vmatprep.subr.mxu0 0.0
    %4103 = vmatpush1.msra.mxu0 0.0
    %4104 = vmatprep.subr.mxu0 0.0
    %4105 = vmatpush1.msra.mxu0 0.0
    %4106 = vmatprep.subr.mxu0 0.0
    %4107 = vmatpush1.msra.mxu0 0.0
    %4108 = vmatprep.subr.mxu0 0.0
    %4109 = vmatpush1.msra.mxu0 0.0
    %4110 = vmatprep.subr.mxu0 0.0
    %4111 = vmatpush1.msra.mxu0 0.0
    %4112 = vmatprep.subr.mxu0 0.0
    %4113 = vmatpush1.msra.mxu0 0.0
    %4114 = vmatprep.subr.mxu0 0.0
    %4115 = vmatpush1.msra.mxu0 0.0
    %4116 = vmatprep.subr.mxu0 0.0
    %4117 = vmatpush1.msra.mxu0 0.0
    %4118 = vmatprep.subr.mxu0 0.0
    %4119 = vmatpush1.msra.mxu0 0.0
    %4120 = vmatprep.subr.mxu0 0.0
    %4121 = vmatpush1.msra.mxu0 0.0
    %4122 = vmatprep.subr.mxu0 0.0
    %4123 = vmatpush1.msra.mxu0 0.0
    %4124 = vmatprep.subr.mxu0 0.0
    %4125 = vmatpush1.msra.mxu0 0.0
    %4126 = vmatprep.subr.mxu0 0.0
    %4127 = vmatpush1.msra.mxu0 0.0
    %4128 = vmatprep.subr.mxu0 0.0
    %4129 = vmatpush1.msra.mxu0 0.0
    %4130 = vmatprep.subr.mxu0 0.0
    %4131 = vmatpush1.msra.mxu0 0.0
    %4132 = vmatprep.subr.mxu0 0.0
    %4133 = vmatpush1.msra.mxu0 0.0
    %4134 = vmatprep.subr.mxu0 0.0
    %4135 = vmatpush1.msra.mxu0 0.0
    %4136 = vmatprep.subr.mxu0 0.0
    %4137 = vmatpush1.msra.mxu0 0.0
    %4138 = vmatprep.mubr.f32.mxu0 0.0
    %4139 = vmatmul.mubr.f32.gmra.mrb[0].mxu0 %v4069
    %v4140 = vpop.f32.mrb[0].mxu0
    %v4141 = vadd.f32 0.0, %v4140
    %v4142 = vpop.f32.mrb[0].mxu0
    %4143 = vmatprep.mubr.f32.mxu0 0.0
    %4144 = vmatmul.mubr.f32.gmra.mrb[0].mxu0 %v4072
    %v4145 = vpop.f32.mrb[0].mxu0
    %v4146 = vadd.f32 0.0, %v4145
    %v4147 = vpop.f32.mrb[0].mxu0
    %4148 = vdwg.mxu0
    %4151 = vrot.lane.b32.xlu0 %v3741, 8
    %v4152 = vpop.permute.xlu0 %4151
    %4153 = vrot.lane.b32.xlu0 %v3746, 8
    %v4154 = vpop.permute.xlu0 %4153
    %4159 = vrot.lane.b32.xlu0 %v3941, 16
    %v4160 = vpop.permute.xlu0 %4159
    %4161 = vrot.lane.b32.xlu0 %v3946, 16
    %v4162 = vpop.permute.xlu0 %4161
    %4167 = vrot.lane.b32.xlu0 %v4141, 24
    %v4168 = vpop.permute.xlu0 %4167
    %4169 = vrot.lane.b32.xlu0 %v4146, 24
    %v4170 = vpop.permute.xlu0 %4169
    %v4173 = vsel %vm264, %v3541, %v4152
    %v4174 = vsel %vm264, %v3546, %v4154
    %v4175 = vsel %vm348, %v4173, %v4160
    %v4176 = vsel %vm348, %v4174, %v4162
    %v4177 = vsel %vm1086, %v4175, %v4168
    %v4178 = vsel %vm1086, %v4176, %v4170
    %v4179 = vlaneseq
    %v4180 = vshrl.u32 %v4179, 7
    %v4181 = vsub.s32 1, %v4180
    %v4182 = vrot.slane %v2421, %v4181
    %4187 = vrot.lane.b32.xlu0 %v2403, 32
    %v4188 = vpop.permute.xlu0 %4187
    %4189 = vrot.lane.b32.xlu0 %v2405, 32
    %v4190 = vpop.permute.xlu0 %4189
    %4191 = vrot.lane.b32.xlu0 %v2407, 32
    %v4192 = vpop.permute.xlu0 %4191
    %4193 = vrot.lane.b32.xlu0 %v2409, 32
    %v4194 = vpop.permute.xlu0 %4193
    %v4200 = vsel %vm42, %v3349, 0
    %v4203 = vsel %vm42, %v3350, 0
    %v4206 = vsel %vm42, %v4177, 0
    %v4209 = vsel %vm42, %v4178, 0
    %4211 = vmatprep.subr.mxu0 0.0
    %4212 = vmatpush1.msra.mxu0 %v4188
    %4213 = vmatprep.subr.mxu0 0.0
    %4214 = vmatpush1.msra.mxu0 %v4190
    %4215 = vmatprep.subr.mxu0 0.0
    %4216 = vmatpush1.msra.mxu0 %v4192
    %4217 = vmatprep.subr.mxu0 0.0
    %4218 = vmatpush1.msra.mxu0 %v4194
    %4219 = vmatprep.subr.mxu0 0.0
    %4220 = vmatpush1.msra.mxu0 0.0
    %4221 = vmatprep.subr.mxu0 0.0
    %4222 = vmatpush1.msra.mxu0 0.0
    %4223 = vmatprep.subr.mxu0 0.0
    %4224 = vmatpush1.msra.mxu0 0.0
    %4225 = vmatprep.subr.mxu0 0.0
    %4226 = vmatpush1.msra.mxu0 0.0
    %4227 = vmatprep.subr.mxu0 0.0
    %4228 = vmatpush1.msra.mxu0 0.0
    %4229 = vmatprep.subr.mxu0 0.0
    %4230 = vmatpush1.msra.mxu0 0.0
    %4231 = vmatprep.subr.mxu0 0.0
    %4232 = vmatpush1.msra.mxu0 0.0
    %4233 = vmatprep.subr.mxu0 0.0
    %4234 = vmatpush1.msra.mxu0 0.0
    %4235 = vmatprep.subr.mxu0 0.0
    %4236 = vmatpush1.msra.mxu0 0.0
    %4237 = vmatprep.subr.mxu0 0.0
    %4238 = vmatpush1.msra.mxu0 0.0
    %4239 = vmatprep.subr.mxu0 0.0
    %4240 = vmatpush1.msra.mxu0 0.0
    %4241 = vmatprep.subr.mxu0 0.0
    %4242 = vmatpush1.msra.mxu0 0.0
    %4243 = vmatprep.subr.mxu0 0.0
    %4244 = vmatpush1.msra.mxu0 0.0
    %4245 = vmatprep.subr.mxu0 0.0
    %4246 = vmatpush1.msra.mxu0 0.0
    %4247 = vmatprep.subr.mxu0 0.0
    %4248 = vmatpush1.msra.mxu0 0.0
    %4249 = vmatprep.subr.mxu0 0.0
    %4250 = vmatpush1.msra.mxu0 0.0
    %4251 = vmatprep.subr.mxu0 0.0
    %4252 = vmatpush1.msra.mxu0 0.0
    %4253 = vmatprep.subr.mxu0 0.0
    %4254 = vmatpush1.msra.mxu0 0.0
    %4255 = vmatprep.subr.mxu0 0.0
    %4256 = vmatpush1.msra.mxu0 0.0
    %4257 = vmatprep.subr.mxu0 0.0
    %4258 = vmatpush1.msra.mxu0 0.0
    %4259 = vmatprep.subr.mxu0 0.0
    %4260 = vmatpush1.msra.mxu0 0.0
    %4261 = vmatprep.subr.mxu0 0.0
    %4262 = vmatpush1.msra.mxu0 0.0
    %4263 = vmatprep.subr.mxu0 0.0
    %4264 = vmatpush1.msra.mxu0 0.0
    %4265 = vmatprep.subr.mxu0 0.0
    %4266 = vmatpush1.msra.mxu0 0.0
    %4267 = vmatprep.subr.mxu0 0.0
    %4268 = vmatpush1.msra.mxu0 0.0
    %4269 = vmatprep.subr.mxu0 0.0
    %4270 = vmatpush1.msra.mxu0 0.0
    %4271 = vmatprep.subr.mxu0 0.0
    %4272 = vmatpush1.msra.mxu0 0.0
    %4273 = vmatprep.subr.mxu0 0.0
    %4274 = vmatpush1.msra.mxu0 0.0
    %4275 = vmatprep.mubr.f32.mxu0 0.0
    %4276 = vmatmul.mubr.f32.gmra.mrb[0].mxu0 %v4200
    %v4277 = vpop.f32.mrb[0].mxu0
    %v4278 = vadd.f32 %v4182, %v4277
    %v4279 = vpop.f32.mrb[0].mxu0
    %4280 = vmatprep.mubr.f32.mxu0 0.0
    %4281 = vmatmul.mubr.f32.gmra.mrb[0].mxu0 %v4203
    %v4282 = vpop.f32.mrb[0].mxu0
    %v4283 = vadd.f32 %v4182, %v4282
    %v4284 = vpop.f32.mrb[0].mxu0
    %4285 = vmatprep.mubr.f32.mxu0 0.0
    %4286 = vmatmul.mubr.f32.gmra.mrb[0].mxu0 %v4206
    %v4287 = vpop.f32.mrb[0].mxu0
    %v4288 = vadd.f32 %v4182, %v4287
    %v4289 = vpop.f32.mrb[0].mxu0
    %4290 = vmatprep.mubr.f32.mxu0 0.0
    %4291 = vmatmul.mubr.f32.gmra.mrb[0].mxu0 %v4209
    %v4292 = vpop.f32.mrb[0].mxu0
    %v4293 = vadd.f32 %v4182, %v4292
    %v4294 = vpop.f32.mrb[0].mxu0
    %4295 = vdwg.mxu0
    %v4296 = vadd.f32 %v4278, %v2398
    %v4297 = vadd.f32 %v4283, %v2399
    %v4298 = vadd.f32 %v4288, %v2400
    %v4299 = vadd.f32 %v4293, %v2401
    %v4300 = vsel %vm42, %v4296, 0.0
    %4301 = vadd.xlane.f32.xlu0 %v4300
    %v4302 = vpop.xlane.xlu0 %4301
    %v4303 = vsel %vm42, %v4297, 0.0
    %4304 = vadd.xlane.f32.xlu0 %v4303
    %v4305 = vpop.xlane.xlu0 %4304
    %v4306 = vsel %vm42, %v4298, 0.0
    %4307 = vadd.xlane.f32.xlu0 %v4306
    %v4308 = vpop.xlane.xlu0 %4307
    %v4309 = vsel %vm42, %v4299, 0.0
    %4310 = vadd.xlane.f32.xlu0 %v4309
    %v4311 = vpop.xlane.xlu0 %4310
    %v4312 = vmul.f32 %v4302, %v2050
    %v4313 = vmul.f32 %v4305, %v2050
    %v4314 = vmul.f32 %v4308, %v2050
    %v4315 = vmul.f32 %v4311, %v2050
    %v4316 = vsub.f32 %v4296, %v4312
    %v4317 = vsub.f32 %v4297, %v4313
    %v4318 = vsub.f32 %v4298, %v4314
    %v4319 = vsub.f32 %v4299, %v4315
    %v4320 = vmul.f32 %v4316, %v4316
    %v4321 = vmul.f32 %v4317, %v4317
    %v4322 = vmul.f32 %v4318, %v4318
    %v4323 = vmul.f32 %v4319, %v4319
    %v4324 = vsel %vm42, %v4320, 0.0
    %4325 = vadd.xlane.f32.xlu0 %v4324
    %v4326 = vpop.xlane.xlu0 %4325
    %v4327 = vsel %vm42, %v4321, 0.0
    %4328 = vadd.xlane.f32.xlu0 %v4327
    %v4329 = vpop.xlane.xlu0 %4328
    %v4330 = vsel %vm42, %v4322, 0.0
    %4331 = vadd.xlane.f32.xlu0 %v4330
    %v4332 = vpop.xlane.xlu0 %4331
    %v4333 = vsel %vm42, %v4323, 0.0
    %4334 = vadd.xlane.f32.xlu0 %v4333
    %v4335 = vpop.xlane.xlu0 %4334
    %v4336 = vmul.f32 %v4326, %v2050
    %v4337 = vmul.f32 %v4329, %v2050
    %v4338 = vmul.f32 %v4332, %v2050
    %v4339 = vmul.f32 %v4335, %v2050
    %v4340 = vadd.f32 %v4336, 1e-12
    %v4341 = vadd.f32 %v4337, 1e-12
    %v4342 = vadd.f32 %v4338, 1e-12
    %v4343 = vadd.f32 %v4339, 1e-12
    %v4344 = vrsqrt.pop %v4340
    %v4345 = vrsqrt.pop %v4341
    %v4346 = vrsqrt.pop %v4342
    %v4347 = vrsqrt.pop %v4343
    %v4348 = vmul.f32 %v4316, %v4344
    %v4349 = vmul.f32 %v4317, %v4345
    %v4350 = vmul.f32 %v4318, %v4346
    %v4351 = vmul.f32 %v4319, %v4347
    %v4352 = vlaneseq
    %v4353 = vshrl.u32 %v4352, 7
    %v4354 = vsub.s32 4, %v4353
    %v4355 = vrot.slane %v2421, %v4354
    %v4356 = vmul.f32 %v4348, %v4355
    %v4357 = vmul.f32 %v4349, %v4355
    %v4358 = vmul.f32 %v4350, %v4355
    %v4359 = vmul.f32 %v4351, %v4355
    %v4360 = vlaneseq
    %v4361 = vshrl.u32 %v4360, 7
    %v4362 = vsub.s32 5, %v4361
    %v4363 = vrot.slane %v2421, %v4362
    %v4364 = vadd.f32 %v4356, %v4363
    %v4365 = vadd.f32 %v4357, %v4363
    %v4366 = vadd.f32 %v4358, %v4363
    %v4367 = vadd.f32 %v4359, %v4363
    %v4368 = vlaneseq
    %v4369 = vshrl.u32 %v4368, 7
    %v4370 = vsub.s32 2, %v4369
    %v4371 = vrot.slane %v2421, %v4370
    %v4373 = vsel %vm42, %v4364, 0
    %v4376 = vsel %vm42, %v4365, 0
    %v4379 = vsel %vm42, %v4366, 0
    %v4382 = vsel %vm42, %v4367, 0
    %4384 = vmatprep.subr.mxu0 0.0
    %4385 = vmatpush1.msra.mxu0 %v2404
    %4386 = vmatprep.subr.mxu0 0.0
    %4387 = vmatpush1.msra.mxu0 %v2406
    %4388 = vmatprep.subr.mxu0 0.0
    %4389 = vmatpush1.msra.mxu0 %v2408
    %4390 = vmatprep.subr.mxu0 0.0
    %4391 = vmatpush1.msra.mxu0 %v2410
    %4392 = vmatprep.subr.mxu0 0.0
    %4393 = vmatpush1.msra.mxu0 0.0
    %4394 = vmatprep.subr.mxu0 0.0
    %4395 = vmatpush1.msra.mxu0 0.0
    %4396 = vmatprep.subr.mxu0 0.0
    %4397 = vmatpush1.msra.mxu0 0.0
    %4398 = vmatprep.subr.mxu0 0.0
    %4399 = vmatpush1.msra.mxu0 0.0
    %4400 = vmatprep.subr.mxu0 0.0
    %4401 = vmatpush1.msra.mxu0 0.0
    %4402 = vmatprep.subr.mxu0 0.0
    %4403 = vmatpush1.msra.mxu0 0.0
    %4404 = vmatprep.subr.mxu0 0.0
    %4405 = vmatpush1.msra.mxu0 0.0
    %4406 = vmatprep.subr.mxu0 0.0
    %4407 = vmatpush1.msra.mxu0 0.0
    %4408 = vmatprep.subr.mxu0 0.0
    %4409 = vmatpush1.msra.mxu0 0.0
    %4410 = vmatprep.subr.mxu0 0.0
    %4411 = vmatpush1.msra.mxu0 0.0
    %4412 = vmatprep.subr.mxu0 0.0
    %4413 = vmatpush1.msra.mxu0 0.0
    %4414 = vmatprep.subr.mxu0 0.0
    %4415 = vmatpush1.msra.mxu0 0.0
    %4416 = vmatprep.subr.mxu0 0.0
    %4417 = vmatpush1.msra.mxu0 0.0
    %4418 = vmatprep.subr.mxu0 0.0
    %4419 = vmatpush1.msra.mxu0 0.0
    %4420 = vmatprep.subr.mxu0 0.0
    %4421 = vmatpush1.msra.mxu0 0.0
    %4422 = vmatprep.subr.mxu0 0.0
    %4423 = vmatpush1.msra.mxu0 0.0
    %4424 = vmatprep.subr.mxu0 0.0
    %4425 = vmatpush1.msra.mxu0 0.0
    %4426 = vmatprep.subr.mxu0 0.0
    %4427 = vmatpush1.msra.mxu0 0.0
    %4428 = vmatprep.subr.mxu0 0.0
    %4429 = vmatpush1.msra.mxu0 0.0
    %4430 = vmatprep.subr.mxu0 0.0
    %4431 = vmatpush1.msra.mxu0 0.0
    %4432 = vmatprep.subr.mxu0 0.0
    %4433 = vmatpush1.msra.mxu0 0.0
    %4434 = vmatprep.subr.mxu0 0.0
    %4435 = vmatpush1.msra.mxu0 0.0
    %4436 = vmatprep.subr.mxu0 0.0
    %4437 = vmatpush1.msra.mxu0 0.0
    %4438 = vmatprep.subr.mxu0 0.0
    %4439 = vmatpush1.msra.mxu0 0.0
    %4440 = vmatprep.subr.mxu0 0.0
    %4441 = vmatpush1.msra.mxu0 0.0
    %4442 = vmatprep.subr.mxu0 0.0
    %4443 = vmatpush1.msra.mxu0 0.0
    %4444 = vmatprep.subr.mxu0 0.0
    %4445 = vmatpush1.msra.mxu0 0.0
    %4446 = vmatprep.subr.mxu0 0.0
    %4447 = vmatpush1.msra.mxu0 0.0
    %4448 = vmatprep.mubr.f32.mxu0 0.0
    %4449 = vmatmul.mubr.f32.gmra.mrb[0].mxu0 %v4373
    %v4450 = vpop.f32.mrb[0].mxu0
    %v4451 = vadd.f32 %v4371, %v4450
    %v4452 = vpop.f32.mrb[0].mxu0
    %4453 = vmatprep.mubr.f32.mxu0 0.0
    %4454 = vmatmul.mubr.f32.gmra.mrb[0].mxu0 %v4376
    %v4455 = vpop.f32.mrb[0].mxu0
    %v4456 = vadd.f32 %v4371, %v4455
    %v4457 = vpop.f32.mrb[0].mxu0
    %4458 = vmatprep.mubr.f32.mxu0 0.0
    %4459 = vmatmul.mubr.f32.gmra.mrb[0].mxu0 %v4379
    %v4460 = vpop.f32.mrb[0].mxu0
    %v4461 = vadd.f32 %v4371, %v4460
    %v4462 = vpop.f32.mrb[0].mxu0
    %4463 = vmatprep.mubr.f32.mxu0 0.0
    %4464 = vmatmul.mubr.f32.gmra.mrb[0].mxu0 %v4382
    %v4465 = vpop.f32.mrb[0].mxu0
    %v4466 = vadd.f32 %v4371, %v4465
    %v4467 = vpop.f32.mrb[0].mxu0
    %4468 = vdwg.mxu0
    %v4469 = vmul.f32 %v4451, 0.5
    %v4470 = vmul.f32 %v4456, 0.5
    %v4471 = vmul.f32 %v4461, 0.5
    %v4472 = vmul.f32 %v4466, 0.5
    %v4473 = vmul.f32 %v4451, 0.70710677
    %v4474 = vmul.f32 %v4456, 0.70710677
    %v4475 = vmul.f32 %v4461, 0.70710677
    %v4476 = vmul.f32 %v4466, 0.70710677
    %v4477 = verf.f32.pop %v4473
    %v4478 = verf.f32.pop %v4474
    %v4479 = verf.f32.pop %v4475
    %v4480 = verf.f32.pop %v4476
    %v4481 = vadd.f32 %v4477, 1.0
    %v4482 = vadd.f32 %v4478, 1.0
    %v4483 = vadd.f32 %v4479, 1.0
    %v4484 = vadd.f32 %v4480, 1.0
    %v4485 = vmul.f32 %v4469, %v4481
    %v4486 = vmul.f32 %v4470, %v4482
    %v4487 = vmul.f32 %v4471, %v4483
    %v4488 = vmul.f32 %v4472, %v4484
    %v4489 = vlaneseq
    %v4490 = vshrl.u32 %v4489, 7
    %v4491 = vsub.s32 3, %v4490
    %v4492 = vrot.slane %v2421, %v4491
    %v4494 = vsel %vm2232, %v4485, 0
    %v4497 = vsel %vm2232, %v4486, 0
    %v4500 = vsel %vm2232, %v4487, 0
    %v4503 = vsel %vm2232, %v4488, 0
    %4505 = vmatprep.subr.mxu0 0.0
    %4506 = vmatpush1.msra.mxu0 %v2412
    %4507 = vmatprep.subr.mxu0 0.0
    %4508 = vmatpush1.msra.mxu0 %v2413
    %4509 = vmatprep.subr.mxu0 0.0
    %4510 = vmatpush1.msra.mxu0 %v2414
    %4511 = vmatprep.subr.mxu0 0.0
    %4512 = vmatpush1.msra.mxu0 %v2415
    %4513 = vmatprep.subr.mxu0 0.0
    %4514 = vmatpush1.msra.mxu0 %v2416
    %4515 = vmatprep.subr.mxu0 0.0
    %4516 = vmatpush1.msra.mxu0 %v2417
    %4517 = vmatprep.subr.mxu0 0.0
    %4518 = vmatpush1.msra.mxu0 %v2418
    %4519 = vmatprep.subr.mxu0 0.0
    %4520 = vmatpush1.msra.mxu0 %v2419
    %4521 = vmatprep.subr.mxu0 0.0
    %4522 = vmatpush1.msra.mxu0 0.0
    %4523 = vmatprep.subr.mxu0 0.0
    %4524 = vmatpush1.msra.mxu0 0.0
    %4525 = vmatprep.subr.mxu0 0.0
    %4526 = vmatpush1.msra.mxu0 0.0
    %4527 = vmatprep.subr.mxu0 0.0
    %4528 = vmatpush1.msra.mxu0 0.0
    %4529 = vmatprep.subr.mxu0 0.0
    %4530 = vmatpush1.msra.mxu0 0.0
    %4531 = vmatprep.subr.mxu0 0.0
    %4532 = vmatpush1.msra.mxu0 0.0
    %4533 = vmatprep.subr.mxu0 0.0
    %4534 = vmatpush1.msra.mxu0 0.0
    %4535 = vmatprep.subr.mxu0 0.0
    %4536 = vmatpush1.msra.mxu0 0.0
    %4537 = vmatprep.subr.mxu0 0.0
    %4538 = vmatpush1.msra.mxu0 0.0
    %4539 = vmatprep.subr.mxu0 0.0
    %4540 = vmatpush1.msra.mxu0 0.0
    %4541 = vmatprep.subr.mxu0 0.0
    %4542 = vmatpush1.msra.mxu0 0.0
    %4543 = vmatprep.subr.mxu0 0.0
    %4544 = vmatpush1.msra.mxu0 0.0
    %4545 = vmatprep.subr.mxu0 0.0
    %4546 = vmatpush1.msra.mxu0 0.0
    %4547 = vmatprep.subr.mxu0 0.0
    %4548 = vmatpush1.msra.mxu0 0.0
    %4549 = vmatprep.subr.mxu0 0.0
    %4550 = vmatpush1.msra.mxu0 0.0
    %4551 = vmatprep.subr.mxu0 0.0
    %4552 = vmatpush1.msra.mxu0 0.0
    %4553 = vmatprep.subr.mxu0 0.0
    %4554 = vmatpush1.msra.mxu0 0.0
    %4555 = vmatprep.subr.mxu0 0.0
    %4556 = vmatpush1.msra.mxu0 0.0
    %4557 = vmatprep.subr.mxu0 0.0
    %4558 = vmatpush1.msra.mxu0 0.0
    %4559 = vmatprep.subr.mxu0 0.0
    %4560 = vmatpush1.msra.mxu0 0.0
    %4561 = vmatprep.subr.mxu0 0.0
    %4562 = vmatpush1.msra.mxu0 0.0
    %4563 = vmatprep.subr.mxu0 0.0
    %4564 = vmatpush1.msra.mxu0 0.0
    %4565 = vmatprep.subr.mxu0 0.0
    %4566 = vmatpush1.msra.mxu0 0.0
    %4567 = vmatprep.subr.mxu0 0.0
    %4568 = vmatpush1.msra.mxu0 0.0
    %4569 = vmatprep.mubr.f32.mxu0 0.0
    %4570 = vmatmul.mubr.f32.gmra.mrb[0].mxu0 %v4494
    %v4571 = vpop.f32.mrb[0].mxu0
    %v4572 = vadd.f32 %v4492, %v4571
    %v4573 = vpop.f32.mrb[0].mxu0
    %4574 = vmatprep.mubr.f32.mxu0 0.0
    %4575 = vmatmul.mubr.f32.gmra.mrb[0].mxu0 %v4497
    %v4576 = vpop.f32.mrb[0].mxu0
    %v4577 = vadd.f32 %v4492, %v4576
    %v4578 = vpop.f32.mrb[0].mxu0
    %4579 = vmatprep.mubr.f32.mxu0 0.0
    %4580 = vmatmul.mubr.f32.gmra.mrb[0].mxu0 %v4500
    %v4581 = vpop.f32.mrb[0].mxu0
    %v4582 = vadd.f32 %v4492, %v4581
    %v4583 = vpop.f32.mrb[0].mxu0
    %4584 = vmatprep.mubr.f32.mxu0 0.0
    %4585 = vmatmul.mubr.f32.gmra.mrb[0].mxu0 %v4503
    %v4586 = vpop.f32.mrb[0].mxu0
    %v4587 = vadd.f32 %v4492, %v4586
    %v4588 = vpop.f32.mrb[0].mxu0
    %4589 = vdwg.mxu0
    %v4590 = vadd.f32 %v4572, %v4364
    %v4591 = vadd.f32 %v4577, %v4365
    %v4592 = vadd.f32 %v4582, %v4366
    %v4593 = vadd.f32 %v4587, %v4367
    %v4594 = vsel %vm42, %v4590, 0.0
    %4595 = vadd.xlane.f32.xlu0 %v4594
    %v4596 = vpop.xlane.xlu0 %4595
    %v4597 = vsel %vm42, %v4591, 0.0
    %4598 = vadd.xlane.f32.xlu0 %v4597
    %v4599 = vpop.xlane.xlu0 %4598
    %v4600 = vsel %vm42, %v4592, 0.0
    %4601 = vadd.xlane.f32.xlu0 %v4600
    %v4602 = vpop.xlane.xlu0 %4601
    %v4603 = vsel %vm42, %v4593, 0.0
    %4604 = vadd.xlane.f32.xlu0 %v4603
    %v4605 = vpop.xlane.xlu0 %4604
    %v4606 = vmul.f32 %v4596, %v2050
    %v4607 = vmul.f32 %v4599, %v2050
    %v4608 = vmul.f32 %v4602, %v2050
    %v4609 = vmul.f32 %v4605, %v2050
    %v4610 = vsub.f32 %v4590, %v4606
    %v4611 = vsub.f32 %v4591, %v4607
    %v4612 = vsub.f32 %v4592, %v4608
    %v4613 = vsub.f32 %v4593, %v4609
    %v4614 = vmul.f32 %v4610, %v4610
    %v4615 = vmul.f32 %v4611, %v4611
    %v4616 = vmul.f32 %v4612, %v4612
    %v4617 = vmul.f32 %v4613, %v4613
    %v4618 = vsel %vm42, %v4614, 0.0
    %4619 = vadd.xlane.f32.xlu0 %v4618
    %v4620 = vpop.xlane.xlu0 %4619
    %v4621 = vsel %vm42, %v4615, 0.0
    %4622 = vadd.xlane.f32.xlu0 %v4621
    %v4623 = vpop.xlane.xlu0 %4622
    %v4624 = vsel %vm42, %v4616, 0.0
    %4625 = vadd.xlane.f32.xlu0 %v4624
    %v4626 = vpop.xlane.xlu0 %4625
    %v4627 = vsel %vm42, %v4617, 0.0
    %4628 = vadd.xlane.f32.xlu0 %v4627
    %v4629 = vpop.xlane.xlu0 %4628
    %v4630 = vmul.f32 %v4620, %v2050
    %v4631 = vmul.f32 %v4623, %v2050
    %v4632 = vmul.f32 %v4626, %v2050
    %v4633 = vmul.f32 %v4629, %v2050
    %v4634 = vadd.f32 %v4630, 1e-12
    %v4635 = vadd.f32 %v4631, 1e-12
    %v4636 = vadd.f32 %v4632, 1e-12
    %v4637 = vadd.f32 %v4633, 1e-12
    %v4638 = vrsqrt.pop %v4634
    %v4639 = vrsqrt.pop %v4635
    %v4640 = vrsqrt.pop %v4636
    %v4641 = vrsqrt.pop %v4637
    %v4642 = vmul.f32 %v4610, %v4638
    %v4643 = vmul.f32 %v4611, %v4639
    %v4644 = vmul.f32 %v4612, %v4640
    %v4645 = vmul.f32 %v4613, %v4641
    %v4646 = vlaneseq
    %v4647 = vshrl.u32 %v4646, 7
    %v4648 = vsub.s32 6, %v4647
    %v4649 = vrot.slane %v2421, %v4648
    %v4650 = vmul.f32 %v4642, %v4649
    %v4651 = vmul.f32 %v4643, %v4649
    %v4652 = vmul.f32 %v4644, %v4649
    %v4653 = vmul.f32 %v4645, %v4649
    %v4654 = vlaneseq
    %v4655 = vshrl.u32 %v4654, 7
    %v4656 = vsub.s32 7, %v4655
    %v4657 = vrot.slane %v2421, %v4656
    %v4658 = vadd.f32 %v4650, %v4657
    %v4659 = vadd.f32 %v4651, %v4657
    %v4660 = vadd.f32 %v4652, %v4657
    %v4661 = vadd.f32 %v4653, %v4657
    %v4662 = vld [vmem:[%s2 + $0x20] sm:$0xff]
    %v4663 = vld [vmem:[%s2 + $0x28] sm:$0xff]
    %v4664 = vld [vmem:[%s2 + $0x30] sm:$0xff]
    %v4665 = vld [vmem:[%s2 + $0x38] sm:$0xff]
    %v4666 = vld [vmem:[%s3 + $0x1] sm:$0x1]
    %v4668 = vsel %vm42, %v4658, 0
    %v4671 = vsel %vm42, %v4659, 0
    %v4674 = vsel %vm42, %v4660, 0
    %v4677 = vsel %vm42, %v4661, 0
    %4679 = vmatprep.subr.mxu0 0.0
    %4680 = vmatpush1.msra.mxu0 %v4662
    %4681 = vmatprep.subr.mxu0 0.0
    %4682 = vmatpush1.msra.mxu0 %v4663
    %4683 = vmatprep.subr.mxu0 0.0
    %4684 = vmatpush1.msra.mxu0 %v4664
    %4685 = vmatprep.subr.mxu0 0.0
    %4686 = vmatpush1.msra.mxu0 %v4665
    %4687 = vmatprep.subr.mxu0 0.0
    %4688 = vmatpush1.msra.mxu0 0.0
    %4689 = vmatprep.subr.mxu0 0.0
    %4690 = vmatpush1.msra.mxu0 0.0
    %4691 = vmatprep.subr.mxu0 0.0
    %4692 = vmatpush1.msra.mxu0 0.0
    %4693 = vmatprep.subr.mxu0 0.0
    %4694 = vmatpush1.msra.mxu0 0.0
    %4695 = vmatprep.subr.mxu0 0.0
    %4696 = vmatpush1.msra.mxu0 0.0
    %4697 = vmatprep.subr.mxu0 0.0
    %4698 = vmatpush1.msra.mxu0 0.0
    %4699 = vmatprep.subr.mxu0 0.0
    %4700 = vmatpush1.msra.mxu0 0.0
    %4701 = vmatprep.subr.mxu0 0.0
    %4702 = vmatpush1.msra.mxu0 0.0
    %4703 = vmatprep.subr.mxu0 0.0
    %4704 = vmatpush1.msra.mxu0 0.0
    %4705 = vmatprep.subr.mxu0 0.0
    %4706 = vmatpush1.msra.mxu0 0.0
    %4707 = vmatprep.subr.mxu0 0.0
    %4708 = vmatpush1.msra.mxu0 0.0
    %4709 = vmatprep.subr.mxu0 0.0
    %4710 = vmatpush1.msra.mxu0 0.0
    %4711 = vmatprep.subr.mxu0 0.0
    %4712 = vmatpush1.msra.mxu0 0.0
    %4713 = vmatprep.subr.mxu0 0.0
    %4714 = vmatpush1.msra.mxu0 0.0
    %4715 = vmatprep.subr.mxu0 0.0
    %4716 = vmatpush1.msra.mxu0 0.0
    %4717 = vmatprep.subr.mxu0 0.0
    %4718 = vmatpush1.msra.mxu0 0.0
    %4719 = vmatprep.subr.mxu0 0.0
    %4720 = vmatpush1.msra.mxu0 0.0
    %4721 = vmatprep.subr.mxu0 0.0
    %4722 = vmatpush1.msra.mxu0 0.0
    %4723 = vmatprep.subr.mxu0 0.0
    %4724 = vmatpush1.msra.mxu0 0.0
    %4725 = vmatprep.subr.mxu0 0.0
    %4726 = vmatpush1.msra.mxu0 0.0
    %4727 = vmatprep.subr.mxu0 0.0
    %4728 = vmatpush1.msra.mxu0 0.0
    %4729 = vmatprep.subr.mxu0 0.0
    %4730 = vmatpush1.msra.mxu0 0.0
    %4731 = vmatprep.subr.mxu0 0.0
    %4732 = vmatpush1.msra.mxu0 0.0
    %4733 = vmatprep.subr.mxu0 0.0
    %4734 = vmatpush1.msra.mxu0 0.0
    %4735 = vmatprep.subr.mxu0 0.0
    %4736 = vmatpush1.msra.mxu0 0.0
    %4737 = vmatprep.subr.mxu0 0.0
    %4738 = vmatpush1.msra.mxu0 0.0
    %4739 = vmatprep.subr.mxu0 0.0
    %4740 = vmatpush1.msra.mxu0 0.0
    %4741 = vmatprep.subr.mxu0 0.0
    %4742 = vmatpush1.msra.mxu0 0.0
    %4743 = vmatprep.mubr.f32.mxu0 0.0
    %4744 = vmatmul.mubr.f32.gmra.mrb[0].mxu0 %v4668
    %v4745 = vpop.f32.mrb[0].mxu0
    %v4746 = vadd.f32 0.0, %v4745
    %v4747 = vpop.f32.mrb[0].mxu0
    %4748 = vmatprep.mubr.f32.mxu0 0.0
    %4749 = vmatmul.mubr.f32.gmra.mrb[0].mxu0 %v4671
    %v4750 = vpop.f32.mrb[0].mxu0
    %v4751 = vpop.f32.mrb[0].mxu0
    %4752 = vmatprep.mubr.f32.mxu0 0.0
    %4753 = vmatmul.mubr.f32.gmra.mrb[0].mxu0 %v4674
    %v4754 = vpop.f32.mrb[0].mxu0
    %v4755 = vadd.f32 0.0, %v4754
    %v4756 = vpop.f32.mrb[0].mxu0
    %4757 = vmatprep.mubr.f32.mxu0 0.0
    %4758 = vmatmul.mubr.f32.gmra.mrb[0].mxu0 %v4677
    %v4759 = vpop.f32.mrb[0].mxu0
    %v4760 = vpop.f32.mrb[0].mxu0
    %4761 = vdwg.mxu0
    %v4762 = vlaneseq
    %v4763 = vshrl.u32 %v4762, 7
    %v4764 = vsub.s32 0, %v4763
    %v4765 = vrot.slane %v4666, %v4764
    %v4766 = vadd.f32 %v4746, %v4765
    %vm4767 = vcmask 31744
    %4768 = vst.msk [vmem:[%s7] sm:$0xff] %vm4767, %v4766
    %v4769 = vld [vmem:[%s1] sm:$0xff]
    %v4770 = vsub.f32 %v4766, %v4769
    %v4771 = vmul.f32 %v4770, %v4770
    %v4772 = vsel %vm4767, %v4771, 0.0
    %4773 = vadd.xlane.f32.xlu0 %v4772
    %v4774 = vpop.xlane.xlu0 %4773
    %v4775 = vrot.slane %v4774, 4
    %v4776 = vadd.f32 %v4774, %v4775
    %v4777 = vrot.slane %v4776, 2
    %v4778 = vadd.f32 %v4776, %v4777
    %v4779 = vrot.slane %v4778, 1
    %v4780 = vadd.f32 %v4778, %v4779
    %s4781 = vtos %v4780
    %v4782 = vstv %s4781
    %v4783 = vadd.f32 %v4782, 0.0
    %v4784 = vadd.f32 %v4755, %v4765
    %s4785 = scalar_lea.vmem %s7, 8
    %4786 = vst.msk [vmem:[%s4785] sm:$0xff] %vm4767, %v4784
    %s4787 = scalar_lea.vmem %s1, 8
    %v4788 = vld [vmem:[%s4787] sm:$0xff]
    %v4789 = vsub.f32 %v4784, %v4788
    %v4790 = vmul.f32 %v4789, %v4789
    %v4791 = vsel %vm4767, %v4790, 0.0
    %4792 = vadd.xlane.f32.xlu0 %v4791
    %v4793 = vpop.xlane.xlu0 %4792
    %v4794 = vrot.slane %v4793, 4
    %v4795 = vadd.f32 %v4793, %v4794
    %v4796 = vrot.slane %v4795, 2
    %v4797 = vadd.f32 %v4795, %v4796
    %v4798 = vrot.slane %v4797, 1
    %v4799 = vadd.f32 %v4797, %v4798
    %s4800 = vtos %v4799
    %v4801 = vstv %s4800
    %v4802 = vadd.f32 %v4783, %v4801
    %v4803 = vmul.f32 %v4802, 0.015625
    %vm4804 = vcmask 0
    %4805 = vst.msk [vmem:[#allocation2] sm:$0x1] %vm4804, %v4803
    // Predicated region
    $region30: #{_lambda_.1} parent=1 // pred_check
      _
    $region31: #{_lambda_.1} parent=1 // pred_check_branch
      %4807 = sbr.rel (0) target = $region33
    $region32: #{_lambda_.1} parent=1 // pred_region
      _
    $region33: #{_lambda_.1} parent=1 // pred_fallthru
      _
    // Predicated region
    $region34: #{_lambda_.1} parent=1 // pred_check
      _
    $region35: #{_lambda_.1} parent=1 // pred_check_branch
      %4809 = sbr.rel (0) target = $region37
    $region36: #{_lambda_.1} parent=1 // pred_region
      %s4811 = ssub.s32 16, 16
      %4812 = vsyncadd [#allocation3], %s4811
      %s4814 = sshll.u32 [#allocation2], 4
      %s4815 = int_to_ptr.vmem [resolvable:$true] %s4814
      %4817 = dma.vmem_to_hbm [thread:$0]  %s4815, 16, %s8, [#allocation3]
    $region37: #{_lambda_.1} parent=1 // pred_fallthru
      _
    // Predicated region
    $region38: #{_lambda_.1} parent=1 // pred_check
      _
    $region39: #{_lambda_.1} parent=1 // pred_check_branch
      %4819 = sbr.rel (0) target = $region41
    $region40: #{_lambda_.1} parent=1 // pred_region
      _
    $region41: #{_lambda_.1} parent=1 // pred_fallthru
      _
    // Predicated region
    $region42: #{_lambda_.1} parent=1 // pred_check
      _
    $region43: #{_lambda_.1} parent=1 // pred_check_branch
      %4821 = sbr.rel (0) target = $region45
    $region44: #{_lambda_.1} parent=1 // pred_region
      %4822 = dma.done [#allocation3], 16
    $region45: #{_lambda_.1} parent=1 // pred_fallthru
      _
    %4823 = vsyncpa [#allocation3], 1

</llo_original>
